<compile_context>
chip_gen: v7x
topology: tpu7x:2x2x1
jax: 0.10.0
libtpu: 0.0.40
codegen_flags: <defaults>
</compile_context>

<pallas_src>
import functools
import math

import jax
import jax.numpy as jnp
from jax.experimental import pallas as pl
from jax.experimental.pallas import tpu as pltpu

# ---- scaled-down BERT config (real BERT-base: hidden=768, 12 layers, 12 heads) ----
VOCAB = 128
TYPE_VOCAB = 2
MAX_POS = 32
HIDDEN = 128
N_LAYERS = 2
N_HEADS = 4
HEAD_DIM = HIDDEN // N_HEADS
INTERMEDIATE = 256
LN_EPS = 1e-12

# rows of the per-layer packed vector slab (each row padded to 3*HIDDEN lanes)
_ROW_BQKV, _ROW_BO, _ROW_BI, _ROW_BO2 = 0, 1, 2, 3
_ROW_LN1G, _ROW_LN1B, _ROW_LN2G, _ROW_LN2B = 4, 5, 6, 7


# --------------------------- in-kernel f32 helpers ---------------------------

def _ln(x, g, b, eps=LN_EPS):
    # LayerNorm statistics kept in f32 (eps=1e-12 would underflow in bf16).
    mu = jnp.mean(x, axis=-1, keepdims=True)
    xc = x - mu
    var = jnp.mean(xc * xc, axis=-1, keepdims=True)
    return xc * jax.lax.rsqrt(var + eps) * g + b


def _gelu(x):
    # TODO(synk): HF BERT uses erf-based gelu; tanh approximation used for TPU lowering.
    c = math.sqrt(2.0 / math.pi)
    return 0.5 * x * (1.0 + jnp.tanh(c * (x + 0.044715 * x * x * x)))


# ------------------------------ fused kernel ------------------------------

def _bert_kernel(emb_ref, bias_ref, embln_ref,
                 wqkv_ref, wo_ref, wi_ref, wo2_ref, vec_ref,
                 pool_w_ref, head_ref,
                 out_ref, x_ref, *, batch, seq, scale):
    """One grid step == one encoder layer over all B*S rows.

    emb_ref   : (B*S, H) f32   embeddings (pre-LayerNorm), constant across steps
    bias_ref  : (B, S)   f32   additive attention mask (-10000 on pad keys)
    embln_ref : (2, H)   f32   [gamma; beta] of the embedding LayerNorm
    wqkv_ref  : (H, 3H)  bf16  fused QKV weight of the current layer
    wo_ref    : (H, H)   bf16  attention output projection
    wi_ref    : (H, I)   bf16  FFN in-projection
    wo2_ref   : (I, H)   bf16  FFN out-projection
    vec_ref   : (8, 3H)  f32   packed biases / LN params of the current layer
    pool_w_ref: (H, H)   bf16  pooler dense weight
    head_ref  : (3, H)   f32   [pool_b; out_w; out_b(at lane 0)]
    out_ref   : (B, 1)   f32   classifier logits (written at last step only)
    x_ref     : (B*S, H) f32   VMEM scratch, activation carried across layers
    """
    layer = pl.program_id(0)

    # --- step 0: embedding LayerNorm seeds the resident activation ---
    @pl.when(layer == 0)
    def _():
        x_ref[...] = _ln(emb_ref[...], embln_ref[0:1, :], embln_ref[1:2, :])

    x = x_ref[...]                                        # (B*S, H) f32
    xb = x.astype(jnp.bfloat16)

    vec = vec_ref[...]                                    # (8, 3H) f32
    bqkv = vec[_ROW_BQKV:_ROW_BQKV + 1, :]                # (1, 3H)
    bo = vec[_ROW_BO:_ROW_BO + 1, :HIDDEN]
    bi = vec[_ROW_BI:_ROW_BI + 1, :INTERMEDIATE]
    bo2 = vec[_ROW_BO2:_ROW_BO2 + 1, :HIDDEN]
    ln1g = vec[_ROW_LN1G:_ROW_LN1G + 1, :HIDDEN]
    ln1b = vec[_ROW_LN1B:_ROW_LN1B + 1, :HIDDEN]
    ln2g = vec[_ROW_LN2G:_ROW_LN2G + 1, :HIDDEN]
    ln2b = vec[_ROW_LN2B:_ROW_LN2B + 1, :HIDDEN]

    # --- fused QKV projection over all B*S rows: one (B*S, H) x (H, 3H) matmul ---
    qkv = jnp.dot(xb, wqkv_ref[...],
                  preferred_element_type=jnp.float32) + bqkv          # (B*S, 3H)

    # --- attention: static unroll over heads and batch, contiguous 32-lane
    #     head slices of qkv (no (S, heads, head_dim) 3-D reshape / relayout) ---
    ctx_heads = []
    for h in range(N_HEADS):
        q_h = qkv[:, 0 * HIDDEN + h * HEAD_DIM: 0 * HIDDEN + (h + 1) * HEAD_DIM]
        k_h = qkv[:, 1 * HIDDEN + h * HEAD_DIM: 1 * HIDDEN + (h + 1) * HEAD_DIM]
        v_h = qkv[:, 2 * HIDDEN + h * HEAD_DIM: 2 * HIDDEN + (h + 1) * HEAD_DIM]
        ctx_b = []
        for b in range(batch):
            qb = q_h[b * seq:(b + 1) * seq, :].astype(jnp.bfloat16)   # (S, Dh)
            kb = k_h[b * seq:(b + 1) * seq, :].astype(jnp.bfloat16)
            vb = v_h[b * seq:(b + 1) * seq, :].astype(jnp.bfloat16)
            s = jnp.dot(qb, kb.T, preferred_element_type=jnp.float32) * scale
            s = s + bias_ref[b:b + 1, :]                              # mask pad keys
            m = jnp.max(s, axis=-1, keepdims=True)
            p = jnp.exp(s - m)
            p = p * pl.reciprocal(jnp.sum(p, axis=-1, keepdims=True), approx=True)
            ctx_b.append(jnp.dot(p.astype(jnp.bfloat16), vb,
                                 preferred_element_type=jnp.float32))  # (S, Dh)
        ctx_heads.append(jnp.concatenate(ctx_b, axis=0))              # (B*S, Dh)
    ctx = jnp.concatenate(ctx_heads, axis=-1)                         # (B*S, H)

    # --- attention output projection + residual + LayerNorm ---
    attn = jnp.dot(ctx.astype(jnp.bfloat16), wo_ref[...],
                   preferred_element_type=jnp.float32) + bo
    h1 = _ln(x + attn, ln1g, ln1b)

    # --- FFN (gelu) + residual + LayerNorm ---
    inter = _gelu(jnp.dot(h1.astype(jnp.bfloat16), wi_ref[...],
                          preferred_element_type=jnp.float32) + bi)
    ffn = jnp.dot(inter.astype(jnp.bfloat16), wo2_ref[...],
                  preferred_element_type=jnp.float32) + bo2
    x_new = _ln(h1 + ffn, ln2g, ln2b)
    x_ref[...] = x_new

    # --- last step: fused CLS extraction + pooler(tanh) + Linear(H, 1) ---
    @pl.when(layer == pl.num_programs(0) - 1)
    def _():
        cls = jnp.concatenate([x_new[b * seq:b * seq + 1, :] for b in range(batch)],
                              axis=0)                                  # (B, H)
        pooled = jnp.tanh(jnp.dot(cls.astype(jnp.bfloat16), pool_w_ref[...],
                                  preferred_element_type=jnp.float32)
                          + head_ref[0:1, :])
        # Dropout(0.3) is identity at inference; Linear(H,1) as a lane-reduce.
        logits = (jnp.sum(pooled * head_ref[1:2, :], axis=-1, keepdims=True)
                  + head_ref[2:3, 0:1])
        out_ref[...] = logits                                          # (B, 1)


def bert_fused_forward(params, emb, bias, *, batch, seq):
    """emb: (B*S, H) f32 pre-LN embeddings;  bias: (B, S) f32 additive mask."""
    scale = 1.0 / math.sqrt(HEAD_DIM)
    kernel = functools.partial(_bert_kernel, batch=batch, seq=seq, scale=scale)
    # TODO(synk): at real BERT-base scale, mark the constant weight specs
    # pipeline_mode=pl.Buffered(1) and set vmem_limit_bytes for v7x's 64 MiB VMEM.
    return pl.pallas_call(
        kernel,
        out_shape=jax.ShapeDtypeStruct((batch, 1), jnp.float32),
        grid=(N_LAYERS,),
        in_specs=[
            pl.BlockSpec((batch * seq, HIDDEN), lambda l: (0, 0)),            # emb
            pl.BlockSpec((batch, seq), lambda l: (0, 0)),                     # mask bias
            pl.BlockSpec((2, HIDDEN), lambda l: (0, 0)),                      # emb LN
            pl.BlockSpec((None, HIDDEN, 3 * HIDDEN), lambda l: (l, 0, 0)),    # wqkv
            pl.BlockSpec((None, HIDDEN, HIDDEN), lambda l: (l, 0, 0)),        # wo
            pl.BlockSpec((None, HIDDEN, INTERMEDIATE), lambda l: (l, 0, 0)),  # wi
            pl.BlockSpec((None, INTERMEDIATE, HIDDEN), lambda l: (l, 0, 0)),  # wo2
            pl.BlockSpec((None, 8, 3 * HIDDEN), lambda l: (l, 0, 0)),         # vec slab
            pl.BlockSpec((HIDDEN, HIDDEN), lambda l: (0, 0)),                 # pool_w
            pl.BlockSpec((3, HIDDEN), lambda l: (0, 0)),                      # head slab
        ],
        out_specs=pl.BlockSpec((batch, 1), lambda l: (0, 0)),
        scratch_shapes=[pltpu.VMEM((batch * seq, HIDDEN), jnp.float32)],
        compiler_params=pltpu.CompilerParams(dimension_semantics=("arbitrary",)),
    )(emb, bias, params["emb_ln"],
      params["wqkv"], params["wo"], params["wi"], params["wo2"], params["vec"],
      params["pool_w"], params["head"])


# ------------------------- deterministic parameters -------------------------

def _pad_row(v, width=3 * HIDDEN):
    return jnp.pad(v, (0, width - v.shape[0]))


def init_params(key):
    def normal(k, shape, scale=0.02):
        return scale * jax.random.normal(k, shape, dtype=jnp.float32)

    keys = iter(jax.random.split(key, 64))
    p = {
        "word_emb": normal(next(keys), (VOCAB, HIDDEN)),
        "pos_emb": normal(next(keys), (MAX_POS, HIDDEN)),
        "type_emb": normal(next(keys), (TYPE_VOCAB, HIDDEN)),
        "emb_ln": jnp.stack([jnp.ones((HIDDEN,), jnp.float32),
                             jnp.zeros((HIDDEN,), jnp.float32)], axis=0),
    }
    wqkv, wo, wi, wo2, vec = [], [], [], [], []
    for _ in range(N_LAYERS):
        wq = normal(next(keys), (HIDDEN, HIDDEN))
        wk = normal(next(keys), (HIDDEN, HIDDEN))
        wv = normal(next(keys), (HIDDEN, HIDDEN))
        wqkv.append(jnp.concatenate([wq, wk, wv], axis=1))              # (H, 3H)
        wo.append(normal(next(keys), (HIDDEN, HIDDEN)))
        wi.append(normal(next(keys), (HIDDEN, INTERMEDIATE)))
        wo2.append(normal(next(keys), (INTERMEDIATE, HIDDEN)))
        vec.append(jnp.stack([
            jnp.zeros((3 * HIDDEN,), jnp.float32),                       # bqkv
            _pad_row(jnp.zeros((HIDDEN,), jnp.float32)),                 # bo
            _pad_row(jnp.zeros((INTERMEDIATE,), jnp.float32)),           # bi
            _pad_row(jnp.zeros((HIDDEN,), jnp.float32)),                 # bo2
            _pad_row(jnp.ones((HIDDEN,), jnp.float32)),                  # ln1_g
            _pad_row(jnp.zeros((HIDDEN,), jnp.float32)),                 # ln1_b
            _pad_row(jnp.ones((HIDDEN,), jnp.float32)),                  # ln2_g
            _pad_row(jnp.zeros((HIDDEN,), jnp.float32)),                 # ln2_b
        ], axis=0))                                                      # (8, 3H)
    p["wqkv"] = jnp.stack(wqkv).astype(jnp.bfloat16)                     # (L, H, 3H)
    p["wo"] = jnp.stack(wo).astype(jnp.bfloat16)                         # (L, H, H)
    p["wi"] = jnp.stack(wi).astype(jnp.bfloat16)                         # (L, H, I)
    p["wo2"] = jnp.stack(wo2).astype(jnp.bfloat16)                       # (L, I, H)
    p["vec"] = jnp.stack(vec).astype(jnp.float32)                        # (L, 8, 3H)
    p["pool_w"] = normal(next(keys), (HIDDEN, HIDDEN)).astype(jnp.bfloat16)
    # head slab: row 0 = pooler bias, row 1 = out.weight (1, H) row, row 2[0] = out.bias
    p["head"] = jnp.stack([
        jnp.zeros((HIDDEN,), jnp.float32),
        normal(next(keys), (HIDDEN,)),
        jnp.zeros((HIDDEN,), jnp.float32),
    ], axis=0)
    return p


# ------------------------------- forward pass -------------------------------

def bert_base_uncased_forward(params, ids, mask, token_type_ids):
    B, S = ids.shape
    # TODO(synk): embedding row gathers stay in plain JAX (data-dependent gather).
    pos = jnp.arange(S)
    emb = (jnp.take(params["word_emb"], ids, axis=0)
           + jnp.take(params["pos_emb"], pos, axis=0)[None, :, :]
           + jnp.take(params["type_emb"], token_type_ids, axis=0))
    emb = emb.reshape(B * S, HIDDEN)
    # additive attention mask, broadcast over heads/queries inside the kernel
    bias = (1.0 - mask.astype(jnp.float32)) * -10000.0                  # (B, S)
    # TODO(synk): all dropouts (embedding/attention/FFN/bert_drop) are identity at inference.
    return bert_fused_forward(params, emb, bias, batch=B, seq=S)        # (B, 1)


# ----------------------------------- main -----------------------------------

if __name__ == "__main__":
    key = jax.random.PRNGKey(0)
    pkey, ikey = jax.random.split(key)
    params = init_params(pkey)

    B, S = 2, 8
    ids = jax.random.randint(ikey, (B, S), 0, VOCAB, dtype=jnp.int32)
    mask = jnp.ones((B, S), dtype=jnp.int32).at[1, 6:].set(0)   # pad last 2 tokens of seq 1
    token_type_ids = jnp.zeros((B, S), dtype=jnp.int32)

    fwd = jax.jit(bert_base_uncased_forward)
    out = jax.block_until_ready(fwd(params, ids, mask, token_type_ids))
    assert out.shape == (B, 1) and out.dtype == jnp.float32
    assert bool(jnp.all(jnp.isfinite(out)))
    print("KERNEL_OK")
</pallas_src>

<mosaic_0001>
module attributes {stable_mosaic.version = 11 : i64} {
  func.func @_bert_kernel(%arg0: i32, %arg1: memref<16x128xf32, #tpu.memory_space<vmem>>, %arg2: memref<2x8xf32, #tpu.memory_space<vmem>>, %arg3: memref<2x128xf32, #tpu.memory_space<vmem>>, %arg4: memref<1x128x384xbf16, #tpu.memory_space<vmem>>, %arg5: memref<1x128x128xbf16, #tpu.memory_space<vmem>>, %arg6: memref<1x128x256xbf16, #tpu.memory_space<vmem>>, %arg7: memref<1x256x128xbf16, #tpu.memory_space<vmem>>, %arg8: memref<1x8x384xf32, #tpu.memory_space<vmem>>, %arg9: memref<128x128xbf16, #tpu.memory_space<vmem>>, %arg10: memref<3x128xf32, #tpu.memory_space<vmem>>, %arg11: memref<2x1xf32, #tpu.memory_space<vmem>>, %arg12: memref<16x128xf32, #tpu.memory_space<vmem>>) attributes {dimension_semantics = [#tpu.dimension_semantics<arbitrary>], iteration_bounds = array<i64: 2>, scalar_prefetch = 0 : i64, scratch_operands = 1 : i64, tpu.core_type = #tpu.core_type<tc>, window_params = [{pipeline_mode = #tpu.pipeline_mode<synchronous>, transform_indices = @transform_0, window_bounds = array<i64: 16, 128>}, {pipeline_mode = #tpu.pipeline_mode<synchronous>, transform_indices = @transform_1, window_bounds = array<i64: 2, 8>}, {pipeline_mode = #tpu.pipeline_mode<synchronous>, transform_indices = @transform_2, window_bounds = array<i64: 2, 128>}, {transform_indices = @transform_3, window_bounds = array<i64: 1, 128, 384>}, {transform_indices = @transform_4, window_bounds = array<i64: 1, 128, 128>}, {transform_indices = @transform_5, window_bounds = array<i64: 1, 128, 256>}, {transform_indices = @transform_6, window_bounds = array<i64: 1, 256, 128>}, {transform_indices = @transform_7, window_bounds = array<i64: 1, 8, 384>}, {pipeline_mode = #tpu.pipeline_mode<synchronous>, transform_indices = @transform_8, window_bounds = array<i64: 128, 128>}, {pipeline_mode = #tpu.pipeline_mode<synchronous>, transform_indices = @transform_9, window_bounds = array<i64: 3, 128>}, {pipeline_mode = #tpu.pipeline_mode<synchronous>, transform_indices = @transform_10, window_bounds = array<i64: 2, 1>}]} {
    %c0_i32 = arith.constant 0 : i32
    %0 = arith.cmpi eq, %arg0, %c0_i32 : i32
    %1 = arith.extui %0 : i1 to i32
    %c0_i32_0 = arith.constant 0 : i32
    %2 = arith.cmpi ne, %1, %c0_i32_0 : i32
    scf.if %2 {
      %c0_92 = arith.constant 0 : index
      %c0_93 = arith.constant 0 : index
      %314 = vector.load %arg1[%c0_92, %c0_93] : memref<16x128xf32, #tpu.memory_space<vmem>>, vector<16x128xf32>
      %c0_94 = arith.constant 0 : index
      %c0_95 = arith.constant 0 : index
      %315 = vector.load %arg3[%c0_94, %c0_95] : memref<2x128xf32, #tpu.memory_space<vmem>>, vector<1x128xf32>
      %c1_96 = arith.constant 1 : index
      %c0_97 = arith.constant 0 : index
      %316 = vector.load %arg3[%c1_96, %c0_97] : memref<2x128xf32, #tpu.memory_space<vmem>>, vector<1x128xf32>
      %cst_98 = arith.constant dense<0.000000e+00> : vector<16xf32>
      %317 = vector.multi_reduction <add>, %314, %cst_98 [1] : vector<16x128xf32> to vector<16xf32>
      %318 = vector.shape_cast %317 : vector<16xf32> to vector<16x1xf32>
      %cst_99 = arith.constant 1.280000e+02 : f32
      %319 = vector.broadcast %cst_99 : f32 to vector<16x1xf32>
      %320 = arith.divf %318, %319 : vector<16x1xf32>
      %321 = vector.broadcast %320 : vector<16x1xf32> to vector<16x128xf32>
      %322 = arith.subf %314, %321 : vector<16x128xf32>
      %323 = arith.mulf %322, %322 : vector<16x128xf32>
      %cst_100 = arith.constant dense<0.000000e+00> : vector<16xf32>
      %324 = vector.multi_reduction <add>, %323, %cst_100 [1] : vector<16x128xf32> to vector<16xf32>
      %325 = vector.shape_cast %324 : vector<16xf32> to vector<16x1xf32>
      %cst_101 = arith.constant 1.280000e+02 : f32
      %326 = vector.broadcast %cst_101 : f32 to vector<16x1xf32>
      %327 = arith.divf %325, %326 : vector<16x1xf32>
      %cst_102 = arith.constant 9.99999996E-13 : f32
      %328 = vector.broadcast %cst_102 : f32 to vector<16x1xf32>
      %329 = arith.addf %327, %328 : vector<16x1xf32>
      %330 = math.rsqrt %329 : vector<16x1xf32>
      %331 = vector.broadcast %330 : vector<16x1xf32> to vector<16x128xf32>
      %332 = arith.mulf %322, %331 : vector<16x128xf32>
      %333 = vector.broadcast %315 : vector<1x128xf32> to vector<16x128xf32>
      %334 = arith.mulf %332, %333 : vector<16x128xf32>
      %335 = vector.broadcast %316 : vector<1x128xf32> to vector<16x128xf32>
      %336 = arith.addf %334, %335 : vector<16x128xf32>
      %c0_103 = arith.constant 0 : index
      %c0_104 = arith.constant 0 : index
      %337 = vector.load %arg12[%c0_103, %c0_104] : memref<16x128xf32, #tpu.memory_space<vmem>>, vector<16x128xf32>
      tpu.vector_store %arg12[%c0_103, %c0_104], %336 {strides = array<i32>} : memref<16x128xf32, #tpu.memory_space<vmem>>, vector<16x128xf32>,
    } else {
    }
    %c0 = arith.constant 0 : index
    %c0_1 = arith.constant 0 : index
    %3 = vector.load %arg12[%c0, %c0_1] : memref<16x128xf32, #tpu.memory_space<vmem>>, vector<16x128xf32>
    %4 = arith.truncf %3 : vector<16x128xf32> to vector<16x128xbf16>
    %c0_2 = arith.constant 0 : index
    %c0_3 = arith.constant 0 : index
    %c0_4 = arith.constant 0 : index
    %5 = vector.load %arg8[%c0_2, %c0_3, %c0_4] : memref<1x8x384xf32, #tpu.memory_space<vmem>>, vector<1x8x384xf32>
    %6 = vector.shape_cast %5 : vector<1x8x384xf32> to vector<8x384xf32>
    %7 = vector.extract_strided_slice %6 {offsets = [0, 0], sizes = [1, 384], strides = [1, 1]} : vector<8x384xf32> to vector<1x384xf32>
    %8 = vector.extract_strided_slice %6 {offsets = [1, 0], sizes = [1, 128], strides = [1, 1]} : vector<8x384xf32> to vector<1x128xf32>
    %9 = vector.extract_strided_slice %6 {offsets = [2, 0], sizes = [1, 256], strides = [1, 1]} : vector<8x384xf32> to vector<1x256xf32>
    %10 = vector.extract_strided_slice %6 {offsets = [3, 0], sizes = [1, 128], strides = [1, 1]} : vector<8x384xf32> to vector<1x128xf32>
    %11 = vector.extract_strided_slice %6 {offsets = [4, 0], sizes = [1, 128], strides = [1, 1]} : vector<8x384xf32> to vector<1x128xf32>
    %12 = vector.extract_strided_slice %6 {offsets = [5, 0], sizes = [1, 128], strides = [1, 1]} : vector<8x384xf32> to vector<1x128xf32>
    %13 = vector.extract_strided_slice %6 {offsets = [6, 0], sizes = [1, 128], strides = [1, 1]} : vector<8x384xf32> to vector<1x128xf32>
    %14 = vector.extract_strided_slice %6 {offsets = [7, 0], sizes = [1, 128], strides = [1, 1]} : vector<8x384xf32> to vector<1x128xf32>
    %c0_5 = arith.constant 0 : index
    %c0_6 = arith.constant 0 : index
    %c0_7 = arith.constant 0 : index
    %15 = vector.load %arg4[%c0_5, %c0_6, %c0_7] : memref<1x128x384xbf16, #tpu.memory_space<vmem>>, vector<1x128x384xbf16>
    %16 = vector.shape_cast %15 : vector<1x128x384xbf16> to vector<128x384xbf16>
    %cst = arith.constant dense<0.000000e+00> : vector<16x384xf32>
    %17 = tpu.matmul %4, %16, %cst {dimension_numbers = #tpu.dot_dimension_numbers<[1], [0], [0], [1], [0, 0, 1, 1], [], []>} : vector<16x128xbf16>, vector<128x384xbf16>, vector<16x384xf32> -> vector<16x384xf32>
    %18 = vector.broadcast %7 : vector<1x384xf32> to vector<16x384xf32>
    %19 = arith.addf %17, %18 : vector<16x384xf32>
    %20 = vector.extract_strided_slice %19 {offsets = [0, 0], sizes = [16, 32], strides = [1, 1]} : vector<16x384xf32> to vector<16x32xf32>
    %21 = vector.extract_strided_slice %19 {offsets = [0, 128], sizes = [16, 32], strides = [1, 1]} : vector<16x384xf32> to vector<16x32xf32>
    %22 = vector.extract_strided_slice %19 {offsets = [0, 256], sizes = [16, 32], strides = [1, 1]} : vector<16x384xf32> to vector<16x32xf32>
    %23 = vector.extract_strided_slice %20 {offsets = [0, 0], sizes = [8, 32], strides = [1, 1]} : vector<16x32xf32> to vector<8x32xf32>
    %24 = arith.truncf %23 : vector<8x32xf32> to vector<8x32xbf16>
    %25 = vector.extract_strided_slice %21 {offsets = [0, 0], sizes = [8, 32], strides = [1, 1]} : vector<16x32xf32> to vector<8x32xf32>
    %26 = arith.truncf %25 : vector<8x32xf32> to vector<8x32xbf16>
    %27 = vector.extract_strided_slice %22 {offsets = [0, 0], sizes = [8, 32], strides = [1, 1]} : vector<16x32xf32> to vector<8x32xf32>
    %28 = arith.truncf %27 : vector<8x32xf32> to vector<8x32xbf16>
    %29 = tpu.transpose %26, [1, 0] : vector<8x32xbf16> -> vector<32x8xbf16>
    %cst_8 = arith.constant dense<0.000000e+00> : vector<8x8xf32>
    %30 = tpu.matmul %24, %29, %cst_8 {dimension_numbers = #tpu.dot_dimension_numbers<[1], [0], [0], [1], [0, 0, 1, 1], [], []>} : vector<8x32xbf16>, vector<32x8xbf16>, vector<8x8xf32> -> vector<8x8xf32>
    %cst_9 = arith.constant 0.176776692 : f32
    %31 = vector.broadcast %cst_9 : f32 to vector<8x8xf32>
    %32 = arith.mulf %30, %31 : vector<8x8xf32>
    %c0_10 = arith.constant 0 : index
    %c0_11 = arith.constant 0 : index
    %33 = vector.load %arg2[%c0_10, %c0_11] : memref<2x8xf32, #tpu.memory_space<vmem>>, vector<1x8xf32>
    %34 = vector.broadcast %33 : vector<1x8xf32> to vector<8x8xf32>
    %35 = arith.addf %32, %34 : vector<8x8xf32>
    %cst_12 = arith.constant dense<0xFF800000> : vector<8xf32>
    %36 = vector.multi_reduction <maximumf>, %35, %cst_12 [1] : vector<8x8xf32> to vector<8xf32>
    %37 = vector.shape_cast %36 : vector<8xf32> to vector<8x1xf32>
    %38 = vector.broadcast %37 : vector<8x1xf32> to vector<8x8xf32>
    %39 = arith.subf %35, %38 : vector<8x8xf32>
    %40 = math.exp %39 : vector<8x8xf32>
    %cst_13 = arith.constant dense<0.000000e+00> : vector<8xf32>
    %41 = vector.multi_reduction <add>, %40, %cst_13 [1] : vector<8x8xf32> to vector<8xf32>
    %42 = vector.shape_cast %41 : vector<8xf32> to vector<8x1xf32>
    %43 = tpu.reciprocal %42 {approx = true} : vector<8x1xf32> -> vector<8x1xf32>
    %44 = vector.broadcast %43 : vector<8x1xf32> to vector<8x8xf32>
    %45 = arith.mulf %40, %44 : vector<8x8xf32>
    %46 = arith.truncf %45 : vector<8x8xf32> to vector<8x8xbf16>
    %cst_14 = arith.constant dense<0.000000e+00> : vector<8x32xf32>
    %47 = tpu.matmul %46, %28, %cst_14 {dimension_numbers = #tpu.dot_dimension_numbers<[1], [0], [0], [1], [0, 0, 1, 1], [], []>} : vector<8x8xbf16>, vector<8x32xbf16>, vector<8x32xf32> -> vector<8x32xf32>
    %48 = vector.extract_strided_slice %20 {offsets = [8, 0], sizes = [8, 32], strides = [1, 1]} : vector<16x32xf32> to vector<8x32xf32>
    %49 = arith.truncf %48 : vector<8x32xf32> to vector<8x32xbf16>
    %50 = vector.extract_strided_slice %21 {offsets = [8, 0], sizes = [8, 32], strides = [1, 1]} : vector<16x32xf32> to vector<8x32xf32>
    %51 = arith.truncf %50 : vector<8x32xf32> to vector<8x32xbf16>
    %52 = vector.extract_strided_slice %22 {offsets = [8, 0], sizes = [8, 32], strides = [1, 1]} : vector<16x32xf32> to vector<8x32xf32>
    %53 = arith.truncf %52 : vector<8x32xf32> to vector<8x32xbf16>
    %54 = tpu.transpose %51, [1, 0] : vector<8x32xbf16> -> vector<32x8xbf16>
    %cst_15 = arith.constant dense<0.000000e+00> : vector<8x8xf32>
    %55 = tpu.matmul %49, %54, %cst_15 {dimension_numbers = #tpu.dot_dimension_numbers<[1], [0], [0], [1], [0, 0, 1, 1], [], []>} : vector<8x32xbf16>, vector<32x8xbf16>, vector<8x8xf32> -> vector<8x8xf32>
    %cst_16 = arith.constant 0.176776692 : f32
    %56 = vector.broadcast %cst_16 : f32 to vector<8x8xf32>
    %57 = arith.mulf %55, %56 : vector<8x8xf32>
    %c1 = arith.constant 1 : index
    %c0_17 = arith.constant 0 : index
    %58 = vector.load %arg2[%c1, %c0_17] : memref<2x8xf32, #tpu.memory_space<vmem>>, vector<1x8xf32>
    %59 = vector.broadcast %58 : vector<1x8xf32> to vector<8x8xf32>
    %60 = arith.addf %57, %59 : vector<8x8xf32>
    %cst_18 = arith.constant dense<0xFF800000> : vector<8xf32>
    %61 = vector.multi_reduction <maximumf>, %60, %cst_18 [1] : vector<8x8xf32> to vector<8xf32>
    %62 = vector.shape_cast %61 : vector<8xf32> to vector<8x1xf32>
    %63 = vector.broadcast %62 : vector<8x1xf32> to vector<8x8xf32>
    %64 = arith.subf %60, %63 : vector<8x8xf32>
    %65 = math.exp %64 : vector<8x8xf32>
    %cst_19 = arith.constant dense<0.000000e+00> : vector<8xf32>
    %66 = vector.multi_reduction <add>, %65, %cst_19 [1] : vector<8x8xf32> to vector<8xf32>
    %67 = vector.shape_cast %66 : vector<8xf32> to vector<8x1xf32>
    %68 = tpu.reciprocal %67 {approx = true} : vector<8x1xf32> -> vector<8x1xf32>
    %69 = vector.broadcast %68 : vector<8x1xf32> to vector<8x8xf32>
    %70 = arith.mulf %65, %69 : vector<8x8xf32>
    %71 = arith.truncf %70 : vector<8x8xf32> to vector<8x8xbf16>
    %cst_20 = arith.constant dense<0.000000e+00> : vector<8x32xf32>
    %72 = tpu.matmul %71, %53, %cst_20 {dimension_numbers = #tpu.dot_dimension_numbers<[1], [0], [0], [1], [0, 0, 1, 1], [], []>} : vector<8x8xbf16>, vector<8x32xbf16>, vector<8x32xf32> -> vector<8x32xf32>
    %73 = tpu.concatenate %47, %72 in 0 : vector<8x32xf32>, vector<8x32xf32> -> vector<16x32xf32>
    %74 = vector.extract_strided_slice %19 {offsets = [0, 32], sizes = [16, 32], strides = [1, 1]} : vector<16x384xf32> to vector<16x32xf32>
    %75 = vector.extract_strided_slice %19 {offsets = [0, 160], sizes = [16, 32], strides = [1, 1]} : vector<16x384xf32> to vector<16x32xf32>
    %76 = vector.extract_strided_slice %19 {offsets = [0, 288], sizes = [16, 32], strides = [1, 1]} : vector<16x384xf32> to vector<16x32xf32>
    %77 = vector.extract_strided_slice %74 {offsets = [0, 0], sizes = [8, 32], strides = [1, 1]} : vector<16x32xf32> to vector<8x32xf32>
    %78 = arith.truncf %77 : vector<8x32xf32> to vector<8x32xbf16>
    %79 = vector.extract_strided_slice %75 {offsets = [0, 0], sizes = [8, 32], strides = [1, 1]} : vector<16x32xf32> to vector<8x32xf32>
    %80 = arith.truncf %79 : vector<8x32xf32> to vector<8x32xbf16>
    %81 = vector.extract_strided_slice %76 {offsets = [0, 0], sizes = [8, 32], strides = [1, 1]} : vector<16x32xf32> to vector<8x32xf32>
    %82 = arith.truncf %81 : vector<8x32xf32> to vector<8x32xbf16>
    %83 = tpu.transpose %80, [1, 0] : vector<8x32xbf16> -> vector<32x8xbf16>
    %cst_21 = arith.constant dense<0.000000e+00> : vector<8x8xf32>
    %84 = tpu.matmul %78, %83, %cst_21 {dimension_numbers = #tpu.dot_dimension_numbers<[1], [0], [0], [1], [0, 0, 1, 1], [], []>} : vector<8x32xbf16>, vector<32x8xbf16>, vector<8x8xf32> -> vector<8x8xf32>
    %cst_22 = arith.constant 0.176776692 : f32
    %85 = vector.broadcast %cst_22 : f32 to vector<8x8xf32>
    %86 = arith.mulf %84, %85 : vector<8x8xf32>
    %c0_23 = arith.constant 0 : index
    %c0_24 = arith.constant 0 : index
    %87 = vector.load %arg2[%c0_23, %c0_24] : memref<2x8xf32, #tpu.memory_space<vmem>>, vector<1x8xf32>
    %88 = vector.broadcast %87 : vector<1x8xf32> to vector<8x8xf32>
    %89 = arith.addf %86, %88 : vector<8x8xf32>
    %cst_25 = arith.constant dense<0xFF800000> : vector<8xf32>
    %90 = vector.multi_reduction <maximumf>, %89, %cst_25 [1] : vector<8x8xf32> to vector<8xf32>
    %91 = vector.shape_cast %90 : vector<8xf32> to vector<8x1xf32>
    %92 = vector.broadcast %91 : vector<8x1xf32> to vector<8x8xf32>
    %93 = arith.subf %89, %92 : vector<8x8xf32>
    %94 = math.exp %93 : vector<8x8xf32>
    %cst_26 = arith.constant dense<0.000000e+00> : vector<8xf32>
    %95 = vector.multi_reduction <add>, %94, %cst_26 [1] : vector<8x8xf32> to vector<8xf32>
    %96 = vector.shape_cast %95 : vector<8xf32> to vector<8x1xf32>
    %97 = tpu.reciprocal %96 {approx = true} : vector<8x1xf32> -> vector<8x1xf32>
    %98 = vector.broadcast %97 : vector<8x1xf32> to vector<8x8xf32>
    %99 = arith.mulf %94, %98 : vector<8x8xf32>
    %100 = arith.truncf %99 : vector<8x8xf32> to vector<8x8xbf16>
    %cst_27 = arith.constant dense<0.000000e+00> : vector<8x32xf32>
    %101 = tpu.matmul %100, %82, %cst_27 {dimension_numbers = #tpu.dot_dimension_numbers<[1], [0], [0], [1], [0, 0, 1, 1], [], []>} : vector<8x8xbf16>, vector<8x32xbf16>, vector<8x32xf32> -> vector<8x32xf32>
    %102 = vector.extract_strided_slice %74 {offsets = [8, 0], sizes = [8, 32], strides = [1, 1]} : vector<16x32xf32> to vector<8x32xf32>
    %103 = arith.truncf %102 : vector<8x32xf32> to vector<8x32xbf16>
    %104 = vector.extract_strided_slice %75 {offsets = [8, 0], sizes = [8, 32], strides = [1, 1]} : vector<16x32xf32> to vector<8x32xf32>
    %105 = arith.truncf %104 : vector<8x32xf32> to vector<8x32xbf16>
    %106 = vector.extract_strided_slice %76 {offsets = [8, 0], sizes = [8, 32], strides = [1, 1]} : vector<16x32xf32> to vector<8x32xf32>
    %107 = arith.truncf %106 : vector<8x32xf32> to vector<8x32xbf16>
    %108 = tpu.transpose %105, [1, 0] : vector<8x32xbf16> -> vector<32x8xbf16>
    %cst_28 = arith.constant dense<0.000000e+00> : vector<8x8xf32>
    %109 = tpu.matmul %103, %108, %cst_28 {dimension_numbers = #tpu.dot_dimension_numbers<[1], [0], [0], [1], [0, 0, 1, 1], [], []>} : vector<8x32xbf16>, vector<32x8xbf16>, vector<8x8xf32> -> vector<8x8xf32>
    %cst_29 = arith.constant 0.176776692 : f32
    %110 = vector.broadcast %cst_29 : f32 to vector<8x8xf32>
    %111 = arith.mulf %109, %110 : vector<8x8xf32>
    %c1_30 = arith.constant 1 : index
    %c0_31 = arith.constant 0 : index
    %112 = vector.load %arg2[%c1_30, %c0_31] : memref<2x8xf32, #tpu.memory_space<vmem>>, vector<1x8xf32>
    %113 = vector.broadcast %112 : vector<1x8xf32> to vector<8x8xf32>
    %114 = arith.addf %111, %113 : vector<8x8xf32>
    %cst_32 = arith.constant dense<0xFF800000> : vector<8xf32>
    %115 = vector.multi_reduction <maximumf>, %114, %cst_32 [1] : vector<8x8xf32> to vector<8xf32>
    %116 = vector.shape_cast %115 : vector<8xf32> to vector<8x1xf32>
    %117 = vector.broadcast %116 : vector<8x1xf32> to vector<8x8xf32>
    %118 = arith.subf %114, %117 : vector<8x8xf32>
    %119 = math.exp %118 : vector<8x8xf32>
    %cst_33 = arith.constant dense<0.000000e+00> : vector<8xf32>
    %120 = vector.multi_reduction <add>, %119, %cst_33 [1] : vector<8x8xf32> to vector<8xf32>
    %121 = vector.shape_cast %120 : vector<8xf32> to vector<8x1xf32>
    %122 = tpu.reciprocal %121 {approx = true} : vector<8x1xf32> -> vector<8x1xf32>
    %123 = vector.broadcast %122 : vector<8x1xf32> to vector<8x8xf32>
    %124 = arith.mulf %119, %123 : vector<8x8xf32>
    %125 = arith.truncf %124 : vector<8x8xf32> to vector<8x8xbf16>
    %cst_34 = arith.constant dense<0.000000e+00> : vector<8x32xf32>
    %126 = tpu.matmul %125, %107, %cst_34 {dimension_numbers = #tpu.dot_dimension_numbers<[1], [0], [0], [1], [0, 0, 1, 1], [], []>} : vector<8x8xbf16>, vector<8x32xbf16>, vector<8x32xf32> -> vector<8x32xf32>
    %127 = tpu.concatenate %101, %126 in 0 : vector<8x32xf32>, vector<8x32xf32> -> vector<16x32xf32>
    %128 = vector.extract_strided_slice %19 {offsets = [0, 64], sizes = [16, 32], strides = [1, 1]} : vector<16x384xf32> to vector<16x32xf32>
    %129 = vector.extract_strided_slice %19 {offsets = [0, 192], sizes = [16, 32], strides = [1, 1]} : vector<16x384xf32> to vector<16x32xf32>
    %130 = vector.extract_strided_slice %19 {offsets = [0, 320], sizes = [16, 32], strides = [1, 1]} : vector<16x384xf32> to vector<16x32xf32>
    %131 = vector.extract_strided_slice %128 {offsets = [0, 0], sizes = [8, 32], strides = [1, 1]} : vector<16x32xf32> to vector<8x32xf32>
    %132 = arith.truncf %131 : vector<8x32xf32> to vector<8x32xbf16>
    %133 = vector.extract_strided_slice %129 {offsets = [0, 0], sizes = [8, 32], strides = [1, 1]} : vector<16x32xf32> to vector<8x32xf32>
    %134 = arith.truncf %133 : vector<8x32xf32> to vector<8x32xbf16>
    %135 = vector.extract_strided_slice %130 {offsets = [0, 0], sizes = [8, 32], strides = [1, 1]} : vector<16x32xf32> to vector<8x32xf32>
    %136 = arith.truncf %135 : vector<8x32xf32> to vector<8x32xbf16>
    %137 = tpu.transpose %134, [1, 0] : vector<8x32xbf16> -> vector<32x8xbf16>
    %cst_35 = arith.constant dense<0.000000e+00> : vector<8x8xf32>
    %138 = tpu.matmul %132, %137, %cst_35 {dimension_numbers = #tpu.dot_dimension_numbers<[1], [0], [0], [1], [0, 0, 1, 1], [], []>} : vector<8x32xbf16>, vector<32x8xbf16>, vector<8x8xf32> -> vector<8x8xf32>
    %cst_36 = arith.constant 0.176776692 : f32
    %139 = vector.broadcast %cst_36 : f32 to vector<8x8xf32>
    %140 = arith.mulf %138, %139 : vector<8x8xf32>
    %c0_37 = arith.constant 0 : index
    %c0_38 = arith.constant 0 : index
    %141 = vector.load %arg2[%c0_37, %c0_38] : memref<2x8xf32, #tpu.memory_space<vmem>>, vector<1x8xf32>
    %142 = vector.broadcast %141 : vector<1x8xf32> to vector<8x8xf32>
    %143 = arith.addf %140, %142 : vector<8x8xf32>
    %cst_39 = arith.constant dense<0xFF800000> : vector<8xf32>
    %144 = vector.multi_reduction <maximumf>, %143, %cst_39 [1] : vector<8x8xf32> to vector<8xf32>
    %145 = vector.shape_cast %144 : vector<8xf32> to vector<8x1xf32>
    %146 = vector.broadcast %145 : vector<8x1xf32> to vector<8x8xf32>
    %147 = arith.subf %143, %146 : vector<8x8xf32>
    %148 = math.exp %147 : vector<8x8xf32>
    %cst_40 = arith.constant dense<0.000000e+00> : vector<8xf32>
    %149 = vector.multi_reduction <add>, %148, %cst_40 [1] : vector<8x8xf32> to vector<8xf32>
    %150 = vector.shape_cast %149 : vector<8xf32> to vector<8x1xf32>
    %151 = tpu.reciprocal %150 {approx = true} : vector<8x1xf32> -> vector<8x1xf32>
    %152 = vector.broadcast %151 : vector<8x1xf32> to vector<8x8xf32>
    %153 = arith.mulf %148, %152 : vector<8x8xf32>
    %154 = arith.truncf %153 : vector<8x8xf32> to vector<8x8xbf16>
    %cst_41 = arith.constant dense<0.000000e+00> : vector<8x32xf32>
    %155 = tpu.matmul %154, %136, %cst_41 {dimension_numbers = #tpu.dot_dimension_numbers<[1], [0], [0], [1], [0, 0, 1, 1], [], []>} : vector<8x8xbf16>, vector<8x32xbf16>, vector<8x32xf32> -> vector<8x32xf32>
    %156 = vector.extract_strided_slice %128 {offsets = [8, 0], sizes = [8, 32], strides = [1, 1]} : vector<16x32xf32> to vector<8x32xf32>
    %157 = arith.truncf %156 : vector<8x32xf32> to vector<8x32xbf16>
    %158 = vector.extract_strided_slice %129 {offsets = [8, 0], sizes = [8, 32], strides = [1, 1]} : vector<16x32xf32> to vector<8x32xf32>
    %159 = arith.truncf %158 : vector<8x32xf32> to vector<8x32xbf16>
    %160 = vector.extract_strided_slice %130 {offsets = [8, 0], sizes = [8, 32], strides = [1, 1]} : vector<16x32xf32> to vector<8x32xf32>
    %161 = arith.truncf %160 : vector<8x32xf32> to vector<8x32xbf16>
    %162 = tpu.transpose %159, [1, 0] : vector<8x32xbf16> -> vector<32x8xbf16>
    %cst_42 = arith.constant dense<0.000000e+00> : vector<8x8xf32>
    %163 = tpu.matmul %157, %162, %cst_42 {dimension_numbers = #tpu.dot_dimension_numbers<[1], [0], [0], [1], [0, 0, 1, 1], [], []>} : vector<8x32xbf16>, vector<32x8xbf16>, vector<8x8xf32> -> vector<8x8xf32>
    %cst_43 = arith.constant 0.176776692 : f32
    %164 = vector.broadcast %cst_43 : f32 to vector<8x8xf32>
    %165 = arith.mulf %163, %164 : vector<8x8xf32>
    %c1_44 = arith.constant 1 : index
    %c0_45 = arith.constant 0 : index
    %166 = vector.load %arg2[%c1_44, %c0_45] : memref<2x8xf32, #tpu.memory_space<vmem>>, vector<1x8xf32>
    %167 = vector.broadcast %166 : vector<1x8xf32> to vector<8x8xf32>
    %168 = arith.addf %165, %167 : vector<8x8xf32>
    %cst_46 = arith.constant dense<0xFF800000> : vector<8xf32>
    %169 = vector.multi_reduction <maximumf>, %168, %cst_46 [1] : vector<8x8xf32> to vector<8xf32>
    %170 = vector.shape_cast %169 : vector<8xf32> to vector<8x1xf32>
    %171 = vector.broadcast %170 : vector<8x1xf32> to vector<8x8xf32>
    %172 = arith.subf %168, %171 : vector<8x8xf32>
    %173 = math.exp %172 : vector<8x8xf32>
    %cst_47 = arith.constant dense<0.000000e+00> : vector<8xf32>
    %174 = vector.multi_reduction <add>, %173, %cst_47 [1] : vector<8x8xf32> to vector<8xf32>
    %175 = vector.shape_cast %174 : vector<8xf32> to vector<8x1xf32>
    %176 = tpu.reciprocal %175 {approx = true} : vector<8x1xf32> -> vector<8x1xf32>
    %177 = vector.broadcast %176 : vector<8x1xf32> to vector<8x8xf32>
    %178 = arith.mulf %173, %177 : vector<8x8xf32>
    %179 = arith.truncf %178 : vector<8x8xf32> to vector<8x8xbf16>
    %cst_48 = arith.constant dense<0.000000e+00> : vector<8x32xf32>
    %180 = tpu.matmul %179, %161, %cst_48 {dimension_numbers = #tpu.dot_dimension_numbers<[1], [0], [0], [1], [0, 0, 1, 1], [], []>} : vector<8x8xbf16>, vector<8x32xbf16>, vector<8x32xf32> -> vector<8x32xf32>
    %181 = tpu.concatenate %155, %180 in 0 : vector<8x32xf32>, vector<8x32xf32> -> vector<16x32xf32>
    %182 = vector.extract_strided_slice %19 {offsets = [0, 96], sizes = [16, 32], strides = [1, 1]} : vector<16x384xf32> to vector<16x32xf32>
    %183 = vector.extract_strided_slice %19 {offsets = [0, 224], sizes = [16, 32], strides = [1, 1]} : vector<16x384xf32> to vector<16x32xf32>
    %184 = vector.extract_strided_slice %19 {offsets = [0, 352], sizes = [16, 32], strides = [1, 1]} : vector<16x384xf32> to vector<16x32xf32>
    %185 = vector.extract_strided_slice %182 {offsets = [0, 0], sizes = [8, 32], strides = [1, 1]} : vector<16x32xf32> to vector<8x32xf32>
    %186 = arith.truncf %185 : vector<8x32xf32> to vector<8x32xbf16>
    %187 = vector.extract_strided_slice %183 {offsets = [0, 0], sizes = [8, 32], strides = [1, 1]} : vector<16x32xf32> to vector<8x32xf32>
    %188 = arith.truncf %187 : vector<8x32xf32> to vector<8x32xbf16>
    %189 = vector.extract_strided_slice %184 {offsets = [0, 0], sizes = [8, 32], strides = [1, 1]} : vector<16x32xf32> to vector<8x32xf32>
    %190 = arith.truncf %189 : vector<8x32xf32> to vector<8x32xbf16>
    %191 = tpu.transpose %188, [1, 0] : vector<8x32xbf16> -> vector<32x8xbf16>
    %cst_49 = arith.constant dense<0.000000e+00> : vector<8x8xf32>
    %192 = tpu.matmul %186, %191, %cst_49 {dimension_numbers = #tpu.dot_dimension_numbers<[1], [0], [0], [1], [0, 0, 1, 1], [], []>} : vector<8x32xbf16>, vector<32x8xbf16>, vector<8x8xf32> -> vector<8x8xf32>
    %cst_50 = arith.constant 0.176776692 : f32
    %193 = vector.broadcast %cst_50 : f32 to vector<8x8xf32>
    %194 = arith.mulf %192, %193 : vector<8x8xf32>
    %c0_51 = arith.constant 0 : index
    %c0_52 = arith.constant 0 : index
    %195 = vector.load %arg2[%c0_51, %c0_52] : memref<2x8xf32, #tpu.memory_space<vmem>>, vector<1x8xf32>
    %196 = vector.broadcast %195 : vector<1x8xf32> to vector<8x8xf32>
    %197 = arith.addf %194, %196 : vector<8x8xf32>
    %cst_53 = arith.constant dense<0xFF800000> : vector<8xf32>
    %198 = vector.multi_reduction <maximumf>, %197, %cst_53 [1] : vector<8x8xf32> to vector<8xf32>
    %199 = vector.shape_cast %198 : vector<8xf32> to vector<8x1xf32>
    %200 = vector.broadcast %199 : vector<8x1xf32> to vector<8x8xf32>
    %201 = arith.subf %197, %200 : vector<8x8xf32>
    %202 = math.exp %201 : vector<8x8xf32>
    %cst_54 = arith.constant dense<0.000000e+00> : vector<8xf32>
    %203 = vector.multi_reduction <add>, %202, %cst_54 [1] : vector<8x8xf32> to vector<8xf32>
    %204 = vector.shape_cast %203 : vector<8xf32> to vector<8x1xf32>
    %205 = tpu.reciprocal %204 {approx = true} : vector<8x1xf32> -> vector<8x1xf32>
    %206 = vector.broadcast %205 : vector<8x1xf32> to vector<8x8xf32>
    %207 = arith.mulf %202, %206 : vector<8x8xf32>
    %208 = arith.truncf %207 : vector<8x8xf32> to vector<8x8xbf16>
    %cst_55 = arith.constant dense<0.000000e+00> : vector<8x32xf32>
    %209 = tpu.matmul %208, %190, %cst_55 {dimension_numbers = #tpu.dot_dimension_numbers<[1], [0], [0], [1], [0, 0, 1, 1], [], []>} : vector<8x8xbf16>, vector<8x32xbf16>, vector<8x32xf32> -> vector<8x32xf32>
    %210 = vector.extract_strided_slice %182 {offsets = [8, 0], sizes = [8, 32], strides = [1, 1]} : vector<16x32xf32> to vector<8x32xf32>
    %211 = arith.truncf %210 : vector<8x32xf32> to vector<8x32xbf16>
    %212 = vector.extract_strided_slice %183 {offsets = [8, 0], sizes = [8, 32], strides = [1, 1]} : vector<16x32xf32> to vector<8x32xf32>
    %213 = arith.truncf %212 : vector<8x32xf32> to vector<8x32xbf16>
    %214 = vector.extract_strided_slice %184 {offsets = [8, 0], sizes = [8, 32], strides = [1, 1]} : vector<16x32xf32> to vector<8x32xf32>
    %215 = arith.truncf %214 : vector<8x32xf32> to vector<8x32xbf16>
    %216 = tpu.transpose %213, [1, 0] : vector<8x32xbf16> -> vector<32x8xbf16>
    %cst_56 = arith.constant dense<0.000000e+00> : vector<8x8xf32>
    %217 = tpu.matmul %211, %216, %cst_56 {dimension_numbers = #tpu.dot_dimension_numbers<[1], [0], [0], [1], [0, 0, 1, 1], [], []>} : vector<8x32xbf16>, vector<32x8xbf16>, vector<8x8xf32> -> vector<8x8xf32>
    %cst_57 = arith.constant 0.176776692 : f32
    %218 = vector.broadcast %cst_57 : f32 to vector<8x8xf32>
    %219 = arith.mulf %217, %218 : vector<8x8xf32>
    %c1_58 = arith.constant 1 : index
    %c0_59 = arith.constant 0 : index
    %220 = vector.load %arg2[%c1_58, %c0_59] : memref<2x8xf32, #tpu.memory_space<vmem>>, vector<1x8xf32>
    %221 = vector.broadcast %220 : vector<1x8xf32> to vector<8x8xf32>
    %222 = arith.addf %219, %221 : vector<8x8xf32>
    %cst_60 = arith.constant dense<0xFF800000> : vector<8xf32>
    %223 = vector.multi_reduction <maximumf>, %222, %cst_60 [1] : vector<8x8xf32> to vector<8xf32>
    %224 = vector.shape_cast %223 : vector<8xf32> to vector<8x1xf32>
    %225 = vector.broadcast %224 : vector<8x1xf32> to vector<8x8xf32>
    %226 = arith.subf %222, %225 : vector<8x8xf32>
    %227 = math.exp %226 : vector<8x8xf32>
    %cst_61 = arith.constant dense<0.000000e+00> : vector<8xf32>
    %228 = vector.multi_reduction <add>, %227, %cst_61 [1] : vector<8x8xf32> to vector<8xf32>
    %229 = vector.shape_cast %228 : vector<8xf32> to vector<8x1xf32>
    %230 = tpu.reciprocal %229 {approx = true} : vector<8x1xf32> -> vector<8x1xf32>
    %231 = vector.broadcast %230 : vector<8x1xf32> to vector<8x8xf32>
    %232 = arith.mulf %227, %231 : vector<8x8xf32>
    %233 = arith.truncf %232 : vector<8x8xf32> to vector<8x8xbf16>
    %cst_62 = arith.constant dense<0.000000e+00> : vector<8x32xf32>
    %234 = tpu.matmul %233, %215, %cst_62 {dimension_numbers = #tpu.dot_dimension_numbers<[1], [0], [0], [1], [0, 0, 1, 1], [], []>} : vector<8x8xbf16>, vector<8x32xbf16>, vector<8x32xf32> -> vector<8x32xf32>
    %235 = tpu.concatenate %209, %234 in 0 : vector<8x32xf32>, vector<8x32xf32> -> vector<16x32xf32>
    %236 = tpu.concatenate %73, %127, %181, %235 in 1 : vector<16x32xf32>, vector<16x32xf32>, vector<16x32xf32>, vector<16x32xf32> -> vector<16x128xf32>
    %237 = arith.truncf %236 : vector<16x128xf32> to vector<16x128xbf16>
    %c0_63 = arith.constant 0 : index
    %c0_64 = arith.constant 0 : index
    %c0_65 = arith.constant 0 : index
    %238 = vector.load %arg5[%c0_63, %c0_64, %c0_65] : memref<1x128x128xbf16, #tpu.memory_space<vmem>>, vector<1x128x128xbf16>
    %239 = vector.shape_cast %238 : vector<1x128x128xbf16> to vector<128x128xbf16>
    %cst_66 = arith.constant dense<0.000000e+00> : vector<16x128xf32>
    %240 = tpu.matmul %237, %239, %cst_66 {dimension_numbers = #tpu.dot_dimension_numbers<[1], [0], [0], [1], [0, 0, 1, 1], [], []>} : vector<16x128xbf16>, vector<128x128xbf16>, vector<16x128xf32> -> vector<16x128xf32>
    %241 = vector.broadcast %8 : vector<1x128xf32> to vector<16x128xf32>
    %242 = arith.addf %240, %241 : vector<16x128xf32>
    %243 = arith.addf %3, %242 : vector<16x128xf32>
    %cst_67 = arith.constant dense<0.000000e+00> : vector<16xf32>
    %244 = vector.multi_reduction <add>, %243, %cst_67 [1] : vector<16x128xf32> to vector<16xf32>
    %245 = vector.shape_cast %244 : vector<16xf32> to vector<16x1xf32>
    %cst_68 = arith.constant 1.280000e+02 : f32
    %246 = vector.broadcast %cst_68 : f32 to vector<16x1xf32>
    %247 = arith.divf %245, %246 : vector<16x1xf32>
    %248 = vector.broadcast %247 : vector<16x1xf32> to vector<16x128xf32>
    %249 = arith.subf %243, %248 : vector<16x128xf32>
    %250 = arith.mulf %249, %249 : vector<16x128xf32>
    %cst_69 = arith.constant dense<0.000000e+00> : vector<16xf32>
    %251 = vector.multi_reduction <add>, %250, %cst_69 [1] : vector<16x128xf32> to vector<16xf32>
    %252 = vector.shape_cast %251 : vector<16xf32> to vector<16x1xf32>
    %cst_70 = arith.constant 1.280000e+02 : f32
    %253 = vector.broadcast %cst_70 : f32 to vector<16x1xf32>
    %254 = arith.divf %252, %253 : vector<16x1xf32>
    %cst_71 = arith.constant 9.99999996E-13 : f32
    %255 = vector.broadcast %cst_71 : f32 to vector<16x1xf32>
    %256 = arith.addf %254, %255 : vector<16x1xf32>
    %257 = math.rsqrt %256 : vector<16x1xf32>
    %258 = vector.broadcast %257 : vector<16x1xf32> to vector<16x128xf32>
    %259 = arith.mulf %249, %258 : vector<16x128xf32>
    %260 = vector.broadcast %11 : vector<1x128xf32> to vector<16x128xf32>
    %261 = arith.mulf %259, %260 : vector<16x128xf32>
    %262 = vector.broadcast %12 : vector<1x128xf32> to vector<16x128xf32>
    %263 = arith.addf %261, %262 : vector<16x128xf32>
    %264 = arith.truncf %263 : vector<16x128xf32> to vector<16x128xbf16>
    %c0_72 = arith.constant 0 : index
    %c0_73 = arith.constant 0 : index
    %c0_74 = arith.constant 0 : index
    %265 = vector.load %arg6[%c0_72, %c0_73, %c0_74] : memref<1x128x256xbf16, #tpu.memory_space<vmem>>, vector<1x128x256xbf16>
    %266 = vector.shape_cast %265 : vector<1x128x256xbf16> to vector<128x256xbf16>
    %cst_75 = arith.constant dense<0.000000e+00> : vector<16x256xf32>
    %267 = tpu.matmul %264, %266, %cst_75 {dimension_numbers = #tpu.dot_dimension_numbers<[1], [0], [0], [1], [0, 0, 1, 1], [], []>} : vector<16x128xbf16>, vector<128x256xbf16>, vector<16x256xf32> -> vector<16x256xf32>
    %268 = vector.broadcast %9 : vector<1x256xf32> to vector<16x256xf32>
    %269 = arith.addf %267, %268 : vector<16x256xf32>
    %cst_76 = arith.constant 5.000000e-01 : f32
    %270 = vector.broadcast %cst_76 : f32 to vector<16x256xf32>
    %271 = arith.mulf %270, %269 : vector<16x256xf32>
    %cst_77 = arith.constant 4.471500e-02 : f32
    %272 = vector.broadcast %cst_77 : f32 to vector<16x256xf32>
    %273 = arith.mulf %272, %269 : vector<16x256xf32>
    %274 = arith.mulf %273, %269 : vector<16x256xf32>
    %275 = arith.mulf %274, %269 : vector<16x256xf32>
    %276 = arith.addf %269, %275 : vector<16x256xf32>
    %cst_78 = arith.constant 0.797884583 : f32
    %277 = vector.broadcast %cst_78 : f32 to vector<16x256xf32>
    %278 = arith.mulf %277, %276 : vector<16x256xf32>
    %279 = math.tanh %278 : vector<16x256xf32>
    %cst_79 = arith.constant 1.000000e+00 : f32
    %280 = vector.broadcast %cst_79 : f32 to vector<16x256xf32>
    %281 = arith.addf %280, %279 : vector<16x256xf32>
    %282 = arith.mulf %271, %281 : vector<16x256xf32>
    %283 = arith.truncf %282 : vector<16x256xf32> to vector<16x256xbf16>
    %c0_80 = arith.constant 0 : index
    %c0_81 = arith.constant 0 : index
    %c0_82 = arith.constant 0 : index
    %284 = vector.load %arg7[%c0_80, %c0_81, %c0_82] : memref<1x256x128xbf16, #tpu.memory_space<vmem>>, vector<1x256x128xbf16>
    %285 = vector.shape_cast %284 : vector<1x256x128xbf16> to vector<256x128xbf16>
    %cst_83 = arith.constant dense<0.000000e+00> : vector<16x128xf32>
    %286 = tpu.matmul %283, %285, %cst_83 {dimension_numbers = #tpu.dot_dimension_numbers<[1], [0], [0], [1], [0, 0, 1, 1], [], []>} : vector<16x256xbf16>, vector<256x128xbf16>, vector<16x128xf32> -> vector<16x128xf32>
    %287 = vector.broadcast %10 : vector<1x128xf32> to vector<16x128xf32>
    %288 = arith.addf %286, %287 : vector<16x128xf32>
    %289 = arith.addf %263, %288 : vector<16x128xf32>
    %cst_84 = arith.constant dense<0.000000e+00> : vector<16xf32>
    %290 = vector.multi_reduction <add>, %289, %cst_84 [1] : vector<16x128xf32> to vector<16xf32>
    %291 = vector.shape_cast %290 : vector<16xf32> to vector<16x1xf32>
    %cst_85 = arith.constant 1.280000e+02 : f32
    %292 = vector.broadcast %cst_85 : f32 to vector<16x1xf32>
    %293 = arith.divf %291, %292 : vector<16x1xf32>
    %294 = vector.broadcast %293 : vector<16x1xf32> to vector<16x128xf32>
    %295 = arith.subf %289, %294 : vector<16x128xf32>
    %296 = arith.mulf %295, %295 : vector<16x128xf32>
    %cst_86 = arith.constant dense<0.000000e+00> : vector<16xf32>
    %297 = vector.multi_reduction <add>, %296, %cst_86 [1] : vector<16x128xf32> to vector<16xf32>
    %298 = vector.shape_cast %297 : vector<16xf32> to vector<16x1xf32>
    %cst_87 = arith.constant 1.280000e+02 : f32
    %299 = vector.broadcast %cst_87 : f32 to vector<16x1xf32>
    %300 = arith.divf %298, %299 : vector<16x1xf32>
    %cst_88 = arith.constant 9.99999996E-13 : f32
    %301 = vector.broadcast %cst_88 : f32 to vector<16x1xf32>
    %302 = arith.addf %300, %301 : vector<16x1xf32>
    %303 = math.rsqrt %302 : vector<16x1xf32>
    %304 = vector.broadcast %303 : vector<16x1xf32> to vector<16x128xf32>
    %305 = arith.mulf %295, %304 : vector<16x128xf32>
    %306 = vector.broadcast %13 : vector<1x128xf32> to vector<16x128xf32>
    %307 = arith.mulf %305, %306 : vector<16x128xf32>
    %308 = vector.broadcast %14 : vector<1x128xf32> to vector<16x128xf32>
    %309 = arith.addf %307, %308 : vector<16x128xf32>
    %c0_89 = arith.constant 0 : index
    %c0_90 = arith.constant 0 : index
    %310 = vector.load %arg12[%c0_89, %c0_90] : memref<16x128xf32, #tpu.memory_space<vmem>>, vector<16x128xf32>
    tpu.vector_store %arg12[%c0_89, %c0_90], %309 {strides = array<i32>} : memref<16x128xf32, #tpu.memory_space<vmem>>, vector<16x128xf32>,
    %c1_i32 = arith.constant 1 : i32
    %311 = arith.cmpi eq, %arg0, %c1_i32 : i32
    %312 = arith.extui %311 : i1 to i32
    %c0_i32_91 = arith.constant 0 : i32
    %313 = arith.cmpi ne, %312, %c0_i32_91 : i32
    scf.if %313 {
      %314 = vector.extract_strided_slice %309 {offsets = [0, 0], sizes = [1, 128], strides = [1, 1]} : vector<16x128xf32> to vector<1x128xf32>
      %315 = vector.extract_strided_slice %309 {offsets = [8, 0], sizes = [1, 128], strides = [1, 1]} : vector<16x128xf32> to vector<1x128xf32>
      %316 = tpu.concatenate %314, %315 in 0 : vector<1x128xf32>, vector<1x128xf32> -> vector<2x128xf32>
      %317 = arith.truncf %316 : vector<2x128xf32> to vector<2x128xbf16>
      %c0_92 = arith.constant 0 : index
      %c0_93 = arith.constant 0 : index
      %318 = vector.load %arg9[%c0_92, %c0_93] : memref<128x128xbf16, #tpu.memory_space<vmem>>, vector<128x128xbf16>
      %cst_94 = arith.constant dense<0.000000e+00> : vector<2x128xf32>
      %319 = tpu.matmul %317, %318, %cst_94 {dimension_numbers = #tpu.dot_dimension_numbers<[1], [0], [0], [1], [0, 0, 1, 1], [], []>} : vector<2x128xbf16>, vector<128x128xbf16>, vector<2x128xf32> -> vector<2x128xf32>
      %c0_95 = arith.constant 0 : index
      %c0_96 = arith.constant 0 : index
      %320 = vector.load %arg10[%c0_95, %c0_96] : memref<3x128xf32, #tpu.memory_space<vmem>>, vector<1x128xf32>
      %321 = vector.broadcast %320 : vector<1x128xf32> to vector<2x128xf32>
      %322 = arith.addf %319, %321 : vector<2x128xf32>
      %323 = math.tanh %322 : vector<2x128xf32>
      %c1_97 = arith.constant 1 : index
      %c0_98 = arith.constant 0 : index
      %324 = vector.load %arg10[%c1_97, %c0_98] : memref<3x128xf32, #tpu.memory_space<vmem>>, vector<1x128xf32>
      %325 = vector.broadcast %324 : vector<1x128xf32> to vector<2x128xf32>
      %326 = arith.mulf %323, %325 : vector<2x128xf32>
      %cst_99 = arith.constant dense<0.000000e+00> : vector<2xf32>
      %327 = vector.multi_reduction <add>, %326, %cst_99 [1] : vector<2x128xf32> to vector<2xf32>
      %328 = vector.shape_cast %327 : vector<2xf32> to vector<2x1xf32>
      %c2 = arith.constant 2 : index
      %c0_100 = arith.constant 0 : index
      %329 = vector.load %arg10[%c2, %c0_100] : memref<3x128xf32, #tpu.memory_space<vmem>>, vector<1x1xf32>
      %330 = vector.broadcast %329 : vector<1x1xf32> to vector<2x1xf32>
      %331 = arith.addf %328, %330 : vector<2x1xf32>
      %c0_101 = arith.constant 0 : index
      %c0_102 = arith.constant 0 : index
      %332 = vector.load %arg11[%c0_101, %c0_102] : memref<2x1xf32, #tpu.memory_space<vmem>>, vector<2x1xf32>
      tpu.vector_store %arg11[%c0_101, %c0_102], %331 {strides = array<i32>} : memref<2x1xf32, #tpu.memory_space<vmem>>, vector<2x1xf32>,
    } else {
    }
    return
  }
  func.func @transform_0(%arg0: i32) -> (i32, i32) {
    %c0_i32 = arith.constant 0 : i32
    %c0_i32_0 = arith.constant 0 : i32
    %c0_i32_1 = arith.constant 0 : i32
    return %c0_i32, %c0_i32_0 : i32, i32
  }
  func.func @transform_1(%arg0: i32) -> (i32, i32) {
    %c0_i32 = arith.constant 0 : i32
    %c0_i32_0 = arith.constant 0 : i32
    %c0_i32_1 = arith.constant 0 : i32
    return %c0_i32, %c0_i32_0 : i32, i32
  }
  func.func @transform_2(%arg0: i32) -> (i32, i32) {
    %c0_i32 = arith.constant 0 : i32
    %c0_i32_0 = arith.constant 0 : i32
    %c0_i32_1 = arith.constant 0 : i32
    return %c0_i32, %c0_i32_0 : i32, i32
  }
  func.func @transform_3(%arg0: i32) -> (i32, i32, i32) {
    %c0_i32 = arith.constant 0 : i32
    %c0_i32_0 = arith.constant 0 : i32
    %c0_i32_1 = arith.constant 0 : i32
    return %arg0, %c0_i32, %c0_i32_0 : i32, i32, i32
  }
  func.func @transform_4(%arg0: i32) -> (i32, i32, i32) {
    %c0_i32 = arith.constant 0 : i32
    %c0_i32_0 = arith.constant 0 : i32
    %c0_i32_1 = arith.constant 0 : i32
    return %arg0, %c0_i32, %c0_i32_0 : i32, i32, i32
  }
  func.func @transform_5(%arg0: i32) -> (i32, i32, i32) {
    %c0_i32 = arith.constant 0 : i32
    %c0_i32_0 = arith.constant 0 : i32
    %c0_i32_1 = arith.constant 0 : i32
    return %arg0, %c0_i32, %c0_i32_0 : i32, i32, i32
  }
  func.func @transform_6(%arg0: i32) -> (i32, i32, i32) {
    %c0_i32 = arith.constant 0 : i32
    %c0_i32_0 = arith.constant 0 : i32
    %c0_i32_1 = arith.constant 0 : i32
    return %arg0, %c0_i32, %c0_i32_0 : i32, i32, i32
  }
  func.func @transform_7(%arg0: i32) -> (i32, i32, i32) {
    %c0_i32 = arith.constant 0 : i32
    %c0_i32_0 = arith.constant 0 : i32
    %c0_i32_1 = arith.constant 0 : i32
    return %arg0, %c0_i32, %c0_i32_0 : i32, i32, i32
  }
  func.func @transform_8(%arg0: i32) -> (i32, i32) {
    %c0_i32 = arith.constant 0 : i32
    %c0_i32_0 = arith.constant 0 : i32
    %c0_i32_1 = arith.constant 0 : i32
    return %c0_i32, %c0_i32_0 : i32, i32
  }
  func.func @transform_9(%arg0: i32) -> (i32, i32) {
    %c0_i32 = arith.constant 0 : i32
    %c0_i32_0 = arith.constant 0 : i32
    %c0_i32_1 = arith.constant 0 : i32
    return %c0_i32, %c0_i32_0 : i32, i32
  }
  func.func @transform_10(%arg0: i32) -> (i32, i32) {
    %c0_i32 = arith.constant 0 : i32
    %c0_i32_0 = arith.constant 0 : i32
    %c0_i32_1 = arith.constant 0 : i32
    return %c0_i32, %c0_i32_0 : i32, i32
  }
}

</mosaic_0001>

<llo_original>
// kernel: bert_base_uncased_forward.1
$region0: #{bert_base_uncased_forward.1}
  #allocation0 [shape = 'u32[]', space=smem, size = 0x4, offset = 0x4, fixed_abs, tag = 'smem constant byte address 0x4 - core index']
  #allocation1 [shape = 'u32[144,128]{1,0:T(1,128)}', space=vmem, size = 0x12000, scoped, tag = 'internal scratch']
  #allocation2 [shape = 'f32[16,128]{1,0:T(8,128)}', space=vmem, size = 0x2000, scoped, tag = 'scratch operand']
  %s0 = inlined_call_operand.vmem [shape: f32[16,128], index: 0, kind: input, shape index: {}]
  %s1 = inlined_call_operand.vmem [shape: f32[2,8], index: 1, kind: input, shape index: {}]
  %s2 = inlined_call_operand.vmem [shape: f32[2,128], index: 2, kind: input, shape index: {}]
  %s3 = inlined_call_operand.hbm [shape: bf16[2,128,384], index: 3, kind: input, shape index: {}]
  %s4 = inlined_call_operand.vmem [shape: bf16[2,128,128], index: 4, kind: input, shape index: {}]
  %s5 = inlined_call_operand.vmem [shape: bf16[2,128,256], index: 5, kind: input, shape index: {}]
  %s6 = inlined_call_operand.hbm [shape: bf16[2,256,128], index: 6, kind: input, shape index: {}]
  %s7 = inlined_call_operand.hbm [shape: f32[2,8,384], index: 7, kind: input, shape index: {}]
  %s8 = inlined_call_operand.vmem [shape: bf16[128,128], index: 8, kind: input, shape index: {}]
  %s9 = inlined_call_operand.vmem [shape: f32[3,128], index: 9, kind: input, shape index: {}]
  %s10 = inlined_call_operand.vmem [shape: f32[2,1], index: 10, kind: output, shape index: {}]
  %s11 = sld [smem:[#allocation0]]
  $region93: #{bert_base_uncased_forward.1} parent=0
    _
  %s13 = ssub.s32 1, %s11
  %s14 = scalar_select 0, %s13, %s11
  $region1: #{bert_base_uncased_forward.1} parent=0
    #allocation3 [shape = 'u8[196608]{0}', space=vmem, size = 0x30000, scoped, tag = 'input window, operand 3']
    #allocation4 [shape = 's32[2]{0}', space=sflag, size = 0x8, scoped, tag = 'scoped memory for bert_base_uncased_forward.1']
    #allocation5 [shape = 'u8[131072]{0}', space=vmem, size = 0x20000, scoped, tag = 'input window, operand 6']
    #allocation6 [shape = 's32[2]{0}', space=sflag, size = 0x8, scoped, tag = 'scoped memory for bert_base_uncased_forward.1']
    #allocation7 [shape = 'u8[24576]{0}', space=vmem, size = 0x6000, scoped, tag = 'input window, operand 7']
    %15 = vsyncpa [#allocation4], 0
    %s16 = scalar_lea.sflag [#allocation4], 1
    %17 = vsyncpa %s16, 0
    %18 = vsyncpa [#allocation6], 0
    %s19 = scalar_lea.sflag [#allocation6], 1
    %20 = vsyncpa %s19, 0
    loop: start=0, step=1, limit=4
    $region2: #{bert_base_uncased_forward.1} parent=1 // loop_pre_header
      _
    $region3: #{bert_base_uncased_forward.1} parent=1 // loop_header
      %s22 = sphi 0, %s26
      %p23 = scmp.ge.s32.totalorder %s22, 4
      %s30 = sphi 0, %s30
      %s32 = sphi 0, %s30
      %s33 = sphi 0, %s32
      %s47 = sphi 0, %s33
      %s51 = sphi 0, %s51
      %s53 = sphi 0, %s51
      %s54 = sphi 0, %s53
      %s68 = sphi 0, %s54
      %s72 = sphi 0, %s72
      %s74 = sphi 0, %s72
      %s75 = sphi 0, %s74
      %s89 = sphi 0, %s75
      %s95 = sphi 0, %s97
      %s98 = sphi 0, %s95
      %s99 = sphi 0, %s98
      %s115 = sphi 0, %s99
      %s121 = sphi 0, %s123
      %s124 = sphi 0, %s121
      %s125 = sphi 0, %s124
      %s141 = sphi 0, %s125
      %s147 = sphi 0, %s149
      %s150 = sphi 0, %s147
      %s151 = sphi 0, %s150
      %s167 = sphi 0, %s151
      %s173 = sphi 0, %s175
      %s176 = sphi 0, %s173
      %s177 = sphi 0, %s176
      %s193 = sphi 0, %s177
      %s199 = sphi 0, %s201
      %s202 = sphi 0, %s199
      %s203 = sphi 0, %s202
      %s219 = sphi 0, %s203
      %s223 = sphi 0, %s223
      %s225 = sphi 0, %s223
      %s226 = sphi 0, %s225
      %s240 = sphi 0, %s226
      %s244 = sphi 0, %s244
      %s246 = sphi 0, %s244
      %s247 = sphi 0, %s246
      %s261 = sphi 0, %s247
      %s265 = sphi 0, %s265
      %s267 = sphi 0, %s265
      %s268 = sphi 0, %s267
      %s282 = sphi 0, %s268
    $region4: #{bert_base_uncased_forward.1} parent=1 // loop_header_branch
      %25 = sbr.rel (%p23) target = $region8
    $region5: #{bert_base_uncased_forward.1} parent=1 // loop_body
      %s27 = ssub.s32 %s22, 1
      %s28 = ssub.s32 %s22, 2
      %s29 = sadd.s32 %s22, 1
      %s31 = sadd.s32 %s30, 1
      %p34 = scmp.eq.s32.totalorder %s22, 1
      %p35 = scmp.ne.s32.totalorder %s30, %s32
      %p36 = scmp.eq.s32.totalorder %s22, 0
      %p37 = por %p35, %p36
      %p38 = scmp.ne.s32.totalorder %s30, %s32
      %p39 = scmp.eq.s32.totalorder %s27, 1
      %p40 = por %p38, %p39
      %p41 = scmp.ne.s32.totalorder %s32, %s33
      %p42 = scmp.eq.s32.totalorder %s27, 0
      %p43 = por %p41, %p42
      %p44 = scmp.ne.s32.totalorder %s32, %s33
      %p45 = scmp.eq.s32.totalorder %s28, 1
      %p46 = por %p44, %p45
      %p48 = scmp.ne.s32.totalorder %s33, %s47
      %p49 = scmp.eq.s32.totalorder %s28, 0
      %p50 = por %p48, %p49
      %s52 = sadd.s32 %s51, 1
      %p55 = scmp.eq.s32.totalorder %s22, 1
      %p56 = scmp.ne.s32.totalorder %s51, %s53
      %p57 = scmp.eq.s32.totalorder %s22, 0
      %p58 = por %p56, %p57
      %p59 = scmp.ne.s32.totalorder %s51, %s53
      %p60 = scmp.eq.s32.totalorder %s27, 1
      %p61 = por %p59, %p60
      %p62 = scmp.ne.s32.totalorder %s53, %s54
      %p63 = scmp.eq.s32.totalorder %s27, 0
      %p64 = por %p62, %p63
      %p65 = scmp.ne.s32.totalorder %s53, %s54
      %p66 = scmp.eq.s32.totalorder %s28, 1
      %p67 = por %p65, %p66
      %p69 = scmp.ne.s32.totalorder %s54, %s68
      %p70 = scmp.eq.s32.totalorder %s28, 0
      %p71 = por %p69, %p70
      %s73 = sadd.s32 %s72, 1
      %p76 = scmp.eq.s32.totalorder %s22, 1
      %p77 = scmp.ne.s32.totalorder %s72, %s74
      %p78 = scmp.eq.s32.totalorder %s22, 0
      %p79 = por %p77, %p78
      %p80 = scmp.ne.s32.totalorder %s72, %s74
      %p81 = scmp.eq.s32.totalorder %s27, 1
      %p82 = por %p80, %p81
      %p83 = scmp.ne.s32.totalorder %s74, %s75
      %p84 = scmp.eq.s32.totalorder %s27, 0
      %p85 = por %p83, %p84
      %p86 = scmp.ne.s32.totalorder %s74, %s75
      %p87 = scmp.eq.s32.totalorder %s28, 1
      %p88 = por %p86, %p87
      %p90 = scmp.ne.s32.totalorder %s75, %s89
      %p91 = scmp.eq.s32.totalorder %s28, 0
      %p92 = por %p90, %p91
      %s93 = ssub.s32 %s22, %s29
      %p94 = scmp.eq.s32.totalorder %s93, 0
      %s96 = sadd.s32 %s95, 1
      %s97 = scalar_select %p94, %s95, %s96
      %p100 = pneg %p94
      %p101 = scmp.eq.s32.totalorder %s22, 1
      %p102 = por %p100, %p101
      %p103 = scmp.ne.s32.totalorder %s95, %s98
      %p104 = scmp.eq.s32.totalorder %s22, 0
      %p105 = por %p103, %p104
      %p106 = scmp.ne.s32.totalorder %s95, %s98
      %p107 = scmp.eq.s32.totalorder %s27, 1
      %p108 = por %p106, %p107
      %p109 = scmp.ne.s32.totalorder %s98, %s99
      %p110 = scmp.eq.s32.totalorder %s27, 0
      %p111 = por %p109, %p110
      %p112 = scmp.ne.s32.totalorder %s98, %s99
      %p113 = scmp.eq.s32.totalorder %s28, 1
      %p114 = por %p112, %p113
      %p116 = scmp.ne.s32.totalorder %s99, %s115
      %p117 = scmp.eq.s32.totalorder %s28, 0
      %p118 = por %p116, %p117
      %s119 = ssub.s32 %s22, %s29
      %p120 = scmp.eq.s32.totalorder %s119, 0
      %s122 = sadd.s32 %s121, 1
      %s123 = scalar_select %p120, %s121, %s122
      %p126 = pneg %p120
      %p127 = scmp.eq.s32.totalorder %s22, 1
      %p128 = por %p126, %p127
      %p129 = scmp.ne.s32.totalorder %s121, %s124
      %p130 = scmp.eq.s32.totalorder %s22, 0
      %p131 = por %p129, %p130
      %p132 = scmp.ne.s32.totalorder %s121, %s124
      %p133 = scmp.eq.s32.totalorder %s27, 1
      %p134 = por %p132, %p133
      %p135 = scmp.ne.s32.totalorder %s124, %s125
      %p136 = scmp.eq.s32.totalorder %s27, 0
      %p137 = por %p135, %p136
      %p138 = scmp.ne.s32.totalorder %s124, %s125
      %p139 = scmp.eq.s32.totalorder %s28, 1
      %p140 = por %p138, %p139
      %p142 = scmp.ne.s32.totalorder %s125, %s141
      %p143 = scmp.eq.s32.totalorder %s28, 0
      %p144 = por %p142, %p143
      %s145 = ssub.s32 %s22, %s29
      %p146 = scmp.eq.s32.totalorder %s145, 0
      %s148 = sadd.s32 %s147, 1
      %s149 = scalar_select %p146, %s147, %s148
      %p152 = pneg %p146
      %p153 = scmp.eq.s32.totalorder %s22, 1
      %p154 = por %p152, %p153
      %p155 = scmp.ne.s32.totalorder %s147, %s150
      %p156 = scmp.eq.s32.totalorder %s22, 0
      %p157 = por %p155, %p156
      %p158 = scmp.ne.s32.totalorder %s147, %s150
      %p159 = scmp.eq.s32.totalorder %s27, 1
      %p160 = por %p158, %p159
      %p161 = scmp.ne.s32.totalorder %s150, %s151
      %p162 = scmp.eq.s32.totalorder %s27, 0
      %p163 = por %p161, %p162
      %p164 = scmp.ne.s32.totalorder %s150, %s151
      %p165 = scmp.eq.s32.totalorder %s28, 1
      %p166 = por %p164, %p165
      %p168 = scmp.ne.s32.totalorder %s151, %s167
      %p169 = scmp.eq.s32.totalorder %s28, 0
      %p170 = por %p168, %p169
      %s171 = ssub.s32 %s22, %s29
      %p172 = scmp.eq.s32.totalorder %s171, 0
      %s174 = sadd.s32 %s173, 1
      %s175 = scalar_select %p172, %s173, %s174
      %p178 = pneg %p172
      %p179 = scmp.eq.s32.totalorder %s22, 1
      %p180 = por %p178, %p179
      %p181 = scmp.ne.s32.totalorder %s173, %s176
      %p182 = scmp.eq.s32.totalorder %s22, 0
      %p183 = por %p181, %p182
      %p184 = scmp.ne.s32.totalorder %s173, %s176
      %p185 = scmp.eq.s32.totalorder %s27, 1
      %p186 = por %p184, %p185
      %p187 = scmp.ne.s32.totalorder %s176, %s177
      %p188 = scmp.eq.s32.totalorder %s27, 0
      %p189 = por %p187, %p188
      %p190 = scmp.ne.s32.totalorder %s176, %s177
      %p191 = scmp.eq.s32.totalorder %s28, 1
      %p192 = por %p190, %p191
      %p194 = scmp.ne.s32.totalorder %s177, %s193
      %p195 = scmp.eq.s32.totalorder %s28, 0
      %p196 = por %p194, %p195
      %s197 = ssub.s32 %s22, %s29
      %p198 = scmp.eq.s32.totalorder %s197, 0
      %s200 = sadd.s32 %s199, 1
      %s201 = scalar_select %p198, %s199, %s200
      %p204 = pneg %p198
      %p205 = scmp.eq.s32.totalorder %s22, 1
      %p206 = por %p204, %p205
      %p207 = scmp.ne.s32.totalorder %s199, %s202
      %p208 = scmp.eq.s32.totalorder %s22, 0
      %p209 = por %p207, %p208
      %p210 = scmp.ne.s32.totalorder %s199, %s202
      %p211 = scmp.eq.s32.totalorder %s27, 1
      %p212 = por %p210, %p211
      %p213 = scmp.ne.s32.totalorder %s202, %s203
      %p214 = scmp.eq.s32.totalorder %s27, 0
      %p215 = por %p213, %p214
      %p216 = scmp.ne.s32.totalorder %s202, %s203
      %p217 = scmp.eq.s32.totalorder %s28, 1
      %p218 = por %p216, %p217
      %p220 = scmp.ne.s32.totalorder %s203, %s219
      %p221 = scmp.eq.s32.totalorder %s28, 0
      %p222 = por %p220, %p221
      %s224 = sadd.s32 %s223, 1
      %p227 = scmp.eq.s32.totalorder %s22, 1
      %p228 = scmp.ne.s32.totalorder %s223, %s225
      %p229 = scmp.eq.s32.totalorder %s22, 0
      %p230 = por %p228, %p229
      %p231 = scmp.ne.s32.totalorder %s223, %s225
      %p232 = scmp.eq.s32.totalorder %s27, 1
      %p233 = por %p231, %p232
      %p234 = scmp.ne.s32.totalorder %s225, %s226
      %p235 = scmp.eq.s32.totalorder %s27, 0
      %p236 = por %p234, %p235
      %p237 = scmp.ne.s32.totalorder %s225, %s226
      %p238 = scmp.eq.s32.totalorder %s28, 1
      %p239 = por %p237, %p238
      %p241 = scmp.ne.s32.totalorder %s226, %s240
      %p242 = scmp.eq.s32.totalorder %s28, 0
      %p243 = por %p241, %p242
      %s245 = sadd.s32 %s244, 1
      %p248 = scmp.eq.s32.totalorder %s22, 1
      %p249 = scmp.ne.s32.totalorder %s244, %s246
      %p250 = scmp.eq.s32.totalorder %s22, 0
      %p251 = por %p249, %p250
      %p252 = scmp.ne.s32.totalorder %s244, %s246
      %p253 = scmp.eq.s32.totalorder %s27, 1
      %p254 = por %p252, %p253
      %p255 = scmp.ne.s32.totalorder %s246, %s247
      %p256 = scmp.eq.s32.totalorder %s27, 0
      %p257 = por %p255, %p256
      %p258 = scmp.ne.s32.totalorder %s246, %s247
      %p259 = scmp.eq.s32.totalorder %s28, 1
      %p260 = por %p258, %p259
      %p262 = scmp.ne.s32.totalorder %s247, %s261
      %p263 = scmp.eq.s32.totalorder %s28, 0
      %p264 = por %p262, %p263
      %s266 = sadd.s32 %s265, 1
      %p269 = scmp.eq.s32.totalorder %s22, 1
      %p270 = scmp.ne.s32.totalorder %s265, %s267
      %p271 = scmp.eq.s32.totalorder %s22, 0
      %p272 = por %p270, %p271
      %p273 = scmp.ne.s32.totalorder %s265, %s267
      %p274 = scmp.eq.s32.totalorder %s27, 1
      %p275 = por %p273, %p274
      %p276 = scmp.ne.s32.totalorder %s267, %s268
      %p277 = scmp.eq.s32.totalorder %s27, 0
      %p278 = por %p276, %p277
      %p279 = scmp.ne.s32.totalorder %s267, %s268
      %p280 = scmp.eq.s32.totalorder %s28, 1
      %p281 = por %p279, %p280
      %p283 = scmp.ne.s32.totalorder %s268, %s282
      %p284 = scmp.eq.s32.totalorder %s28, 0
      %p285 = por %p283, %p284
      %p286 = scmp.le.s32.totalorder 1, %s22
      %p287 = scmp.lt.s32.totalorder %s22, 3
      %p288 = pnand %p286, %p287
      %p289 = pneg %p288
      // Predicated region
      $region9: #{bert_base_uncased_forward.1} parent=5 // pred_check
        _
      $region10: #{bert_base_uncased_forward.1} parent=5 // pred_check_branch
        %291 = sbr.rel (%p288) target = $region12
      $region11: #{bert_base_uncased_forward.1} parent=5 // pred_region
        %s292 = ssub.s32 %s22, 1
        // Predicated region
        $region13: #{bert_base_uncased_forward.1} parent=11 // pred_check
          %p293 = pneg %p43
        $region14: #{bert_base_uncased_forward.1} parent=11 // pred_check_branch
          %295 = sbr.rel (%p293) target = $region16
        $region15: #{bert_base_uncased_forward.1} parent=11 // pred_region
          _
        $region16: #{bert_base_uncased_forward.1} parent=11 // pred_fallthru
          _
        // Predicated region
        $region17: #{bert_base_uncased_forward.1} parent=11 // pred_check
          %p296 = pneg %p64
        $region18: #{bert_base_uncased_forward.1} parent=11 // pred_check_branch
          %298 = sbr.rel (%p296) target = $region20
        $region19: #{bert_base_uncased_forward.1} parent=11 // pred_region
          _
        $region20: #{bert_base_uncased_forward.1} parent=11 // pred_fallthru
          _
        // Predicated region
        $region21: #{bert_base_uncased_forward.1} parent=11 // pred_check
          %p299 = pneg %p85
        $region22: #{bert_base_uncased_forward.1} parent=11 // pred_check_branch
          %301 = sbr.rel (%p299) target = $region24
        $region23: #{bert_base_uncased_forward.1} parent=11 // pred_region
          _
        $region24: #{bert_base_uncased_forward.1} parent=11 // pred_fallthru
          _
        // Predicated region
        $region25: #{bert_base_uncased_forward.1} parent=11 // pred_check
          %p302 = pneg %p236
        $region26: #{bert_base_uncased_forward.1} parent=11 // pred_check_branch
          %304 = sbr.rel (%p302) target = $region28
        $region27: #{bert_base_uncased_forward.1} parent=11 // pred_region
          _
        $region28: #{bert_base_uncased_forward.1} parent=11 // pred_fallthru
          _
        // Predicated region
        $region29: #{bert_base_uncased_forward.1} parent=11 // pred_check
          %p305 = pneg %p257
        $region30: #{bert_base_uncased_forward.1} parent=11 // pred_check_branch
          %307 = sbr.rel (%p305) target = $region32
        $region31: #{bert_base_uncased_forward.1} parent=11 // pred_region
          _
        $region32: #{bert_base_uncased_forward.1} parent=11 // pred_fallthru
          _
      $region12: #{bert_base_uncased_forward.1} parent=5 // pred_fallthru
        _
      %p308 = scmp.lt.s32.totalorder %s22, 2
      // Predicated region
      $region33: #{bert_base_uncased_forward.1} parent=5 // pred_check
        %p309 = pneg %p308
      $region34: #{bert_base_uncased_forward.1} parent=5 // pred_check_branch
        %311 = sbr.rel (%p309) target = $region36
      $region35: #{bert_base_uncased_forward.1} parent=5 // pred_region
        // Predicated region
        $region37: #{bert_base_uncased_forward.1} parent=35 // pred_check
          %p312 = pneg %p105
        $region38: #{bert_base_uncased_forward.1} parent=35 // pred_check_branch
          %314 = sbr.rel (%p312) target = $region40
        $region39: #{bert_base_uncased_forward.1} parent=35 // pred_region
          %s315 = sand.u32 %s95, 1
          %s316 = scalar_lea.sflag [#allocation4], %s315
          %s317 = sand.u32 %s95, 1
          %s318 = smul.addr %s317, 192
          %s319 = scalar_lea.vmem [#allocation3], %s318
          %s321 = ssub.s32 3072, 3072
          %322 = vsyncadd %s316, %s321
          %s323 = smul.addr %s22, 48
          %s324 = smul.addr %s323, 64
          %s325 = scalar_lea.hbm %s3, %s324
          %s326 = sshll.u32 %s319, 4
          %s327 = int_to_ptr.vmem [resolvable:$true] %s326
          %332 = dma.hbm_to_vmem [thread:$0]  %s325, 3072, %s327, %s316, 192, 192, 12
        $region40: #{bert_base_uncased_forward.1} parent=35 // pred_fallthru
          _
        // Predicated region
        $region41: #{bert_base_uncased_forward.1} parent=35 // pred_check
          %p333 = pneg %p131
        $region42: #{bert_base_uncased_forward.1} parent=35 // pred_check_branch
          %335 = sbr.rel (%p333) target = $region44
        $region43: #{bert_base_uncased_forward.1} parent=35 // pred_region
          %p336 = scmp.lt.s32.totalorder %s22, 1
          %s337 = scalar_select %p336, %s22, 1
          %s338 = smul.addr %s337, 16
          %s339 = smul.addr %s338, 4
          %s340 = scalar_lea.vmem %s4, %s339
        $region44: #{bert_base_uncased_forward.1} parent=35 // pred_fallthru
          _
        // Predicated region
        $region45: #{bert_base_uncased_forward.1} parent=35 // pred_check
          %p341 = pneg %p157
        $region46: #{bert_base_uncased_forward.1} parent=35 // pred_check_branch
          %343 = sbr.rel (%p341) target = $region48
        $region47: #{bert_base_uncased_forward.1} parent=35 // pred_region
          %p344 = scmp.lt.s32.totalorder %s22, 1
          %s345 = scalar_select %p344, %s22, 1
          %s346 = smul.addr %s345, 32
          %s347 = smul.addr %s346, 4
          %s348 = scalar_lea.vmem %s5, %s347
        $region48: #{bert_base_uncased_forward.1} parent=35 // pred_fallthru
          _
        // Predicated region
        $region49: #{bert_base_uncased_forward.1} parent=35 // pred_check
          %p349 = pneg %p183
        $region50: #{bert_base_uncased_forward.1} parent=35 // pred_check_branch
          %351 = sbr.rel (%p349) target = $region52
        $region51: #{bert_base_uncased_forward.1} parent=35 // pred_region
          %s352 = sand.u32 %s22, 1
          %s353 = scalar_lea.sflag [#allocation6], %s352
          %s354 = sand.u32 %s173, 1
          %s355 = smul.addr %s354, 128
          %s356 = scalar_lea.vmem [#allocation5], %s355
          %s358 = ssub.s32 2048, 2048
          %359 = vsyncadd %s353, %s358
          %s360 = smul.addr %s22, 32
          %s361 = smul.addr %s360, 64
          %s362 = scalar_lea.hbm %s6, %s361
          %s363 = sshll.u32 %s356, 4
          %s364 = int_to_ptr.vmem [resolvable:$true] %s363
          %369 = dma.hbm_to_vmem [thread:$0]  %s362, 2048, %s364, %s353, 64, 64, 4
        $region52: #{bert_base_uncased_forward.1} parent=35 // pred_fallthru
          _
        // Predicated region
        $region53: #{bert_base_uncased_forward.1} parent=35 // pred_check
          %p370 = pneg %p209
        $region54: #{bert_base_uncased_forward.1} parent=35 // pred_check_branch
          %372 = sbr.rel (%p370) target = $region56
        $region55: #{bert_base_uncased_forward.1} parent=35 // pred_region
          %s373 = sand.u32 %s22, 1
          %s374 = scalar_lea.sflag [#allocation6], %s373
          %s375 = sand.u32 %s199, 1
          %s376 = smul.addr %s375, 24
          %s377 = scalar_lea.vmem [#allocation7], %s376
          %s379 = ssub.s32 384, 384
          %380 = vsyncadd %s374, %s379
          %s381 = smul.addr %s22, 3
          %s382 = smul.addr %s381, 128
          %s383 = scalar_lea.hbm %s7, %s382
          %s385 = sshll.u32 %s377, 4
          %s386 = int_to_ptr.vmem [resolvable:$true] %s385
          %388 = dma.hbm_to_vmem [thread:$0]  %s383, 384, %s386, %s374
        $region56: #{bert_base_uncased_forward.1} parent=35 // pred_fallthru
          _
      $region36: #{bert_base_uncased_forward.1} parent=5 // pred_fallthru
        _
      %p389 = scmp.le.s32.totalorder 1, %s22
      %p390 = scmp.lt.s32.totalorder %s22, 3
      %p391 = pnand %p389, %p390
      %p392 = pneg %p391
      // Predicated region
      $region57: #{bert_base_uncased_forward.1} parent=5 // pred_check
        _
      $region58: #{bert_base_uncased_forward.1} parent=5 // pred_check_branch
        %394 = sbr.rel (%p391) target = $region60
      $region59: #{bert_base_uncased_forward.1} parent=5 // pred_region
        %s395 = ssub.s32 %s22, 1
        %s396 = sand.u32 %s98, 1
        %s397 = scalar_lea.sflag [#allocation4], %s396
        %s398 = sand.u32 %s98, 1
        %s399 = smul.addr %s398, 192
        %s400 = scalar_lea.vmem [#allocation3], %s399
        // Predicated region
        $region61: #{bert_base_uncased_forward.1} parent=59 // pred_check
          %p401 = pneg %p111
        $region62: #{bert_base_uncased_forward.1} parent=59 // pred_check_branch
          %403 = sbr.rel (%p401) target = $region64
        $region63: #{bert_base_uncased_forward.1} parent=59 // pred_region
          %404 = dma.done %s397, 3072
        $region64: #{bert_base_uncased_forward.1} parent=59 // pred_fallthru
          _
        %s405 = sand.u32 %s27, 1
        %s406 = scalar_lea.sflag [#allocation6], %s405
        %s407 = sand.u32 %s176, 1
        %s408 = smul.addr %s407, 128
        %s409 = scalar_lea.vmem [#allocation5], %s408
        // Predicated region
        $region65: #{bert_base_uncased_forward.1} parent=59 // pred_check
          %p410 = pneg %p189
        $region66: #{bert_base_uncased_forward.1} parent=59 // pred_check_branch
          %412 = sbr.rel (%p410) target = $region68
        $region67: #{bert_base_uncased_forward.1} parent=59 // pred_region
          %413 = dma.done %s406, 2048
        $region68: #{bert_base_uncased_forward.1} parent=59 // pred_fallthru
          _
        %s414 = sand.u32 %s27, 1
        %s415 = scalar_lea.sflag [#allocation6], %s414
        %s416 = sand.u32 %s202, 1
        %s417 = smul.addr %s416, 24
        %s418 = scalar_lea.vmem [#allocation7], %s417
        // Predicated region
        $region69: #{bert_base_uncased_forward.1} parent=59 // pred_check
          %p419 = pneg %p215
        $region70: #{bert_base_uncased_forward.1} parent=59 // pred_check_branch
          %421 = sbr.rel (%p419) target = $region72
        $region71: #{bert_base_uncased_forward.1} parent=59 // pred_region
          %422 = dma.done %s415, 384
        $region72: #{bert_base_uncased_forward.1} parent=59 // pred_fallthru
          _
        %p423 = pneg %p43
        %p424 = pneg %p40
        %p425 = pneg %p64
        %p426 = pneg %p61
        %p427 = pneg %p85
        %p428 = pneg %p82
        %s429 = sand.u32 %s98, 1
        %s430 = scalar_lea.sflag [#allocation4], %s429
        %s431 = sand.u32 %s98, 1
        %s432 = smul.addr %s431, 192
        %s433 = scalar_lea.vmem [#allocation3], %s432
        %p434 = pneg %p111
        %p435 = pneg %p108
        %p436 = scmp.lt.s32.totalorder %s27, 1
        %s437 = scalar_select %p436, %s27, 1
        %s438 = smul.addr %s437, 16
        %s439 = smul.addr %s438, 4
        %s440 = scalar_lea.vmem %s4, %s439
        %p441 = pneg %p137
        %p442 = pneg %p134
        %p443 = scmp.lt.s32.totalorder %s27, 1
        %s444 = scalar_select %p443, %s27, 1
        %s445 = smul.addr %s444, 32
        %s446 = smul.addr %s445, 4
        %s447 = scalar_lea.vmem %s5, %s446
        %p448 = pneg %p163
        %p449 = pneg %p160
        %s450 = sand.u32 %s27, 1
        %s451 = scalar_lea.sflag [#allocation6], %s450
        %s452 = sand.u32 %s176, 1
        %s453 = smul.addr %s452, 128
        %s454 = scalar_lea.vmem [#allocation5], %s453
        %p455 = pneg %p189
        %p456 = pneg %p186
        %s457 = sand.u32 %s27, 1
        %s458 = scalar_lea.sflag [#allocation6], %s457
        %s459 = sand.u32 %s202, 1
        %s460 = smul.addr %s459, 24
        %s461 = scalar_lea.vmem [#allocation7], %s460
        %p462 = pneg %p215
        %p463 = pneg %p212
        %p464 = pneg %p236
        %p465 = pneg %p233
        %p466 = pneg %p257
        %p467 = pneg %p254
        %p468 = pneg %p278
        %p469 = pneg %p275
        %p470 = scmp.lt.s32.totalorder %s27, 1
        %s471 = scalar_select %p470, %s27, 1
        %s472 = smul.addr %s471, 16
        %s473 = smul.addr %s472, 4
        %s474 = scalar_lea.vmem %s4, %s473
        %p475 = scmp.lt.s32.totalorder %s27, 1
        %s476 = scalar_select %p475, %s27, 1
        %s477 = smul.addr %s476, 32
        %s478 = smul.addr %s477, 4
        %s479 = scalar_lea.vmem %s5, %s478
        %p481 = scmp.eq.s32.totalorder %s27, 0
        // Predicated region
        $region73: #{bert_base_uncased_forward.1} parent=59 // pred_check
          %p482 = pneg %p481
        $region74: #{bert_base_uncased_forward.1} parent=59 // pred_check_branch
          %484 = sbr.rel (%p482) target = $region76
        $region75: #{bert_base_uncased_forward.1} parent=59 // pred_region
          %v485 = vld [vmem:[%s0] sm:$0xff]
          %v486 = vld [vmem:[%s0 + $0x8] sm:$0xff]
          %v487 = vld [vmem:[%s2] sm:$0x1]
          %v488 = vld [vmem:[%s2 + $0x1] sm:$0x1]
          %489 = vadd.xlane.f32.xlu0 %v485
          %v490 = vpop.xlane.xlu0 %489
          %491 = vadd.xlane.f32.xlu0 %v486
          %v492 = vpop.xlane.xlu0 %491
          %v493 = vrcp.pop 128.0
          %v494 = vmul.f32 %v490, %v493
          %v495 = vmul.f32 %v492, %v493
          %v496 = vsub.f32 %v485, %v494
          %v497 = vsub.f32 %v486, %v495
          %v498 = vmul.f32 %v496, %v496
          %v499 = vmul.f32 %v497, %v497
          %500 = vadd.xlane.f32.xlu0 %v498
          %v501 = vpop.xlane.xlu0 %500
          %502 = vadd.xlane.f32.xlu0 %v499
          %v503 = vpop.xlane.xlu0 %502
          %v504 = vmul.f32 %v501, %v493
          %v505 = vmul.f32 %v503, %v493
          %v506 = vadd.f32 %v504, 1e-12
          %v507 = vadd.f32 %v505, 1e-12
          %v508 = vrsqrt.pop %v506
          %v509 = vrsqrt.pop %v507
          %v510 = vmul.f32 %v496, %v508
          %v511 = vmul.f32 %v497, %v509
          %v512 = vlaneseq
          %v513 = vshrl.u32 %v512, 7
          %v514 = vsub.s32 0, %v513
          %v515 = vrot.slane %v487, %v514
          %v516 = vmul.f32 %v510, %v515
          %v517 = vmul.f32 %v511, %v515
          %v518 = vlaneseq
          %v519 = vshrl.u32 %v518, 7
          %v520 = vsub.s32 0, %v519
          %v521 = vrot.slane %v488, %v520
          %v522 = vadd.f32 %v516, %v521
          %v523 = vadd.f32 %v517, %v521
          %524 = vst [vmem:[#allocation2] sm:$0xff] %v522
          %525 = vst [vmem:[#allocation2 + $0x8] sm:$0xff] %v523
        $region76: #{bert_base_uncased_forward.1} parent=59 // pred_fallthru
          _
        %v526 = vld [vmem:[#allocation2] sm:$0xff]
        %v527 = vld [vmem:[#allocation2 + $0x8] sm:$0xff]
        %v528 = vpack.c.bf16 %v527, %v526
        %v529 = vld [vmem:[%s418] sm:$0xff]
        %v530 = vld [vmem:[%s418 + $0x8] sm:$0xff]
        %v531 = vld [vmem:[%s418 + $0x10] sm:$0xff]
        %v532 = vld [vmem:[%s400] sm:$0xff]
        %v533 = vld [vmem:[%s400 + $0x8] sm:$0xf]
        %v534 = vld [vmem:[%s400 + $0xc] sm:$0xff]
        %v535 = vld [vmem:[%s400 + $0x14] sm:$0xf]
        %v536 = vld [vmem:[%s400 + $0x18] sm:$0xff]
        %v537 = vld [vmem:[%s400 + $0x20] sm:$0xf]
        %v538 = vld [vmem:[%s400 + $0x24] sm:$0xff]
        %v539 = vld [vmem:[%s400 + $0x2c] sm:$0xf]
        %v540 = vld [vmem:[%s400 + $0x30] sm:$0xff]
        %v541 = vld [vmem:[%s400 + $0x38] sm:$0xf]
        %v542 = vld [vmem:[%s400 + $0x3c] sm:$0xff]
        %v543 = vld [vmem:[%s400 + $0x44] sm:$0xf]
        %v544 = vld [vmem:[%s400 + $0x48] sm:$0xff]
        %v545 = vld [vmem:[%s400 + $0x50] sm:$0xf]
        %v546 = vld [vmem:[%s400 + $0x54] sm:$0xff]
        %v547 = vld [vmem:[%s400 + $0x5c] sm:$0xf]
        %v548 = vld [vmem:[%s400 + $0x60] sm:$0xff]
        %v549 = vld [vmem:[%s400 + $0x68] sm:$0xf]
        %v550 = vld [vmem:[%s400 + $0x6c] sm:$0xff]
        %v551 = vld [vmem:[%s400 + $0x74] sm:$0xf]
        %v552 = vld [vmem:[%s400 + $0x78] sm:$0xff]
        %v553 = vld [vmem:[%s400 + $0x80] sm:$0xf]
        %v554 = vld [vmem:[%s400 + $0x84] sm:$0xff]
        %v555 = vld [vmem:[%s400 + $0x8c] sm:$0xf]
        %v556 = vld [vmem:[%s400 + $0x90] sm:$0xff]
        %v557 = vld [vmem:[%s400 + $0x98] sm:$0xf]
        %v558 = vld [vmem:[%s400 + $0x9c] sm:$0xff]
        %v559 = vld [vmem:[%s400 + $0xa4] sm:$0xf]
        %v560 = vld [vmem:[%s400 + $0xa8] sm:$0xff]
        %v561 = vld [vmem:[%s400 + $0xb0] sm:$0xf]
        %v562 = vld [vmem:[%s400 + $0xb4] sm:$0xff]
        %v563 = vld [vmem:[%s400 + $0xbc] sm:$0xf]
        %v564 = vlaneseq
        %v565 = vshrl.u32 %v564, 7
        %v566 = vsub.s32 0, %v565
        %v567 = vrot.slane %v529, %v566
        %v568 = vlaneseq
        %v569 = vshrl.u32 %v568, 7
        %v570 = vsub.s32 0, %v569
        %v571 = vrot.slane %v530, %v570
        %v572 = vlaneseq
        %v573 = vshrl.u32 %v572, 7
        %v574 = vsub.s32 0, %v573
        %v575 = vrot.slane %v531, %v574
        %v608 = vunpack.c.l.b16 %v532
        %v609 = vunpack.c.h.b16 %v532
        %v610 = vunpack.c.l.b16 %v533
        %v611 = vunpack.c.l.b16 %v534
        %v612 = vunpack.c.h.b16 %v534
        %v613 = vunpack.c.l.b16 %v535
        %v614 = vunpack.c.l.b16 %v536
        %v615 = vunpack.c.h.b16 %v536
        %v616 = vunpack.c.l.b16 %v537
        %v617 = vunpack.c.l.b16 %v538
        %v618 = vunpack.c.h.b16 %v538
        %v619 = vunpack.c.l.b16 %v539
        %v620 = vunpack.c.l.b16 %v540
        %v621 = vunpack.c.h.b16 %v540
        %v622 = vunpack.c.l.b16 %v541
        %v623 = vunpack.c.l.b16 %v542
        %v624 = vunpack.c.h.b16 %v542
        %v625 = vunpack.c.l.b16 %v543
        %v626 = vunpack.c.l.b16 %v544
        %v627 = vunpack.c.h.b16 %v544
        %v628 = vunpack.c.l.b16 %v545
        %v629 = vunpack.c.l.b16 %v546
        %v630 = vunpack.c.h.b16 %v546
        %v631 = vunpack.c.l.b16 %v547
        %v632 = vunpack.c.l.b16 %v548
        %v633 = vunpack.c.h.b16 %v548
        %v634 = vunpack.c.l.b16 %v549
        %v635 = vunpack.c.l.b16 %v550
        %v636 = vunpack.c.h.b16 %v550
        %v637 = vunpack.c.l.b16 %v551
        %v638 = vunpack.c.l.b16 %v552
        %v639 = vunpack.c.h.b16 %v552
        %v640 = vunpack.c.l.b16 %v553
        %v641 = vunpack.c.l.b16 %v554
        %v642 = vunpack.c.h.b16 %v554
        %v643 = vunpack.c.l.b16 %v555
        %v644 = vunpack.c.l.b16 %v556
        %v645 = vunpack.c.h.b16 %v556
        %v646 = vunpack.c.l.b16 %v557
        %v647 = vunpack.c.l.b16 %v558
        %v648 = vunpack.c.h.b16 %v558
        %v649 = vunpack.c.l.b16 %v559
        %v650 = vunpack.c.l.b16 %v560
        %v651 = vunpack.c.h.b16 %v560
        %v652 = vunpack.c.l.b16 %v561
        %v653 = vunpack.c.l.b16 %v562
        %v654 = vunpack.c.h.b16 %v562
        %v655 = vunpack.c.l.b16 %v563
        %v656 = vpack.c.b16 %v611, %v608
        %v657 = vpack.c.b16 %v612, %v609
        %v658 = vpack.c.b16 %v613, %v610
        %v659 = vpack.c.b16 %v617, %v614
        %v660 = vpack.c.b16 %v618, %v615
        %v661 = vpack.c.b16 %v619, %v616
        %v662 = vpack.c.b16 %v623, %v620
        %v663 = vpack.c.b16 %v624, %v621
        %v664 = vpack.c.b16 %v625, %v622
        %v665 = vpack.c.b16 %v629, %v626
        %v666 = vpack.c.b16 %v630, %v627
        %v667 = vpack.c.b16 %v631, %v628
        %v668 = vpack.c.b16 %v635, %v632
        %v669 = vpack.c.b16 %v636, %v633
        %v670 = vpack.c.b16 %v637, %v634
        %v671 = vpack.c.b16 %v641, %v638
        %v672 = vpack.c.b16 %v642, %v639
        %v673 = vpack.c.b16 %v643, %v640
        %v674 = vpack.c.b16 %v647, %v644
        %v675 = vpack.c.b16 %v648, %v645
        %v676 = vpack.c.b16 %v649, %v646
        %v677 = vpack.c.b16 %v653, %v650
        %v678 = vpack.c.b16 %v654, %v651
        %v679 = vpack.c.b16 %v655, %v652
        %704 = vmatprep.subr.bf16.mxu0 %v657
        %705 = vmatpush1.bf16.msra.mxu0 %v656
        %706 = vmatprep.subr.bf16.mxu0 %v660
        %707 = vmatpush1.bf16.msra.mxu0 %v659
        %708 = vmatprep.subr.bf16.mxu0 %v663
        %709 = vmatpush1.bf16.msra.mxu0 %v662
        %710 = vmatprep.subr.bf16.mxu0 %v666
        %711 = vmatpush1.bf16.msra.mxu0 %v665
        %712 = vmatprep.subr.bf16.mxu0 %v669
        %713 = vmatpush1.bf16.msra.mxu0 %v668
        %714 = vmatprep.subr.bf16.mxu0 %v672
        %715 = vmatpush1.bf16.msra.mxu0 %v671
        %716 = vmatprep.subr.bf16.mxu0 %v675
        %717 = vmatpush1.bf16.msra.mxu0 %v674
        %718 = vmatprep.subr.bf16.mxu0 %v678
        %719 = vmatpush1.bf16.msra.mxu0 %v677
        %720 = vmatprep.subr.bf16.mxu0 0
        %721 = vmatpush1.bf16.msra.mxu0 0
        %722 = vmatprep.subr.bf16.mxu0 0
        %723 = vmatpush1.bf16.msra.mxu0 0
        %724 = vmatprep.subr.bf16.mxu0 0
        %725 = vmatpush1.bf16.msra.mxu0 0
        %726 = vmatprep.subr.bf16.mxu0 0
        %727 = vmatpush1.bf16.msra.mxu0 0
        %728 = vmatprep.subr.bf16.mxu0 0
        %729 = vmatpush1.bf16.msra.mxu0 0
        %730 = vmatprep.subr.bf16.mxu0 0
        %731 = vmatpush1.bf16.msra.mxu0 0
        %732 = vmatprep.subr.bf16.mxu0 0
        %733 = vmatpush1.bf16.msra.mxu0 0
        %734 = vmatprep.subr.bf16.mxu0 0
        %735 = vmatpush1.bf16.msra.mxu0 0
        %736 = vmatprep.mubr.bf16.mxu0 0
        %737 = vmatmul.mubr.bf16.gmra.mrb[0].mxu0 %v528
        %v738 = vpop.f32.mrb[0].mxu0
        %v739 = vadd.f32 %v567, %v738
        %v740 = vpop.f32.mrb[0].mxu0
        %v741 = vadd.f32 %v571, %v740
        %v742 = vpop.f32.mrb[0].mxu0
        %v743 = vadd.f32 %v567, %v742
        %v744 = vpop.f32.mrb[0].mxu0
        %v745 = vadd.f32 %v571, %v744
        %746 = vdwg.mxu0
        %747 = vmatprep.subr.bf16.mxu0 0
        %748 = vmatpush1.bf16.msra.mxu0 %v658
        %749 = vmatprep.subr.bf16.mxu0 0
        %750 = vmatpush1.bf16.msra.mxu0 %v661
        %751 = vmatprep.subr.bf16.mxu0 0
        %752 = vmatpush1.bf16.msra.mxu0 %v664
        %753 = vmatprep.subr.bf16.mxu0 0
        %754 = vmatpush1.bf16.msra.mxu0 %v667
        %755 = vmatprep.subr.bf16.mxu0 0
        %756 = vmatpush1.bf16.msra.mxu0 %v670
        %757 = vmatprep.subr.bf16.mxu0 0
        %758 = vmatpush1.bf16.msra.mxu0 %v673
        %759 = vmatprep.subr.bf16.mxu0 0
        %760 = vmatpush1.bf16.msra.mxu0 %v676
        %761 = vmatprep.subr.bf16.mxu0 0
        %762 = vmatpush1.bf16.msra.mxu0 %v679
        %763 = vmatprep.subr.bf16.mxu0 0
        %764 = vmatpush1.bf16.msra.mxu0 0
        %765 = vmatprep.subr.bf16.mxu0 0
        %766 = vmatpush1.bf16.msra.mxu0 0
        %767 = vmatprep.subr.bf16.mxu0 0
        %768 = vmatpush1.bf16.msra.mxu0 0
        %769 = vmatprep.subr.bf16.mxu0 0
        %770 = vmatpush1.bf16.msra.mxu0 0
        %771 = vmatprep.subr.bf16.mxu0 0
        %772 = vmatpush1.bf16.msra.mxu0 0
        %773 = vmatprep.subr.bf16.mxu0 0
        %774 = vmatpush1.bf16.msra.mxu0 0
        %775 = vmatprep.subr.bf16.mxu0 0
        %776 = vmatpush1.bf16.msra.mxu0 0
        %777 = vmatprep.subr.bf16.mxu0 0
        %778 = vmatpush1.bf16.msra.mxu0 0
        %779 = vmatprep.mubr.bf16.mxu0 0
        %780 = vmatmul.mubr.bf16.gmra.mrb[0].mxu0 %v528
        %v781 = vpop.f32.mrb[0].mxu0
        %v782 = vadd.f32 %v575, %v781
        %v783 = vpop.f32.mrb[0].mxu0
        %v784 = vpop.f32.mrb[0].mxu0
        %v785 = vadd.f32 %v575, %v784
        %v786 = vpop.f32.mrb[0].mxu0
        %787 = vdwg.mxu0
        %v788 = vpack.c.bf16 %v739, %v739
        %v789 = vpack.c.bf16 %v741, %v741
        %v790 = vpack.c.bf16 %v782, %v782
        %vm791 = vcmask 261120
        %v793 = vsel %vm791, %v788, 0
        %v796 = vsel %vm791, %v789, 0
        %798 = vmatprep.subr.bf16.mxu0 0
        %799 = vmatpush1.bf16.xpose.msra.mxu0 %v796
        %800 = vmatprep.subr.bf16.mxu0 0
        %801 = vmatpush1.bf16.xpose.msra.mxu0 0
        %802 = vmatprep.subr.bf16.mxu0 0
        %803 = vmatpush1.bf16.xpose.msra.mxu0 0
        %804 = vmatprep.subr.bf16.mxu0 0
        %805 = vmatpush1.bf16.xpose.msra.mxu0 0
        %806 = vmatprep.subr.bf16.mxu0 0
        %807 = vmatpush1.bf16.xpose.msra.mxu0 0
        %808 = vmatprep.subr.bf16.mxu0 0
        %809 = vmatpush1.bf16.xpose.msra.mxu0 0
        %810 = vmatprep.subr.bf16.mxu0 0
        %811 = vmatpush1.bf16.xpose.msra.mxu0 0
        %812 = vmatprep.subr.bf16.mxu0 0
        %813 = vmatpush1.bf16.xpose.msra.mxu0 0
        %814 = vmatprep.subr.bf16.mxu0 0
        %815 = vmatpush1.bf16.xpose.msra.mxu0 0
        %816 = vmatprep.subr.bf16.mxu0 0
        %817 = vmatpush1.bf16.xpose.msra.mxu0 0
        %818 = vmatprep.subr.bf16.mxu0 0
        %819 = vmatpush1.bf16.xpose.msra.mxu0 0
        %820 = vmatprep.subr.bf16.mxu0 0
        %821 = vmatpush1.bf16.xpose.msra.mxu0 0
        %822 = vmatprep.subr.bf16.mxu0 0
        %823 = vmatpush1.bf16.xpose.msra.mxu0 0
        %824 = vmatprep.subr.bf16.mxu0 0
        %825 = vmatpush1.bf16.xpose.msra.mxu0 0
        %826 = vmatprep.subr.bf16.mxu0 0
        %827 = vmatpush1.bf16.xpose.msra.mxu0 0
        %828 = vmatprep.subr.bf16.mxu0 0
        %829 = vmatpush1.bf16.xpose.msra.mxu0 0
        %830 = vmatprep.mubr.bf16.mxu0 0
        %831 = vmatmul.mubr.bf16.gmra.mrb[0].mxu0 %v793
        %v832 = vpop.f32.mrb[0].mxu0
        %v833 = vadd.f32 0.0, %v832
        %v834 = vpop.f32.mrb[0].mxu0
        %v835 = vpop.f32.mrb[0].mxu0
        %v836 = vpop.f32.mrb[0].mxu0
        %837 = vdwg.mxu0
        %v838 = vmul.f32 %v833, 0.17677669
        %v839 = vld [vmem:[%s1] sm:$0x1]
        %v840 = vlaneseq
        %v841 = vshrl.u32 %v840, 7
        %v842 = vsub.s32 0, %v841
        %v843 = vrot.slane %v839, %v842
        %v844 = vadd.f32 %v838, %v843
        %vm845 = vcmask 64512
        %v846 = vsel %vm845, %v844, -inf
        %847 = vmax.xlane.f32.xlu0 %v846
        %v848 = vpop.xlane.xlu0 %847
        %v849 = vsub.f32 %v844, %v848
        %v850 = vmul.f32 %v849, 1.442695
        %v851 = vpow.pop %v850
        %v852 = vsel %vm845, %v851, 0.0
        %853 = vadd.xlane.f32.xlu0 %v852
        %v854 = vpop.xlane.xlu0 %853
        %v855 = vrcp.pop %v854
        %v856 = vmul.f32 %v851, %v855
        %v857 = vpack.c.bf16 %v856, %v856
        %v859 = vsel %vm845, %v857, 0
        %vm861 = vcmask 1043456
        %v863 = vsel %vm861, %v790, 0
        %865 = vmatprep.subr.bf16.mxu0 0
        %866 = vmatpush1.bf16.msra.mxu0 %v863
        %867 = vmatprep.subr.bf16.mxu0 0
        %868 = vmatpush1.bf16.msra.mxu0 0
        %869 = vmatprep.subr.bf16.mxu0 0
        %870 = vmatpush1.bf16.msra.mxu0 0
        %871 = vmatprep.subr.bf16.mxu0 0
        %872 = vmatpush1.bf16.msra.mxu0 0
        %873 = vmatprep.subr.bf16.mxu0 0
        %874 = vmatpush1.bf16.msra.mxu0 0
        %875 = vmatprep.subr.bf16.mxu0 0
        %876 = vmatpush1.bf16.msra.mxu0 0
        %877 = vmatprep.subr.bf16.mxu0 0
        %878 = vmatpush1.bf16.msra.mxu0 0
        %879 = vmatprep.subr.bf16.mxu0 0
        %880 = vmatpush1.bf16.msra.mxu0 0
        %881 = vmatprep.subr.bf16.mxu0 0
        %882 = vmatpush1.bf16.msra.mxu0 0
        %883 = vmatprep.subr.bf16.mxu0 0
        %884 = vmatpush1.bf16.msra.mxu0 0
        %885 = vmatprep.subr.bf16.mxu0 0
        %886 = vmatpush1.bf16.msra.mxu0 0
        %887 = vmatprep.subr.bf16.mxu0 0
        %888 = vmatpush1.bf16.msra.mxu0 0
        %889 = vmatprep.subr.bf16.mxu0 0
        %890 = vmatpush1.bf16.msra.mxu0 0
        %891 = vmatprep.subr.bf16.mxu0 0
        %892 = vmatpush1.bf16.msra.mxu0 0
        %893 = vmatprep.subr.bf16.mxu0 0
        %894 = vmatpush1.bf16.msra.mxu0 0
        %895 = vmatprep.subr.bf16.mxu0 0
        %896 = vmatpush1.bf16.msra.mxu0 0
        %897 = vmatprep.mubr.bf16.mxu0 0
        %898 = vmatmul.mubr.bf16.gmra.mrb[0].mxu0 %v859
        %v899 = vpop.f32.mrb[0].mxu0
        %v900 = vadd.f32 0.0, %v899
        %v901 = vpop.f32.mrb[0].mxu0
        %v902 = vpop.f32.mrb[0].mxu0
        %v903 = vpop.f32.mrb[0].mxu0
        %904 = vdwg.mxu0
        %v905 = vpack.c.bf16 %v743, %v743
        %v906 = vpack.c.bf16 %v745, %v745
        %v907 = vpack.c.bf16 %v785, %v785
        %v909 = vsel %vm791, %v905, 0
        %v912 = vsel %vm791, %v906, 0
        %914 = vmatprep.subr.bf16.mxu0 0
        %915 = vmatpush1.bf16.xpose.msra.mxu0 %v912
        %916 = vmatprep.subr.bf16.mxu0 0
        %917 = vmatpush1.bf16.xpose.msra.mxu0 0
        %918 = vmatprep.subr.bf16.mxu0 0
        %919 = vmatpush1.bf16.xpose.msra.mxu0 0
        %920 = vmatprep.subr.bf16.mxu0 0
        %921 = vmatpush1.bf16.xpose.msra.mxu0 0
        %922 = vmatprep.subr.bf16.mxu0 0
        %923 = vmatpush1.bf16.xpose.msra.mxu0 0
        %924 = vmatprep.subr.bf16.mxu0 0
        %925 = vmatpush1.bf16.xpose.msra.mxu0 0
        %926 = vmatprep.subr.bf16.mxu0 0
        %927 = vmatpush1.bf16.xpose.msra.mxu0 0
        %928 = vmatprep.subr.bf16.mxu0 0
        %929 = vmatpush1.bf16.xpose.msra.mxu0 0
        %930 = vmatprep.subr.bf16.mxu0 0
        %931 = vmatpush1.bf16.xpose.msra.mxu0 0
        %932 = vmatprep.subr.bf16.mxu0 0
        %933 = vmatpush1.bf16.xpose.msra.mxu0 0
        %934 = vmatprep.subr.bf16.mxu0 0
        %935 = vmatpush1.bf16.xpose.msra.mxu0 0
        %936 = vmatprep.subr.bf16.mxu0 0
        %937 = vmatpush1.bf16.xpose.msra.mxu0 0
        %938 = vmatprep.subr.bf16.mxu0 0
        %939 = vmatpush1.bf16.xpose.msra.mxu0 0
        %940 = vmatprep.subr.bf16.mxu0 0
        %941 = vmatpush1.bf16.xpose.msra.mxu0 0
        %942 = vmatprep.subr.bf16.mxu0 0
        %943 = vmatpush1.bf16.xpose.msra.mxu0 0
        %944 = vmatprep.subr.bf16.mxu0 0
        %945 = vmatpush1.bf16.xpose.msra.mxu0 0
        %946 = vmatprep.mubr.bf16.mxu0 0
        %947 = vmatmul.mubr.bf16.gmra.mrb[0].mxu0 %v909
        %v948 = vpop.f32.mrb[0].mxu0
        %v949 = vadd.f32 0.0, %v948
        %v950 = vpop.f32.mrb[0].mxu0
        %v951 = vpop.f32.mrb[0].mxu0
        %v952 = vpop.f32.mrb[0].mxu0
        %953 = vdwg.mxu0
        %v954 = vmul.f32 %v949, 0.17677669
        %v955 = vld [vmem:[%s1 + $0x1] sm:$0x1]
        %v956 = vlaneseq
        %v957 = vshrl.u32 %v956, 7
        %v958 = vsub.s32 0, %v957
        %v959 = vrot.slane %v955, %v958
        %v960 = vadd.f32 %v954, %v959
        %v961 = vsel %vm845, %v960, -inf
        %962 = vmax.xlane.f32.xlu0 %v961
        %v963 = vpop.xlane.xlu0 %962
        %v964 = vsub.f32 %v960, %v963
        %v965 = vmul.f32 %v964, 1.442695
        %v966 = vpow.pop %v965
        %v967 = vsel %vm845, %v966, 0.0
        %968 = vadd.xlane.f32.xlu0 %v967
        %v969 = vpop.xlane.xlu0 %968
        %v970 = vrcp.pop %v969
        %v971 = vmul.f32 %v966, %v970
        %v972 = vpack.c.bf16 %v971, %v971
        %v974 = vsel %vm845, %v972, 0
        %v977 = vsel %vm861, %v907, 0
        %979 = vmatprep.subr.bf16.mxu0 0
        %980 = vmatpush1.bf16.msra.mxu0 %v977
        %981 = vmatprep.subr.bf16.mxu0 0
        %982 = vmatpush1.bf16.msra.mxu0 0
        %983 = vmatprep.subr.bf16.mxu0 0
        %984 = vmatpush1.bf16.msra.mxu0 0
        %985 = vmatprep.subr.bf16.mxu0 0
        %986 = vmatpush1.bf16.msra.mxu0 0
        %987 = vmatprep.subr.bf16.mxu0 0
        %988 = vmatpush1.bf16.msra.mxu0 0
        %989 = vmatprep.subr.bf16.mxu0 0
        %990 = vmatpush1.bf16.msra.mxu0 0
        %991 = vmatprep.subr.bf16.mxu0 0
        %992 = vmatpush1.bf16.msra.mxu0 0
        %993 = vmatprep.subr.bf16.mxu0 0
        %994 = vmatpush1.bf16.msra.mxu0 0
        %995 = vmatprep.subr.bf16.mxu0 0
        %996 = vmatpush1.bf16.msra.mxu0 0
        %997 = vmatprep.subr.bf16.mxu0 0
        %998 = vmatpush1.bf16.msra.mxu0 0
        %999 = vmatprep.subr.bf16.mxu0 0
        %1000 = vmatpush1.bf16.msra.mxu0 0
        %1001 = vmatprep.subr.bf16.mxu0 0
        %1002 = vmatpush1.bf16.msra.mxu0 0
        %1003 = vmatprep.subr.bf16.mxu0 0
        %1004 = vmatpush1.bf16.msra.mxu0 0
        %1005 = vmatprep.subr.bf16.mxu0 0
        %1006 = vmatpush1.bf16.msra.mxu0 0
        %1007 = vmatprep.subr.bf16.mxu0 0
        %1008 = vmatpush1.bf16.msra.mxu0 0
        %1009 = vmatprep.subr.bf16.mxu0 0
        %1010 = vmatpush1.bf16.msra.mxu0 0
        %1011 = vmatprep.mubr.bf16.mxu0 0
        %1012 = vmatmul.mubr.bf16.gmra.mrb[0].mxu0 %v974
        %v1013 = vpop.f32.mrb[0].mxu0
        %v1014 = vadd.f32 0.0, %v1013
        %v1015 = vpop.f32.mrb[0].mxu0
        %v1016 = vpop.f32.mrb[0].mxu0
        %v1017 = vpop.f32.mrb[0].mxu0
        %1018 = vdwg.mxu0
        %1020 = vrot.lane.b32.xlu0 %v788, 96
        %v1021 = vpop.permute.xlu0 %1020
        %1023 = vrot.lane.b32.xlu0 %v789, 96
        %v1024 = vpop.permute.xlu0 %1023
        %v1026 = vsel %vm791, %v1021, 0
        %v1029 = vsel %vm791, %v1024, 0
        %1031 = vmatprep.subr.bf16.mxu0 0
        %1032 = vmatpush1.bf16.xpose.msra.mxu0 %v1029
        %1033 = vmatprep.subr.bf16.mxu0 0
        %1034 = vmatpush1.bf16.xpose.msra.mxu0 0
        %1035 = vmatprep.subr.bf16.mxu0 0
        %1036 = vmatpush1.bf16.xpose.msra.mxu0 0
        %1037 = vmatprep.subr.bf16.mxu0 0
        %1038 = vmatpush1.bf16.xpose.msra.mxu0 0
        %1039 = vmatprep.subr.bf16.mxu0 0
        %1040 = vmatpush1.bf16.xpose.msra.mxu0 0
        %1041 = vmatprep.subr.bf16.mxu0 0
        %1042 = vmatpush1.bf16.xpose.msra.mxu0 0
        %1043 = vmatprep.subr.bf16.mxu0 0
        %1044 = vmatpush1.bf16.xpose.msra.mxu0 0
        %1045 = vmatprep.subr.bf16.mxu0 0
        %1046 = vmatpush1.bf16.xpose.msra.mxu0 0
        %1047 = vmatprep.subr.bf16.mxu0 0
        %1048 = vmatpush1.bf16.xpose.msra.mxu0 0
        %1049 = vmatprep.subr.bf16.mxu0 0
        %1050 = vmatpush1.bf16.xpose.msra.mxu0 0
        %1051 = vmatprep.subr.bf16.mxu0 0
        %1052 = vmatpush1.bf16.xpose.msra.mxu0 0
        %1053 = vmatprep.subr.bf16.mxu0 0
        %1054 = vmatpush1.bf16.xpose.msra.mxu0 0
        %1055 = vmatprep.subr.bf16.mxu0 0
        %1056 = vmatpush1.bf16.xpose.msra.mxu0 0
        %1057 = vmatprep.subr.bf16.mxu0 0
        %1058 = vmatpush1.bf16.xpose.msra.mxu0 0
        %1059 = vmatprep.subr.bf16.mxu0 0
        %1060 = vmatpush1.bf16.xpose.msra.mxu0 0
        %1061 = vmatprep.subr.bf16.mxu0 0
        %1062 = vmatpush1.bf16.xpose.msra.mxu0 0
        %1063 = vmatprep.mubr.bf16.mxu0 0
        %1064 = vmatmul.mubr.bf16.gmra.mrb[0].mxu0 %v1026
        %v1065 = vpop.f32.mrb[0].mxu0
        %v1066 = vadd.f32 0.0, %v1065
        %v1067 = vpop.f32.mrb[0].mxu0
        %v1068 = vpop.f32.mrb[0].mxu0
        %v1069 = vpop.f32.mrb[0].mxu0
        %1070 = vdwg.mxu0
        %v1071 = vmul.f32 %v1066, 0.17677669
        %v1072 = vadd.f32 %v1071, %v843
        %v1073 = vsel %vm845, %v1072, -inf
        %1074 = vmax.xlane.f32.xlu0 %v1073
        %v1075 = vpop.xlane.xlu0 %1074
        %v1076 = vsub.f32 %v1072, %v1075
        %v1077 = vmul.f32 %v1076, 1.442695
        %v1078 = vpow.pop %v1077
        %v1079 = vsel %vm845, %v1078, 0.0
        %1080 = vadd.xlane.f32.xlu0 %v1079
        %v1081 = vpop.xlane.xlu0 %1080
        %v1082 = vrcp.pop %v1081
        %v1083 = vmul.f32 %v1078, %v1082
        %v1084 = vpack.c.bf16 %v1083, %v1083
        %1086 = vrot.lane.b32.xlu0 %v790, 96
        %v1087 = vpop.permute.xlu0 %1086
        %v1089 = vsel %vm845, %v1084, 0
        %v1092 = vsel %vm861, %v1087, 0
        %1094 = vmatprep.subr.bf16.mxu0 0
        %1095 = vmatpush1.bf16.msra.mxu0 %v1092
        %1096 = vmatprep.subr.bf16.mxu0 0
        %1097 = vmatpush1.bf16.msra.mxu0 0
        %1098 = vmatprep.subr.bf16.mxu0 0
        %1099 = vmatpush1.bf16.msra.mxu0 0
        %1100 = vmatprep.subr.bf16.mxu0 0
        %1101 = vmatpush1.bf16.msra.mxu0 0
        %1102 = vmatprep.subr.bf16.mxu0 0
        %1103 = vmatpush1.bf16.msra.mxu0 0
        %1104 = vmatprep.subr.bf16.mxu0 0
        %1105 = vmatpush1.bf16.msra.mxu0 0
        %1106 = vmatprep.subr.bf16.mxu0 0
        %1107 = vmatpush1.bf16.msra.mxu0 0
        %1108 = vmatprep.subr.bf16.mxu0 0
        %1109 = vmatpush1.bf16.msra.mxu0 0
        %1110 = vmatprep.subr.bf16.mxu0 0
        %1111 = vmatpush1.bf16.msra.mxu0 0
        %1112 = vmatprep.subr.bf16.mxu0 0
        %1113 = vmatpush1.bf16.msra.mxu0 0
        %1114 = vmatprep.subr.bf16.mxu0 0
        %1115 = vmatpush1.bf16.msra.mxu0 0
        %1116 = vmatprep.subr.bf16.mxu0 0
        %1117 = vmatpush1.bf16.msra.mxu0 0
        %1118 = vmatprep.subr.bf16.mxu0 0
        %1119 = vmatpush1.bf16.msra.mxu0 0
        %1120 = vmatprep.subr.bf16.mxu0 0
        %1121 = vmatpush1.bf16.msra.mxu0 0
        %1122 = vmatprep.subr.bf16.mxu0 0
        %1123 = vmatpush1.bf16.msra.mxu0 0
        %1124 = vmatprep.subr.bf16.mxu0 0
        %1125 = vmatpush1.bf16.msra.mxu0 0
        %1126 = vmatprep.mubr.bf16.mxu0 0
        %1127 = vmatmul.mubr.bf16.gmra.mrb[0].mxu0 %v1089
        %v1128 = vpop.f32.mrb[0].mxu0
        %v1129 = vadd.f32 0.0, %v1128
        %v1130 = vpop.f32.mrb[0].mxu0
        %v1131 = vpop.f32.mrb[0].mxu0
        %v1132 = vpop.f32.mrb[0].mxu0
        %1133 = vdwg.mxu0
        %1135 = vrot.lane.b32.xlu0 %v905, 96
        %v1136 = vpop.permute.xlu0 %1135
        %1138 = vrot.lane.b32.xlu0 %v906, 96
        %v1139 = vpop.permute.xlu0 %1138
        %v1141 = vsel %vm791, %v1136, 0
        %v1144 = vsel %vm791, %v1139, 0
        %1146 = vmatprep.subr.bf16.mxu0 0
        %1147 = vmatpush1.bf16.xpose.msra.mxu0 %v1144
        %1148 = vmatprep.subr.bf16.mxu0 0
        %1149 = vmatpush1.bf16.xpose.msra.mxu0 0
        %1150 = vmatprep.subr.bf16.mxu0 0
        %1151 = vmatpush1.bf16.xpose.msra.mxu0 0
        %1152 = vmatprep.subr.bf16.mxu0 0
        %1153 = vmatpush1.bf16.xpose.msra.mxu0 0
        %1154 = vmatprep.subr.bf16.mxu0 0
        %1155 = vmatpush1.bf16.xpose.msra.mxu0 0
        %1156 = vmatprep.subr.bf16.mxu0 0
        %1157 = vmatpush1.bf16.xpose.msra.mxu0 0
        %1158 = vmatprep.subr.bf16.mxu0 0
        %1159 = vmatpush1.bf16.xpose.msra.mxu0 0
        %1160 = vmatprep.subr.bf16.mxu0 0
        %1161 = vmatpush1.bf16.xpose.msra.mxu0 0
        %1162 = vmatprep.subr.bf16.mxu0 0
        %1163 = vmatpush1.bf16.xpose.msra.mxu0 0
        %1164 = vmatprep.subr.bf16.mxu0 0
        %1165 = vmatpush1.bf16.xpose.msra.mxu0 0
        %1166 = vmatprep.subr.bf16.mxu0 0
        %1167 = vmatpush1.bf16.xpose.msra.mxu0 0
        %1168 = vmatprep.subr.bf16.mxu0 0
        %1169 = vmatpush1.bf16.xpose.msra.mxu0 0
        %1170 = vmatprep.subr.bf16.mxu0 0
        %1171 = vmatpush1.bf16.xpose.msra.mxu0 0
        %1172 = vmatprep.subr.bf16.mxu0 0
        %1173 = vmatpush1.bf16.xpose.msra.mxu0 0
        %1174 = vmatprep.subr.bf16.mxu0 0
        %1175 = vmatpush1.bf16.xpose.msra.mxu0 0
        %1176 = vmatprep.subr.bf16.mxu0 0
        %1177 = vmatpush1.bf16.xpose.msra.mxu0 0
        %1178 = vmatprep.mubr.bf16.mxu0 0
        %1179 = vmatmul.mubr.bf16.gmra.mrb[0].mxu0 %v1141
        %v1180 = vpop.f32.mrb[0].mxu0
        %v1181 = vadd.f32 0.0, %v1180
        %v1182 = vpop.f32.mrb[0].mxu0
        %v1183 = vpop.f32.mrb[0].mxu0
        %v1184 = vpop.f32.mrb[0].mxu0
        %1185 = vdwg.mxu0
        %v1186 = vmul.f32 %v1181, 0.17677669
        %v1187 = vadd.f32 %v1186, %v959
        %v1188 = vsel %vm845, %v1187, -inf
        %1189 = vmax.xlane.f32.xlu0 %v1188
        %v1190 = vpop.xlane.xlu0 %1189
        %v1191 = vsub.f32 %v1187, %v1190
        %v1192 = vmul.f32 %v1191, 1.442695
        %v1193 = vpow.pop %v1192
        %v1194 = vsel %vm845, %v1193, 0.0
        %1195 = vadd.xlane.f32.xlu0 %v1194
        %v1196 = vpop.xlane.xlu0 %1195
        %v1197 = vrcp.pop %v1196
        %v1198 = vmul.f32 %v1193, %v1197
        %v1199 = vpack.c.bf16 %v1198, %v1198
        %1201 = vrot.lane.b32.xlu0 %v907, 96
        %v1202 = vpop.permute.xlu0 %1201
        %v1204 = vsel %vm845, %v1199, 0
        %v1207 = vsel %vm861, %v1202, 0
        %1209 = vmatprep.subr.bf16.mxu0 0
        %1210 = vmatpush1.bf16.msra.mxu0 %v1207
        %1211 = vmatprep.subr.bf16.mxu0 0
        %1212 = vmatpush1.bf16.msra.mxu0 0
        %1213 = vmatprep.subr.bf16.mxu0 0
        %1214 = vmatpush1.bf16.msra.mxu0 0
        %1215 = vmatprep.subr.bf16.mxu0 0
        %1216 = vmatpush1.bf16.msra.mxu0 0
        %1217 = vmatprep.subr.bf16.mxu0 0
        %1218 = vmatpush1.bf16.msra.mxu0 0
        %1219 = vmatprep.subr.bf16.mxu0 0
        %1220 = vmatpush1.bf16.msra.mxu0 0
        %1221 = vmatprep.subr.bf16.mxu0 0
        %1222 = vmatpush1.bf16.msra.mxu0 0
        %1223 = vmatprep.subr.bf16.mxu0 0
        %1224 = vmatpush1.bf16.msra.mxu0 0
        %1225 = vmatprep.subr.bf16.mxu0 0
        %1226 = vmatpush1.bf16.msra.mxu0 0
        %1227 = vmatprep.subr.bf16.mxu0 0
        %1228 = vmatpush1.bf16.msra.mxu0 0
        %1229 = vmatprep.subr.bf16.mxu0 0
        %1230 = vmatpush1.bf16.msra.mxu0 0
        %1231 = vmatprep.subr.bf16.mxu0 0
        %1232 = vmatpush1.bf16.msra.mxu0 0
        %1233 = vmatprep.subr.bf16.mxu0 0
        %1234 = vmatpush1.bf16.msra.mxu0 0
        %1235 = vmatprep.subr.bf16.mxu0 0
        %1236 = vmatpush1.bf16.msra.mxu0 0
        %1237 = vmatprep.subr.bf16.mxu0 0
        %1238 = vmatpush1.bf16.msra.mxu0 0
        %1239 = vmatprep.subr.bf16.mxu0 0
        %1240 = vmatpush1.bf16.msra.mxu0 0
        %1241 = vmatprep.mubr.bf16.mxu0 0
        %1242 = vmatmul.mubr.bf16.gmra.mrb[0].mxu0 %v1204
        %v1243 = vpop.f32.mrb[0].mxu0
        %v1244 = vadd.f32 0.0, %v1243
        %v1245 = vpop.f32.mrb[0].mxu0
        %v1246 = vpop.f32.mrb[0].mxu0
        %v1247 = vpop.f32.mrb[0].mxu0
        %1248 = vdwg.mxu0
        %1249 = vrot.lane.b32.xlu0 %v788, 64
        %v1250 = vpop.permute.xlu0 %1249
        %1251 = vrot.lane.b32.xlu0 %v789, 64
        %v1252 = vpop.permute.xlu0 %1251
        %v1254 = vsel %vm791, %v1250, 0
        %v1257 = vsel %vm791, %v1252, 0
        %1259 = vmatprep.subr.bf16.mxu0 0
        %1260 = vmatpush1.bf16.xpose.msra.mxu0 %v1257
        %1261 = vmatprep.subr.bf16.mxu0 0
        %1262 = vmatpush1.bf16.xpose.msra.mxu0 0
        %1263 = vmatprep.subr.bf16.mxu0 0
        %1264 = vmatpush1.bf16.xpose.msra.mxu0 0
        %1265 = vmatprep.subr.bf16.mxu0 0
        %1266 = vmatpush1.bf16.xpose.msra.mxu0 0
        %1267 = vmatprep.subr.bf16.mxu0 0
        %1268 = vmatpush1.bf16.xpose.msra.mxu0 0
        %1269 = vmatprep.subr.bf16.mxu0 0
        %1270 = vmatpush1.bf16.xpose.msra.mxu0 0
        %1271 = vmatprep.subr.bf16.mxu0 0
        %1272 = vmatpush1.bf16.xpose.msra.mxu0 0
        %1273 = vmatprep.subr.bf16.mxu0 0
        %1274 = vmatpush1.bf16.xpose.msra.mxu0 0
        %1275 = vmatprep.subr.bf16.mxu0 0
        %1276 = vmatpush1.bf16.xpose.msra.mxu0 0
        %1277 = vmatprep.subr.bf16.mxu0 0
        %1278 = vmatpush1.bf16.xpose.msra.mxu0 0
        %1279 = vmatprep.subr.bf16.mxu0 0
        %1280 = vmatpush1.bf16.xpose.msra.mxu0 0
        %1281 = vmatprep.subr.bf16.mxu0 0
        %1282 = vmatpush1.bf16.xpose.msra.mxu0 0
        %1283 = vmatprep.subr.bf16.mxu0 0
        %1284 = vmatpush1.bf16.xpose.msra.mxu0 0
        %1285 = vmatprep.subr.bf16.mxu0 0
        %1286 = vmatpush1.bf16.xpose.msra.mxu0 0
        %1287 = vmatprep.subr.bf16.mxu0 0
        %1288 = vmatpush1.bf16.xpose.msra.mxu0 0
        %1289 = vmatprep.subr.bf16.mxu0 0
        %1290 = vmatpush1.bf16.xpose.msra.mxu0 0
        %1291 = vmatprep.mubr.bf16.mxu0 0
        %1292 = vmatmul.mubr.bf16.gmra.mrb[0].mxu0 %v1254
        %v1293 = vpop.f32.mrb[0].mxu0
        %v1294 = vadd.f32 0.0, %v1293
        %v1295 = vpop.f32.mrb[0].mxu0
        %v1296 = vpop.f32.mrb[0].mxu0
        %v1297 = vpop.f32.mrb[0].mxu0
        %1298 = vdwg.mxu0
        %v1299 = vmul.f32 %v1294, 0.17677669
        %v1300 = vadd.f32 %v1299, %v843
        %v1301 = vsel %vm845, %v1300, -inf
        %1302 = vmax.xlane.f32.xlu0 %v1301
        %v1303 = vpop.xlane.xlu0 %1302
        %v1304 = vsub.f32 %v1300, %v1303
        %v1305 = vmul.f32 %v1304, 1.442695
        %v1306 = vpow.pop %v1305
        %v1307 = vsel %vm845, %v1306, 0.0
        %1308 = vadd.xlane.f32.xlu0 %v1307
        %v1309 = vpop.xlane.xlu0 %1308
        %v1310 = vrcp.pop %v1309
        %v1311 = vmul.f32 %v1306, %v1310
        %v1312 = vpack.c.bf16 %v1311, %v1311
        %1313 = vrot.lane.b32.xlu0 %v790, 64
        %v1314 = vpop.permute.xlu0 %1313
        %v1316 = vsel %vm845, %v1312, 0
        %v1319 = vsel %vm861, %v1314, 0
        %1321 = vmatprep.subr.bf16.mxu0 0
        %1322 = vmatpush1.bf16.msra.mxu0 %v1319
        %1323 = vmatprep.subr.bf16.mxu0 0
        %1324 = vmatpush1.bf16.msra.mxu0 0
        %1325 = vmatprep.subr.bf16.mxu0 0
        %1326 = vmatpush1.bf16.msra.mxu0 0
        %1327 = vmatprep.subr.bf16.mxu0 0
        %1328 = vmatpush1.bf16.msra.mxu0 0
        %1329 = vmatprep.subr.bf16.mxu0 0
        %1330 = vmatpush1.bf16.msra.mxu0 0
        %1331 = vmatprep.subr.bf16.mxu0 0
        %1332 = vmatpush1.bf16.msra.mxu0 0
        %1333 = vmatprep.subr.bf16.mxu0 0
        %1334 = vmatpush1.bf16.msra.mxu0 0
        %1335 = vmatprep.subr.bf16.mxu0 0
        %1336 = vmatpush1.bf16.msra.mxu0 0
        %1337 = vmatprep.subr.bf16.mxu0 0
        %1338 = vmatpush1.bf16.msra.mxu0 0
        %1339 = vmatprep.subr.bf16.mxu0 0
        %1340 = vmatpush1.bf16.msra.mxu0 0
        %1341 = vmatprep.subr.bf16.mxu0 0
        %1342 = vmatpush1.bf16.msra.mxu0 0
        %1343 = vmatprep.subr.bf16.mxu0 0
        %1344 = vmatpush1.bf16.msra.mxu0 0
        %1345 = vmatprep.subr.bf16.mxu0 0
        %1346 = vmatpush1.bf16.msra.mxu0 0
        %1347 = vmatprep.subr.bf16.mxu0 0
        %1348 = vmatpush1.bf16.msra.mxu0 0
        %1349 = vmatprep.subr.bf16.mxu0 0
        %1350 = vmatpush1.bf16.msra.mxu0 0
        %1351 = vmatprep.subr.bf16.mxu0 0
        %1352 = vmatpush1.bf16.msra.mxu0 0
        %1353 = vmatprep.mubr.bf16.mxu0 0
        %1354 = vmatmul.mubr.bf16.gmra.mrb[0].mxu0 %v1316
        %v1355 = vpop.f32.mrb[0].mxu0
        %v1356 = vadd.f32 0.0, %v1355
        %v1357 = vpop.f32.mrb[0].mxu0
        %v1358 = vpop.f32.mrb[0].mxu0
        %v1359 = vpop.f32.mrb[0].mxu0
        %1360 = vdwg.mxu0
        %1361 = vrot.lane.b32.xlu0 %v905, 64
        %v1362 = vpop.permute.xlu0 %1361
        %1363 = vrot.lane.b32.xlu0 %v906, 64
        %v1364 = vpop.permute.xlu0 %1363
        %v1366 = vsel %vm791, %v1362, 0
        %v1369 = vsel %vm791, %v1364, 0
        %1371 = vmatprep.subr.bf16.mxu0 0
        %1372 = vmatpush1.bf16.xpose.msra.mxu0 %v1369
        %1373 = vmatprep.subr.bf16.mxu0 0
        %1374 = vmatpush1.bf16.xpose.msra.mxu0 0
        %1375 = vmatprep.subr.bf16.mxu0 0
        %1376 = vmatpush1.bf16.xpose.msra.mxu0 0
        %1377 = vmatprep.subr.bf16.mxu0 0
        %1378 = vmatpush1.bf16.xpose.msra.mxu0 0
        %1379 = vmatprep.subr.bf16.mxu0 0
        %1380 = vmatpush1.bf16.xpose.msra.mxu0 0
        %1381 = vmatprep.subr.bf16.mxu0 0
        %1382 = vmatpush1.bf16.xpose.msra.mxu0 0
        %1383 = vmatprep.subr.bf16.mxu0 0
        %1384 = vmatpush1.bf16.xpose.msra.mxu0 0
        %1385 = vmatprep.subr.bf16.mxu0 0
        %1386 = vmatpush1.bf16.xpose.msra.mxu0 0
        %1387 = vmatprep.subr.bf16.mxu0 0
        %1388 = vmatpush1.bf16.xpose.msra.mxu0 0
        %1389 = vmatprep.subr.bf16.mxu0 0
        %1390 = vmatpush1.bf16.xpose.msra.mxu0 0
        %1391 = vmatprep.subr.bf16.mxu0 0
        %1392 = vmatpush1.bf16.xpose.msra.mxu0 0
        %1393 = vmatprep.subr.bf16.mxu0 0
        %1394 = vmatpush1.bf16.xpose.msra.mxu0 0
        %1395 = vmatprep.subr.bf16.mxu0 0
        %1396 = vmatpush1.bf16.xpose.msra.mxu0 0
        %1397 = vmatprep.subr.bf16.mxu0 0
        %1398 = vmatpush1.bf16.xpose.msra.mxu0 0
        %1399 = vmatprep.subr.bf16.mxu0 0
        %1400 = vmatpush1.bf16.xpose.msra.mxu0 0
        %1401 = vmatprep.subr.bf16.mxu0 0
        %1402 = vmatpush1.bf16.xpose.msra.mxu0 0
        %1403 = vmatprep.mubr.bf16.mxu0 0
        %1404 = vmatmul.mubr.bf16.gmra.mrb[0].mxu0 %v1366
        %v1405 = vpop.f32.mrb[0].mxu0
        %v1406 = vadd.f32 0.0, %v1405
        %v1407 = vpop.f32.mrb[0].mxu0
        %v1408 = vpop.f32.mrb[0].mxu0
        %v1409 = vpop.f32.mrb[0].mxu0
        %1410 = vdwg.mxu0
        %v1411 = vmul.f32 %v1406, 0.17677669
        %v1412 = vadd.f32 %v1411, %v959
        %v1413 = vsel %vm845, %v1412, -inf
        %1414 = vmax.xlane.f32.xlu0 %v1413
        %v1415 = vpop.xlane.xlu0 %1414
        %v1416 = vsub.f32 %v1412, %v1415
        %v1417 = vmul.f32 %v1416, 1.442695
        %v1418 = vpow.pop %v1417
        %v1419 = vsel %vm845, %v1418, 0.0
        %1420 = vadd.xlane.f32.xlu0 %v1419
        %v1421 = vpop.xlane.xlu0 %1420
        %v1422 = vrcp.pop %v1421
        %v1423 = vmul.f32 %v1418, %v1422
        %v1424 = vpack.c.bf16 %v1423, %v1423
        %1425 = vrot.lane.b32.xlu0 %v907, 64
        %v1426 = vpop.permute.xlu0 %1425
        %v1428 = vsel %vm845, %v1424, 0
        %v1431 = vsel %vm861, %v1426, 0
        %1433 = vmatprep.subr.bf16.mxu0 0
        %1434 = vmatpush1.bf16.msra.mxu0 %v1431
        %1435 = vmatprep.subr.bf16.mxu0 0
        %1436 = vmatpush1.bf16.msra.mxu0 0
        %1437 = vmatprep.subr.bf16.mxu0 0
        %1438 = vmatpush1.bf16.msra.mxu0 0
        %1439 = vmatprep.subr.bf16.mxu0 0
        %1440 = vmatpush1.bf16.msra.mxu0 0
        %1441 = vmatprep.subr.bf16.mxu0 0
        %1442 = vmatpush1.bf16.msra.mxu0 0
        %1443 = vmatprep.subr.bf16.mxu0 0
        %1444 = vmatpush1.bf16.msra.mxu0 0
        %1445 = vmatprep.subr.bf16.mxu0 0
        %1446 = vmatpush1.bf16.msra.mxu0 0
        %1447 = vmatprep.subr.bf16.mxu0 0
        %1448 = vmatpush1.bf16.msra.mxu0 0
        %1449 = vmatprep.subr.bf16.mxu0 0
        %1450 = vmatpush1.bf16.msra.mxu0 0
        %1451 = vmatprep.subr.bf16.mxu0 0
        %1452 = vmatpush1.bf16.msra.mxu0 0
        %1453 = vmatprep.subr.bf16.mxu0 0
        %1454 = vmatpush1.bf16.msra.mxu0 0
        %1455 = vmatprep.subr.bf16.mxu0 0
        %1456 = vmatpush1.bf16.msra.mxu0 0
        %1457 = vmatprep.subr.bf16.mxu0 0
        %1458 = vmatpush1.bf16.msra.mxu0 0
        %1459 = vmatprep.subr.bf16.mxu0 0
        %1460 = vmatpush1.bf16.msra.mxu0 0
        %1461 = vmatprep.subr.bf16.mxu0 0
        %1462 = vmatpush1.bf16.msra.mxu0 0
        %1463 = vmatprep.subr.bf16.mxu0 0
        %1464 = vmatpush1.bf16.msra.mxu0 0
        %1465 = vmatprep.mubr.bf16.mxu0 0
        %1466 = vmatmul.mubr.bf16.gmra.mrb[0].mxu0 %v1428
        %v1467 = vpop.f32.mrb[0].mxu0
        %v1468 = vadd.f32 0.0, %v1467
        %v1469 = vpop.f32.mrb[0].mxu0
        %v1470 = vpop.f32.mrb[0].mxu0
        %v1471 = vpop.f32.mrb[0].mxu0
        %1472 = vdwg.mxu0
        %1473 = vrot.lane.b32.xlu0 %v788, 32
        %v1474 = vpop.permute.xlu0 %1473
        %1475 = vrot.lane.b32.xlu0 %v789, 32
        %v1476 = vpop.permute.xlu0 %1475
        %v1478 = vsel %vm791, %v1474, 0
        %v1481 = vsel %vm791, %v1476, 0
        %1483 = vmatprep.subr.bf16.mxu0 0
        %1484 = vmatpush1.bf16.xpose.msra.mxu0 %v1481
        %1485 = vmatprep.subr.bf16.mxu0 0
        %1486 = vmatpush1.bf16.xpose.msra.mxu0 0
        %1487 = vmatprep.subr.bf16.mxu0 0
        %1488 = vmatpush1.bf16.xpose.msra.mxu0 0
        %1489 = vmatprep.subr.bf16.mxu0 0
        %1490 = vmatpush1.bf16.xpose.msra.mxu0 0
        %1491 = vmatprep.subr.bf16.mxu0 0
        %1492 = vmatpush1.bf16.xpose.msra.mxu0 0
        %1493 = vmatprep.subr.bf16.mxu0 0
        %1494 = vmatpush1.bf16.xpose.msra.mxu0 0
        %1495 = vmatprep.subr.bf16.mxu0 0
        %1496 = vmatpush1.bf16.xpose.msra.mxu0 0
        %1497 = vmatprep.subr.bf16.mxu0 0
        %1498 = vmatpush1.bf16.xpose.msra.mxu0 0
        %1499 = vmatprep.subr.bf16.mxu0 0
        %1500 = vmatpush1.bf16.xpose.msra.mxu0 0
        %1501 = vmatprep.subr.bf16.mxu0 0
        %1502 = vmatpush1.bf16.xpose.msra.mxu0 0
        %1503 = vmatprep.subr.bf16.mxu0 0
        %1504 = vmatpush1.bf16.xpose.msra.mxu0 0
        %1505 = vmatprep.subr.bf16.mxu0 0
        %1506 = vmatpush1.bf16.xpose.msra.mxu0 0
        %1507 = vmatprep.subr.bf16.mxu0 0
        %1508 = vmatpush1.bf16.xpose.msra.mxu0 0
        %1509 = vmatprep.subr.bf16.mxu0 0
        %1510 = vmatpush1.bf16.xpose.msra.mxu0 0
        %1511 = vmatprep.subr.bf16.mxu0 0
        %1512 = vmatpush1.bf16.xpose.msra.mxu0 0
        %1513 = vmatprep.subr.bf16.mxu0 0
        %1514 = vmatpush1.bf16.xpose.msra.mxu0 0
        %1515 = vmatprep.mubr.bf16.mxu0 0
        %1516 = vmatmul.mubr.bf16.gmra.mrb[0].mxu0 %v1478
        %v1517 = vpop.f32.mrb[0].mxu0
        %v1518 = vadd.f32 0.0, %v1517
        %v1519 = vpop.f32.mrb[0].mxu0
        %v1520 = vpop.f32.mrb[0].mxu0
        %v1521 = vpop.f32.mrb[0].mxu0
        %1522 = vdwg.mxu0
        %v1523 = vmul.f32 %v1518, 0.17677669
        %v1524 = vadd.f32 %v1523, %v843
        %v1525 = vsel %vm845, %v1524, -inf
        %1526 = vmax.xlane.f32.xlu0 %v1525
        %v1527 = vpop.xlane.xlu0 %1526
        %v1528 = vsub.f32 %v1524, %v1527
        %v1529 = vmul.f32 %v1528, 1.442695
        %v1530 = vpow.pop %v1529
        %v1531 = vsel %vm845, %v1530, 0.0
        %1532 = vadd.xlane.f32.xlu0 %v1531
        %v1533 = vpop.xlane.xlu0 %1532
        %v1534 = vrcp.pop %v1533
        %v1535 = vmul.f32 %v1530, %v1534
        %v1536 = vpack.c.bf16 %v1535, %v1535
        %1537 = vrot.lane.b32.xlu0 %v790, 32
        %v1538 = vpop.permute.xlu0 %1537
        %v1540 = vsel %vm845, %v1536, 0
        %v1543 = vsel %vm861, %v1538, 0
        %1545 = vmatprep.subr.bf16.mxu0 0
        %1546 = vmatpush1.bf16.msra.mxu0 %v1543
        %1547 = vmatprep.subr.bf16.mxu0 0
        %1548 = vmatpush1.bf16.msra.mxu0 0
        %1549 = vmatprep.subr.bf16.mxu0 0
        %1550 = vmatpush1.bf16.msra.mxu0 0
        %1551 = vmatprep.subr.bf16.mxu0 0
        %1552 = vmatpush1.bf16.msra.mxu0 0
        %1553 = vmatprep.subr.bf16.mxu0 0
        %1554 = vmatpush1.bf16.msra.mxu0 0
        %1555 = vmatprep.subr.bf16.mxu0 0
        %1556 = vmatpush1.bf16.msra.mxu0 0
        %1557 = vmatprep.subr.bf16.mxu0 0
        %1558 = vmatpush1.bf16.msra.mxu0 0
        %1559 = vmatprep.subr.bf16.mxu0 0
        %1560 = vmatpush1.bf16.msra.mxu0 0
        %1561 = vmatprep.subr.bf16.mxu0 0
        %1562 = vmatpush1.bf16.msra.mxu0 0
        %1563 = vmatprep.subr.bf16.mxu0 0
        %1564 = vmatpush1.bf16.msra.mxu0 0
        %1565 = vmatprep.subr.bf16.mxu0 0
        %1566 = vmatpush1.bf16.msra.mxu0 0
        %1567 = vmatprep.subr.bf16.mxu0 0
        %1568 = vmatpush1.bf16.msra.mxu0 0
        %1569 = vmatprep.subr.bf16.mxu0 0
        %1570 = vmatpush1.bf16.msra.mxu0 0
        %1571 = vmatprep.subr.bf16.mxu0 0
        %1572 = vmatpush1.bf16.msra.mxu0 0
        %1573 = vmatprep.subr.bf16.mxu0 0
        %1574 = vmatpush1.bf16.msra.mxu0 0
        %1575 = vmatprep.subr.bf16.mxu0 0
        %1576 = vmatpush1.bf16.msra.mxu0 0
        %1577 = vmatprep.mubr.bf16.mxu0 0
        %1578 = vmatmul.mubr.bf16.gmra.mrb[0].mxu0 %v1540
        %v1579 = vpop.f32.mrb[0].mxu0
        %v1580 = vadd.f32 0.0, %v1579
        %v1581 = vpop.f32.mrb[0].mxu0
        %v1582 = vpop.f32.mrb[0].mxu0
        %v1583 = vpop.f32.mrb[0].mxu0
        %1584 = vdwg.mxu0
        %1585 = vrot.lane.b32.xlu0 %v905, 32
        %v1586 = vpop.permute.xlu0 %1585
        %1587 = vrot.lane.b32.xlu0 %v906, 32
        %v1588 = vpop.permute.xlu0 %1587
        %v1590 = vsel %vm791, %v1586, 0
        %v1593 = vsel %vm791, %v1588, 0
        %1595 = vmatprep.subr.bf16.mxu0 0
        %1596 = vmatpush1.bf16.xpose.msra.mxu0 %v1593
        %1597 = vmatprep.subr.bf16.mxu0 0
        %1598 = vmatpush1.bf16.xpose.msra.mxu0 0
        %1599 = vmatprep.subr.bf16.mxu0 0
        %1600 = vmatpush1.bf16.xpose.msra.mxu0 0
        %1601 = vmatprep.subr.bf16.mxu0 0
        %1602 = vmatpush1.bf16.xpose.msra.mxu0 0
        %1603 = vmatprep.subr.bf16.mxu0 0
        %1604 = vmatpush1.bf16.xpose.msra.mxu0 0
        %1605 = vmatprep.subr.bf16.mxu0 0
        %1606 = vmatpush1.bf16.xpose.msra.mxu0 0
        %1607 = vmatprep.subr.bf16.mxu0 0
        %1608 = vmatpush1.bf16.xpose.msra.mxu0 0
        %1609 = vmatprep.subr.bf16.mxu0 0
        %1610 = vmatpush1.bf16.xpose.msra.mxu0 0
        %1611 = vmatprep.subr.bf16.mxu0 0
        %1612 = vmatpush1.bf16.xpose.msra.mxu0 0
        %1613 = vmatprep.subr.bf16.mxu0 0
        %1614 = vmatpush1.bf16.xpose.msra.mxu0 0
        %1615 = vmatprep.subr.bf16.mxu0 0
        %1616 = vmatpush1.bf16.xpose.msra.mxu0 0
        %1617 = vmatprep.subr.bf16.mxu0 0
        %1618 = vmatpush1.bf16.xpose.msra.mxu0 0
        %1619 = vmatprep.subr.bf16.mxu0 0
        %1620 = vmatpush1.bf16.xpose.msra.mxu0 0
        %1621 = vmatprep.subr.bf16.mxu0 0
        %1622 = vmatpush1.bf16.xpose.msra.mxu0 0
        %1623 = vmatprep.subr.bf16.mxu0 0
        %1624 = vmatpush1.bf16.xpose.msra.mxu0 0
        %1625 = vmatprep.subr.bf16.mxu0 0
        %1626 = vmatpush1.bf16.xpose.msra.mxu0 0
        %1627 = vmatprep.mubr.bf16.mxu0 0
        %1628 = vmatmul.mubr.bf16.gmra.mrb[0].mxu0 %v1590
        %v1629 = vpop.f32.mrb[0].mxu0
        %v1630 = vadd.f32 0.0, %v1629
        %v1631 = vpop.f32.mrb[0].mxu0
        %v1632 = vpop.f32.mrb[0].mxu0
        %v1633 = vpop.f32.mrb[0].mxu0
        %1634 = vdwg.mxu0
        %v1635 = vmul.f32 %v1630, 0.17677669
        %v1636 = vadd.f32 %v1635, %v959
        %v1637 = vsel %vm845, %v1636, -inf
        %1638 = vmax.xlane.f32.xlu0 %v1637
        %v1639 = vpop.xlane.xlu0 %1638
        %v1640 = vsub.f32 %v1636, %v1639
        %v1641 = vmul.f32 %v1640, 1.442695
        %v1642 = vpow.pop %v1641
        %v1643 = vsel %vm845, %v1642, 0.0
        %1644 = vadd.xlane.f32.xlu0 %v1643
        %v1645 = vpop.xlane.xlu0 %1644
        %v1646 = vrcp.pop %v1645
        %v1647 = vmul.f32 %v1642, %v1646
        %v1648 = vpack.c.bf16 %v1647, %v1647
        %1649 = vrot.lane.b32.xlu0 %v907, 32
        %v1650 = vpop.permute.xlu0 %1649
        %v1652 = vsel %vm845, %v1648, 0
        %v1655 = vsel %vm861, %v1650, 0
        %1657 = vmatprep.subr.bf16.mxu0 0
        %1658 = vmatpush1.bf16.msra.mxu0 %v1655
        %1659 = vmatprep.subr.bf16.mxu0 0
        %1660 = vmatpush1.bf16.msra.mxu0 0
        %1661 = vmatprep.subr.bf16.mxu0 0
        %1662 = vmatpush1.bf16.msra.mxu0 0
        %1663 = vmatprep.subr.bf16.mxu0 0
        %1664 = vmatpush1.bf16.msra.mxu0 0
        %1665 = vmatprep.subr.bf16.mxu0 0
        %1666 = vmatpush1.bf16.msra.mxu0 0
        %1667 = vmatprep.subr.bf16.mxu0 0
        %1668 = vmatpush1.bf16.msra.mxu0 0
        %1669 = vmatprep.subr.bf16.mxu0 0
        %1670 = vmatpush1.bf16.msra.mxu0 0
        %1671 = vmatprep.subr.bf16.mxu0 0
        %1672 = vmatpush1.bf16.msra.mxu0 0
        %1673 = vmatprep.subr.bf16.mxu0 0
        %1674 = vmatpush1.bf16.msra.mxu0 0
        %1675 = vmatprep.subr.bf16.mxu0 0
        %1676 = vmatpush1.bf16.msra.mxu0 0
        %1677 = vmatprep.subr.bf16.mxu0 0
        %1678 = vmatpush1.bf16.msra.mxu0 0
        %1679 = vmatprep.subr.bf16.mxu0 0
        %1680 = vmatpush1.bf16.msra.mxu0 0
        %1681 = vmatprep.subr.bf16.mxu0 0
        %1682 = vmatpush1.bf16.msra.mxu0 0
        %1683 = vmatprep.subr.bf16.mxu0 0
        %1684 = vmatpush1.bf16.msra.mxu0 0
        %1685 = vmatprep.subr.bf16.mxu0 0
        %1686 = vmatpush1.bf16.msra.mxu0 0
        %1687 = vmatprep.subr.bf16.mxu0 0
        %1688 = vmatpush1.bf16.msra.mxu0 0
        %1689 = vmatprep.mubr.bf16.mxu0 0
        %1690 = vmatmul.mubr.bf16.gmra.mrb[0].mxu0 %v1652
        %v1691 = vpop.f32.mrb[0].mxu0
        %v1692 = vadd.f32 0.0, %v1691
        %v1693 = vpop.f32.mrb[0].mxu0
        %v1694 = vpop.f32.mrb[0].mxu0
        %v1695 = vpop.f32.mrb[0].mxu0
        %1696 = vdwg.mxu0
        %1699 = vrot.lane.b32.xlu0 %v1129, 32
        %v1700 = vpop.permute.xlu0 %1699
        %1701 = vrot.lane.b32.xlu0 %v1244, 32
        %v1702 = vpop.permute.xlu0 %1701
        %1707 = vrot.lane.b32.xlu0 %v1356, 64
        %v1708 = vpop.permute.xlu0 %1707
        %1709 = vrot.lane.b32.xlu0 %v1468, 64
        %v1710 = vpop.permute.xlu0 %1709
        %1715 = vrot.lane.b32.xlu0 %v1580, 96
        %v1716 = vpop.permute.xlu0 %1715
        %1717 = vrot.lane.b32.xlu0 %v1692, 96
        %v1718 = vpop.permute.xlu0 %1717
        %v1721 = vsel %vm791, %v900, %v1700
        %v1722 = vsel %vm791, %v1014, %v1702
        %vm1723 = vcmask 523264
        %v1724 = vsel %vm1723, %v1721, %v1708
        %v1725 = vsel %vm1723, %v1722, %v1710
        %vm1726 = vcmask 785408
        %v1727 = vsel %vm1726, %v1724, %v1716
        %v1728 = vsel %vm1726, %v1725, %v1718
        %v1729 = vpack.c.bf16 %v1728, %v1727
        %v1730 = vld [vmem:[%s474] sm:$0xf]
        %v1731 = vld [vmem:[%s474 + $0x4] sm:$0xf]
        %v1732 = vld [vmem:[%s474 + $0x8] sm:$0xf]
        %v1733 = vld [vmem:[%s474 + $0xc] sm:$0xf]
        %v1734 = vld [vmem:[%s474 + $0x10] sm:$0xf]
        %v1735 = vld [vmem:[%s474 + $0x14] sm:$0xf]
        %v1736 = vld [vmem:[%s474 + $0x18] sm:$0xf]
        %v1737 = vld [vmem:[%s474 + $0x1c] sm:$0xf]
        %v1738 = vld [vmem:[%s474 + $0x20] sm:$0xf]
        %v1739 = vld [vmem:[%s474 + $0x24] sm:$0xf]
        %v1740 = vld [vmem:[%s474 + $0x28] sm:$0xf]
        %v1741 = vld [vmem:[%s474 + $0x2c] sm:$0xf]
        %v1742 = vld [vmem:[%s474 + $0x30] sm:$0xf]
        %v1743 = vld [vmem:[%s474 + $0x34] sm:$0xf]
        %v1744 = vld [vmem:[%s474 + $0x38] sm:$0xf]
        %v1745 = vld [vmem:[%s474 + $0x3c] sm:$0xf]
        %v1746 = vlaneseq
        %v1747 = vshrl.u32 %v1746, 7
        %v1748 = vsub.s32 1, %v1747
        %v1749 = vrot.slane %v529, %v1748
        %v1766 = vunpack.c.l.b16 %v1730
        %v1767 = vunpack.c.l.b16 %v1731
        %v1768 = vunpack.c.l.b16 %v1732
        %v1769 = vunpack.c.l.b16 %v1733
        %v1770 = vunpack.c.l.b16 %v1734
        %v1771 = vunpack.c.l.b16 %v1735
        %v1772 = vunpack.c.l.b16 %v1736
        %v1773 = vunpack.c.l.b16 %v1737
        %v1774 = vunpack.c.l.b16 %v1738
        %v1775 = vunpack.c.l.b16 %v1739
        %v1776 = vunpack.c.l.b16 %v1740
        %v1777 = vunpack.c.l.b16 %v1741
        %v1778 = vunpack.c.l.b16 %v1742
        %v1779 = vunpack.c.l.b16 %v1743
        %v1780 = vunpack.c.l.b16 %v1744
        %v1781 = vunpack.c.l.b16 %v1745
        %v1782 = vpack.c.b16 %v1767, %v1766
        %v1783 = vpack.c.b16 %v1769, %v1768
        %v1784 = vpack.c.b16 %v1771, %v1770
        %v1785 = vpack.c.b16 %v1773, %v1772
        %v1786 = vpack.c.b16 %v1775, %v1774
        %v1787 = vpack.c.b16 %v1777, %v1776
        %v1788 = vpack.c.b16 %v1779, %v1778
        %v1789 = vpack.c.b16 %v1781, %v1780
        %1798 = vmatprep.subr.bf16.mxu0 0
        %1799 = vmatpush1.bf16.msra.mxu0 %v1782
        %1800 = vmatprep.subr.bf16.mxu0 0
        %1801 = vmatpush1.bf16.msra.mxu0 %v1783
        %1802 = vmatprep.subr.bf16.mxu0 0
        %1803 = vmatpush1.bf16.msra.mxu0 %v1784
        %1804 = vmatprep.subr.bf16.mxu0 0
        %1805 = vmatpush1.bf16.msra.mxu0 %v1785
        %1806 = vmatprep.subr.bf16.mxu0 0
        %1807 = vmatpush1.bf16.msra.mxu0 %v1786
        %1808 = vmatprep.subr.bf16.mxu0 0
        %1809 = vmatpush1.bf16.msra.mxu0 %v1787
        %1810 = vmatprep.subr.bf16.mxu0 0
        %1811 = vmatpush1.bf16.msra.mxu0 %v1788
        %1812 = vmatprep.subr.bf16.mxu0 0
        %1813 = vmatpush1.bf16.msra.mxu0 %v1789
        %1814 = vmatprep.subr.bf16.mxu0 0
        %1815 = vmatpush1.bf16.msra.mxu0 0
        %1816 = vmatprep.subr.bf16.mxu0 0
        %1817 = vmatpush1.bf16.msra.mxu0 0
        %1818 = vmatprep.subr.bf16.mxu0 0
        %1819 = vmatpush1.bf16.msra.mxu0 0
        %1820 = vmatprep.subr.bf16.mxu0 0
        %1821 = vmatpush1.bf16.msra.mxu0 0
        %1822 = vmatprep.subr.bf16.mxu0 0
        %1823 = vmatpush1.bf16.msra.mxu0 0
        %1824 = vmatprep.subr.bf16.mxu0 0
        %1825 = vmatpush1.bf16.msra.mxu0 0
        %1826 = vmatprep.subr.bf16.mxu0 0
        %1827 = vmatpush1.bf16.msra.mxu0 0
        %1828 = vmatprep.subr.bf16.mxu0 0
        %1829 = vmatpush1.bf16.msra.mxu0 0
        %1830 = vmatprep.mubr.bf16.mxu0 0
        %1831 = vmatmul.mubr.bf16.gmra.mrb[0].mxu0 %v1729
        %v1832 = vpop.f32.mrb[0].mxu0
        %v1833 = vadd.f32 %v1749, %v1832
        %v1834 = vpop.f32.mrb[0].mxu0
        %v1835 = vpop.f32.mrb[0].mxu0
        %v1836 = vadd.f32 %v1749, %v1835
        %v1837 = vpop.f32.mrb[0].mxu0
        %1838 = vdwg.mxu0
        %v1839 = vadd.f32 %v526, %v1833
        %v1840 = vadd.f32 %v527, %v1836
        %1841 = vadd.xlane.f32.xlu0 %v1839
        %v1842 = vpop.xlane.xlu0 %1841
        %1843 = vadd.xlane.f32.xlu0 %v1840
        %v1844 = vpop.xlane.xlu0 %1843
        %v1845 = vrcp.pop 128.0
        %v1846 = vmul.f32 %v1842, %v1845
        %v1847 = vmul.f32 %v1844, %v1845
        %v1848 = vsub.f32 %v1839, %v1846
        %v1849 = vsub.f32 %v1840, %v1847
        %v1850 = vmul.f32 %v1848, %v1848
        %v1851 = vmul.f32 %v1849, %v1849
        %1852 = vadd.xlane.f32.xlu0 %v1850
        %v1853 = vpop.xlane.xlu0 %1852
        %1854 = vadd.xlane.f32.xlu0 %v1851
        %v1855 = vpop.xlane.xlu0 %1854
        %v1856 = vmul.f32 %v1853, %v1845
        %v1857 = vmul.f32 %v1855, %v1845
        %v1858 = vadd.f32 %v1856, 1e-12
        %v1859 = vadd.f32 %v1857, 1e-12
        %v1860 = vrsqrt.pop %v1858
        %v1861 = vrsqrt.pop %v1859
        %v1862 = vmul.f32 %v1848, %v1860
        %v1863 = vmul.f32 %v1849, %v1861
        %v1864 = vlaneseq
        %v1865 = vshrl.u32 %v1864, 7
        %v1866 = vsub.s32 4, %v1865
        %v1867 = vrot.slane %v529, %v1866
        %v1868 = vmul.f32 %v1862, %v1867
        %v1869 = vmul.f32 %v1863, %v1867
        %v1870 = vlaneseq
        %v1871 = vshrl.u32 %v1870, 7
        %v1872 = vsub.s32 5, %v1871
        %v1873 = vrot.slane %v529, %v1872
        %v1874 = vadd.f32 %v1868, %v1873
        %v1875 = vadd.f32 %v1869, %v1873
        %v1876 = vpack.c.bf16 %v1875, %v1874
        %v1877 = vld [vmem:[%s479] sm:$0xff]
        %v1878 = vld [vmem:[%s479 + $0x8] sm:$0xff]
        %v1879 = vld [vmem:[%s479 + $0x10] sm:$0xff]
        %v1880 = vld [vmem:[%s479 + $0x18] sm:$0xff]
        %v1881 = vld [vmem:[%s479 + $0x20] sm:$0xff]
        %v1882 = vld [vmem:[%s479 + $0x28] sm:$0xff]
        %v1883 = vld [vmem:[%s479 + $0x30] sm:$0xff]
        %v1884 = vld [vmem:[%s479 + $0x38] sm:$0xff]
        %v1885 = vld [vmem:[%s479 + $0x40] sm:$0xff]
        %v1886 = vld [vmem:[%s479 + $0x48] sm:$0xff]
        %v1887 = vld [vmem:[%s479 + $0x50] sm:$0xff]
        %v1888 = vld [vmem:[%s479 + $0x58] sm:$0xff]
        %v1889 = vld [vmem:[%s479 + $0x60] sm:$0xff]
        %v1890 = vld [vmem:[%s479 + $0x68] sm:$0xff]
        %v1891 = vld [vmem:[%s479 + $0x70] sm:$0xff]
        %v1892 = vld [vmem:[%s479 + $0x78] sm:$0xff]
        %v1893 = vlaneseq
        %v1894 = vshrl.u32 %v1893, 7
        %v1895 = vsub.s32 2, %v1894
        %v1896 = vrot.slane %v529, %v1895
        %v1897 = vlaneseq
        %v1898 = vshrl.u32 %v1897, 7
        %v1899 = vsub.s32 2, %v1898
        %v1900 = vrot.slane %v530, %v1899
        %v1917 = vunpack.c.l.b16 %v1877
        %v1918 = vunpack.c.h.b16 %v1877
        %v1919 = vunpack.c.l.b16 %v1878
        %v1920 = vunpack.c.h.b16 %v1878
        %v1921 = vunpack.c.l.b16 %v1879
        %v1922 = vunpack.c.h.b16 %v1879
        %v1923 = vunpack.c.l.b16 %v1880
        %v1924 = vunpack.c.h.b16 %v1880
        %v1925 = vunpack.c.l.b16 %v1881
        %v1926 = vunpack.c.h.b16 %v1881
        %v1927 = vunpack.c.l.b16 %v1882
        %v1928 = vunpack.c.h.b16 %v1882
        %v1929 = vunpack.c.l.b16 %v1883
        %v1930 = vunpack.c.h.b16 %v1883
        %v1931 = vunpack.c.l.b16 %v1884
        %v1932 = vunpack.c.h.b16 %v1884
        %v1933 = vunpack.c.l.b16 %v1885
        %v1934 = vunpack.c.h.b16 %v1885
        %v1935 = vunpack.c.l.b16 %v1886
        %v1936 = vunpack.c.h.b16 %v1886
        %v1937 = vunpack.c.l.b16 %v1887
        %v1938 = vunpack.c.h.b16 %v1887
        %v1939 = vunpack.c.l.b16 %v1888
        %v1940 = vunpack.c.h.b16 %v1888
        %v1941 = vunpack.c.l.b16 %v1889
        %v1942 = vunpack.c.h.b16 %v1889
        %v1943 = vunpack.c.l.b16 %v1890
        %v1944 = vunpack.c.h.b16 %v1890
        %v1945 = vunpack.c.l.b16 %v1891
        %v1946 = vunpack.c.h.b16 %v1891
        %v1947 = vunpack.c.l.b16 %v1892
        %v1948 = vunpack.c.h.b16 %v1892
        %v1949 = vpack.c.b16 %v1919, %v1917
        %v1950 = vpack.c.b16 %v1920, %v1918
        %v1951 = vpack.c.b16 %v1923, %v1921
        %v1952 = vpack.c.b16 %v1924, %v1922
        %v1953 = vpack.c.b16 %v1927, %v1925
        %v1954 = vpack.c.b16 %v1928, %v1926
        %v1955 = vpack.c.b16 %v1931, %v1929
        %v1956 = vpack.c.b16 %v1932, %v1930
        %v1957 = vpack.c.b16 %v1935, %v1933
        %v1958 = vpack.c.b16 %v1936, %v1934
        %v1959 = vpack.c.b16 %v1939, %v1937
        %v1960 = vpack.c.b16 %v1940, %v1938
        %v1961 = vpack.c.b16 %v1943, %v1941
        %v1962 = vpack.c.b16 %v1944, %v1942
        %v1963 = vpack.c.b16 %v1947, %v1945
        %v1964 = vpack.c.b16 %v1948, %v1946
        %1981 = vmatprep.subr.bf16.mxu0 %v1950
        %1982 = vmatpush1.bf16.msra.mxu0 %v1949
        %1983 = vmatprep.subr.bf16.mxu0 %v1952
        %1984 = vmatpush1.bf16.msra.mxu0 %v1951
        %1985 = vmatprep.subr.bf16.mxu0 %v1954
        %1986 = vmatpush1.bf16.msra.mxu0 %v1953
        %1987 = vmatprep.subr.bf16.mxu0 %v1956
        %1988 = vmatpush1.bf16.msra.mxu0 %v1955
        %1989 = vmatprep.subr.bf16.mxu0 %v1958
        %1990 = vmatpush1.bf16.msra.mxu0 %v1957
        %1991 = vmatprep.subr.bf16.mxu0 %v1960
        %1992 = vmatpush1.bf16.msra.mxu0 %v1959
        %1993 = vmatprep.subr.bf16.mxu0 %v1962
        %1994 = vmatpush1.bf16.msra.mxu0 %v1961
        %1995 = vmatprep.subr.bf16.mxu0 %v1964
        %1996 = vmatpush1.bf16.msra.mxu0 %v1963
        %1997 = vmatprep.subr.bf16.mxu0 0
        %1998 = vmatpush1.bf16.msra.mxu0 0
        %1999 = vmatprep.subr.bf16.mxu0 0
        %2000 = vmatpush1.bf16.msra.mxu0 0
        %2001 = vmatprep.subr.bf16.mxu0 0
        %2002 = vmatpush1.bf16.msra.mxu0 0
        %2003 = vmatprep.subr.bf16.mxu0 0
        %2004 = vmatpush1.bf16.msra.mxu0 0
        %2005 = vmatprep.subr.bf16.mxu0 0
        %2006 = vmatpush1.bf16.msra.mxu0 0
        %2007 = vmatprep.subr.bf16.mxu0 0
        %2008 = vmatpush1.bf16.msra.mxu0 0
        %2009 = vmatprep.subr.bf16.mxu0 0
        %2010 = vmatpush1.bf16.msra.mxu0 0
        %2011 = vmatprep.subr.bf16.mxu0 0
        %2012 = vmatpush1.bf16.msra.mxu0 0
        %2013 = vmatprep.mubr.bf16.mxu0 0
        %2014 = vmatmul.mubr.bf16.gmra.mrb[0].mxu0 %v1876
        %v2015 = vpop.f32.mrb[0].mxu0
        %v2016 = vadd.f32 %v1896, %v2015
        %v2017 = vpop.f32.mrb[0].mxu0
        %v2018 = vadd.f32 %v1900, %v2017
        %v2019 = vpop.f32.mrb[0].mxu0
        %v2020 = vadd.f32 %v1896, %v2019
        %v2021 = vpop.f32.mrb[0].mxu0
        %v2022 = vadd.f32 %v1900, %v2021
        %2023 = vdwg.mxu0
        %v2024 = vmul.f32 %v2016, 0.5
        %v2025 = vmul.f32 %v2018, 0.5
        %v2026 = vmul.f32 %v2020, 0.5
        %v2027 = vmul.f32 %v2022, 0.5
        %v2028 = vmul.f32 %v2016, 0.044715
        %v2029 = vmul.f32 %v2018, 0.044715
        %v2030 = vmul.f32 %v2020, 0.044715
        %v2031 = vmul.f32 %v2022, 0.044715
        %v2032 = vmul.f32 %v2028, %v2016
        %v2033 = vmul.f32 %v2029, %v2018
        %v2034 = vmul.f32 %v2030, %v2020
        %v2035 = vmul.f32 %v2031, %v2022
        %v2036 = vmul.f32 %v2032, %v2016
        %v2037 = vmul.f32 %v2033, %v2018
        %v2038 = vmul.f32 %v2034, %v2020
        %v2039 = vmul.f32 %v2035, %v2022
        %v2040 = vadd.f32 %v2016, %v2036
        %v2041 = vadd.f32 %v2018, %v2037
        %v2042 = vadd.f32 %v2020, %v2038
        %v2043 = vadd.f32 %v2022, %v2039
        %v2044 = vmul.f32 %v2040, 0.7978846
        %v2045 = vmul.f32 %v2041, 0.7978846
        %v2046 = vmul.f32 %v2042, 0.7978846
        %v2047 = vmul.f32 %v2043, 0.7978846
        %v2048 = vtanh.pop %v2044
        %v2049 = vtanh.pop %v2045
        %v2050 = vtanh.pop %v2046
        %v2051 = vtanh.pop %v2047
        %v2052 = vadd.f32 %v2048, 1.0
        %v2053 = vadd.f32 %v2049, 1.0
        %v2054 = vadd.f32 %v2050, 1.0
        %v2055 = vadd.f32 %v2051, 1.0
        %v2056 = vmul.f32 %v2024, %v2052
        %v2057 = vmul.f32 %v2025, %v2053
        %v2058 = vmul.f32 %v2026, %v2054
        %v2059 = vmul.f32 %v2027, %v2055
        %v2060 = vpack.c.bf16 %v2058, %v2056
        %v2061 = vpack.c.bf16 %v2059, %v2057
        %v2062 = vld [vmem:[%s409] sm:$0xf]
        %v2063 = vld [vmem:[%s409 + $0x4] sm:$0xf]
        %v2064 = vld [vmem:[%s409 + $0x8] sm:$0xf]
        %v2065 = vld [vmem:[%s409 + $0xc] sm:$0xf]
        %v2066 = vld [vmem:[%s409 + $0x10] sm:$0xf]
        %v2067 = vld [vmem:[%s409 + $0x14] sm:$0xf]
        %v2068 = vld [vmem:[%s409 + $0x18] sm:$0xf]
        %v2069 = vld [vmem:[%s409 + $0x1c] sm:$0xf]
        %v2070 = vld [vmem:[%s409 + $0x20] sm:$0xf]
        %v2071 = vld [vmem:[%s409 + $0x24] sm:$0xf]
        %v2072 = vld [vmem:[%s409 + $0x28] sm:$0xf]
        %v2073 = vld [vmem:[%s409 + $0x2c] sm:$0xf]
        %v2074 = vld [vmem:[%s409 + $0x30] sm:$0xf]
        %v2075 = vld [vmem:[%s409 + $0x34] sm:$0xf]
        %v2076 = vld [vmem:[%s409 + $0x38] sm:$0xf]
        %v2077 = vld [vmem:[%s409 + $0x3c] sm:$0xf]
        %v2078 = vld [vmem:[%s409 + $0x40] sm:$0xf]
        %v2079 = vld [vmem:[%s409 + $0x44] sm:$0xf]
        %v2080 = vld [vmem:[%s409 + $0x48] sm:$0xf]
        %v2081 = vld [vmem:[%s409 + $0x4c] sm:$0xf]
        %v2082 = vld [vmem:[%s409 + $0x50] sm:$0xf]
        %v2083 = vld [vmem:[%s409 + $0x54] sm:$0xf]
        %v2084 = vld [vmem:[%s409 + $0x58] sm:$0xf]
        %v2085 = vld [vmem:[%s409 + $0x5c] sm:$0xf]
        %v2086 = vld [vmem:[%s409 + $0x60] sm:$0xf]
        %v2087 = vld [vmem:[%s409 + $0x64] sm:$0xf]
        %v2088 = vld [vmem:[%s409 + $0x68] sm:$0xf]
        %v2089 = vld [vmem:[%s409 + $0x6c] sm:$0xf]
        %v2090 = vld [vmem:[%s409 + $0x70] sm:$0xf]
        %v2091 = vld [vmem:[%s409 + $0x74] sm:$0xf]
        %v2092 = vld [vmem:[%s409 + $0x78] sm:$0xf]
        %v2093 = vld [vmem:[%s409 + $0x7c] sm:$0xf]
        %v2094 = vlaneseq
        %v2095 = vshrl.u32 %v2094, 7
        %v2096 = vsub.s32 3, %v2095
        %v2097 = vrot.slane %v529, %v2096
        %v2130 = vunpack.c.l.b16 %v2062
        %v2131 = vunpack.c.l.b16 %v2063
        %v2132 = vunpack.c.l.b16 %v2064
        %v2133 = vunpack.c.l.b16 %v2065
        %v2134 = vunpack.c.l.b16 %v2066
        %v2135 = vunpack.c.l.b16 %v2067
        %v2136 = vunpack.c.l.b16 %v2068
        %v2137 = vunpack.c.l.b16 %v2069
        %v2138 = vunpack.c.l.b16 %v2070
        %v2139 = vunpack.c.l.b16 %v2071
        %v2140 = vunpack.c.l.b16 %v2072
        %v2141 = vunpack.c.l.b16 %v2073
        %v2142 = vunpack.c.l.b16 %v2074
        %v2143 = vunpack.c.l.b16 %v2075
        %v2144 = vunpack.c.l.b16 %v2076
        %v2145 = vunpack.c.l.b16 %v2077
        %v2146 = vunpack.c.l.b16 %v2078
        %v2147 = vunpack.c.l.b16 %v2079
        %v2148 = vunpack.c.l.b16 %v2080
        %v2149 = vunpack.c.l.b16 %v2081
        %v2150 = vunpack.c.l.b16 %v2082
        %v2151 = vunpack.c.l.b16 %v2083
        %v2152 = vunpack.c.l.b16 %v2084
        %v2153 = vunpack.c.l.b16 %v2085
        %v2154 = vunpack.c.l.b16 %v2086
        %v2155 = vunpack.c.l.b16 %v2087
        %v2156 = vunpack.c.l.b16 %v2088
        %v2157 = vunpack.c.l.b16 %v2089
        %v2158 = vunpack.c.l.b16 %v2090
        %v2159 = vunpack.c.l.b16 %v2091
        %v2160 = vunpack.c.l.b16 %v2092
        %v2161 = vunpack.c.l.b16 %v2093
        %v2162 = vpack.c.b16 %v2131, %v2130
        %v2163 = vpack.c.b16 %v2133, %v2132
        %v2164 = vpack.c.b16 %v2135, %v2134
        %v2165 = vpack.c.b16 %v2137, %v2136
        %v2166 = vpack.c.b16 %v2139, %v2138
        %v2167 = vpack.c.b16 %v2141, %v2140
        %v2168 = vpack.c.b16 %v2143, %v2142
        %v2169 = vpack.c.b16 %v2145, %v2144
        %v2170 = vpack.c.b16 %v2147, %v2146
        %v2171 = vpack.c.b16 %v2149, %v2148
        %v2172 = vpack.c.b16 %v2151, %v2150
        %v2173 = vpack.c.b16 %v2153, %v2152
        %v2174 = vpack.c.b16 %v2155, %v2154
        %v2175 = vpack.c.b16 %v2157, %v2156
        %v2176 = vpack.c.b16 %v2159, %v2158
        %v2177 = vpack.c.b16 %v2161, %v2160
        %2194 = vmatprep.subr.bf16.mxu0 0
        %2195 = vmatpush1.bf16.msra.mxu0 %v2162
        %2196 = vmatprep.subr.bf16.mxu0 0
        %2197 = vmatpush1.bf16.msra.mxu0 %v2163
        %2198 = vmatprep.subr.bf16.mxu0 0
        %2199 = vmatpush1.bf16.msra.mxu0 %v2164
        %2200 = vmatprep.subr.bf16.mxu0 0
        %2201 = vmatpush1.bf16.msra.mxu0 %v2165
        %2202 = vmatprep.subr.bf16.mxu0 0
        %2203 = vmatpush1.bf16.msra.mxu0 %v2166
        %2204 = vmatprep.subr.bf16.mxu0 0
        %2205 = vmatpush1.bf16.msra.mxu0 %v2167
        %2206 = vmatprep.subr.bf16.mxu0 0
        %2207 = vmatpush1.bf16.msra.mxu0 %v2168
        %2208 = vmatprep.subr.bf16.mxu0 0
        %2209 = vmatpush1.bf16.msra.mxu0 %v2169
        %2210 = vmatprep.subr.bf16.mxu0 0
        %2211 = vmatpush1.bf16.msra.mxu0 %v2170
        %2212 = vmatprep.subr.bf16.mxu0 0
        %2213 = vmatpush1.bf16.msra.mxu0 %v2171
        %2214 = vmatprep.subr.bf16.mxu0 0
        %2215 = vmatpush1.bf16.msra.mxu0 %v2172
        %2216 = vmatprep.subr.bf16.mxu0 0
        %2217 = vmatpush1.bf16.msra.mxu0 %v2173
        %2218 = vmatprep.subr.bf16.mxu0 0
        %2219 = vmatpush1.bf16.msra.mxu0 %v2174
        %2220 = vmatprep.subr.bf16.mxu0 0
        %2221 = vmatpush1.bf16.msra.mxu0 %v2175
        %2222 = vmatprep.subr.bf16.mxu0 0
        %2223 = vmatpush1.bf16.msra.mxu0 %v2176
        %2224 = vmatprep.subr.bf16.mxu0 0
        %2225 = vmatpush1.bf16.msra.mxu0 %v2177
        %2226 = vmatprep.mubr.bf16.mxu0 %v2061
        %2227 = vmatmul.mubr.bf16.gmra.mrb[0].mxu0 %v2060
        %v2228 = vpop.f32.mrb[0].mxu0
        %v2229 = vadd.f32 %v2097, %v2228
        %v2230 = vpop.f32.mrb[0].mxu0
        %v2231 = vpop.f32.mrb[0].mxu0
        %v2232 = vadd.f32 %v2097, %v2231
        %v2233 = vpop.f32.mrb[0].mxu0
        %2234 = vdwg.mxu0
        %v2235 = vadd.f32 %v1874, %v2229
        %v2236 = vadd.f32 %v1875, %v2232
        %2237 = vadd.xlane.f32.xlu0 %v2235
        %v2238 = vpop.xlane.xlu0 %2237
        %2239 = vadd.xlane.f32.xlu0 %v2236
        %v2240 = vpop.xlane.xlu0 %2239
        %v2241 = vmul.f32 %v2238, %v1845
        %v2242 = vmul.f32 %v2240, %v1845
        %v2243 = vsub.f32 %v2235, %v2241
        %v2244 = vsub.f32 %v2236, %v2242
        %v2245 = vmul.f32 %v2243, %v2243
        %v2246 = vmul.f32 %v2244, %v2244
        %2247 = vadd.xlane.f32.xlu0 %v2245
        %v2248 = vpop.xlane.xlu0 %2247
        %2249 = vadd.xlane.f32.xlu0 %v2246
        %v2250 = vpop.xlane.xlu0 %2249
        %v2251 = vmul.f32 %v2248, %v1845
        %v2252 = vmul.f32 %v2250, %v1845
        %v2253 = vadd.f32 %v2251, 1e-12
        %v2254 = vadd.f32 %v2252, 1e-12
        %v2255 = vrsqrt.pop %v2253
        %v2256 = vrsqrt.pop %v2254
        %v2257 = vmul.f32 %v2243, %v2255
        %v2258 = vmul.f32 %v2244, %v2256
        %v2259 = vlaneseq
        %v2260 = vshrl.u32 %v2259, 7
        %v2261 = vsub.s32 6, %v2260
        %v2262 = vrot.slane %v529, %v2261
        %v2263 = vmul.f32 %v2257, %v2262
        %v2264 = vmul.f32 %v2258, %v2262
        %v2265 = vlaneseq
        %v2266 = vshrl.u32 %v2265, 7
        %v2267 = vsub.s32 7, %v2266
        %v2268 = vrot.slane %v529, %v2267
        %v2269 = vadd.f32 %v2263, %v2268
        %v2270 = vadd.f32 %v2264, %v2268
        %2271 = vst [vmem:[#allocation2] sm:$0xff] %v2269
        %2272 = vst [vmem:[#allocation2 + $0x8] sm:$0xff] %v2270
        %p2273 = scmp.eq.s32.totalorder %s27, 1
        // Predicated region
        $region77: #{bert_base_uncased_forward.1} parent=59 // pred_check
          %p2274 = pneg %p2273
        $region78: #{bert_base_uncased_forward.1} parent=59 // pred_check_branch
          %2276 = sbr.rel (%p2274) target = $region80
        $region79: #{bert_base_uncased_forward.1} parent=59 // pred_region
          %v2278 = vrot.slane %v2270, 7
          %vm2280 = vcmask 1040384
          %v2281 = vsel %vm2280, %v2269, %v2278
          %v2282 = vpack.c.bf16 %v2281, %v2281
          %v2283 = vld [vmem:[%s8] sm:$0xf]
          %v2284 = vld [vmem:[%s8 + $0x4] sm:$0xf]
          %v2285 = vld [vmem:[%s8 + $0x8] sm:$0xf]
          %v2286 = vld [vmem:[%s8 + $0xc] sm:$0xf]
          %v2287 = vld [vmem:[%s8 + $0x10] sm:$0xf]
          %v2288 = vld [vmem:[%s8 + $0x14] sm:$0xf]
          %v2289 = vld [vmem:[%s8 + $0x18] sm:$0xf]
          %v2290 = vld [vmem:[%s8 + $0x1c] sm:$0xf]
          %v2291 = vld [vmem:[%s8 + $0x20] sm:$0xf]
          %v2292 = vld [vmem:[%s8 + $0x24] sm:$0xf]
          %v2293 = vld [vmem:[%s8 + $0x28] sm:$0xf]
          %v2294 = vld [vmem:[%s8 + $0x2c] sm:$0xf]
          %v2295 = vld [vmem:[%s8 + $0x30] sm:$0xf]
          %v2296 = vld [vmem:[%s8 + $0x34] sm:$0xf]
          %v2297 = vld [vmem:[%s8 + $0x38] sm:$0xf]
          %v2298 = vld [vmem:[%s8 + $0x3c] sm:$0xf]
          %v2299 = vld [vmem:[%s9] sm:$0x1]
          %v2300 = vlaneseq
          %v2301 = vshrl.u32 %v2300, 7
          %v2302 = vsub.s32 0, %v2301
          %v2303 = vrot.slane %v2299, %v2302
          %v2320 = vunpack.c.l.b16 %v2283
          %v2321 = vunpack.c.l.b16 %v2284
          %v2322 = vunpack.c.l.b16 %v2285
          %v2323 = vunpack.c.l.b16 %v2286
          %v2324 = vunpack.c.l.b16 %v2287
          %v2325 = vunpack.c.l.b16 %v2288
          %v2326 = vunpack.c.l.b16 %v2289
          %v2327 = vunpack.c.l.b16 %v2290
          %v2328 = vunpack.c.l.b16 %v2291
          %v2329 = vunpack.c.l.b16 %v2292
          %v2330 = vunpack.c.l.b16 %v2293
          %v2331 = vunpack.c.l.b16 %v2294
          %v2332 = vunpack.c.l.b16 %v2295
          %v2333 = vunpack.c.l.b16 %v2296
          %v2334 = vunpack.c.l.b16 %v2297
          %v2335 = vunpack.c.l.b16 %v2298
          %v2336 = vpack.c.b16 %v2321, %v2320
          %v2337 = vpack.c.b16 %v2323, %v2322
          %v2338 = vpack.c.b16 %v2325, %v2324
          %v2339 = vpack.c.b16 %v2327, %v2326
          %v2340 = vpack.c.b16 %v2329, %v2328
          %v2341 = vpack.c.b16 %v2331, %v2330
          %v2342 = vpack.c.b16 %v2333, %v2332
          %v2343 = vpack.c.b16 %v2335, %v2334
          %2352 = vmatprep.subr.bf16.mxu0 0
          %2353 = vmatpush1.bf16.msra.mxu0 %v2336
          %2354 = vmatprep.subr.bf16.mxu0 0
          %2355 = vmatpush1.bf16.msra.mxu0 %v2337
          %2356 = vmatprep.subr.bf16.mxu0 0
          %2357 = vmatpush1.bf16.msra.mxu0 %v2338
          %2358 = vmatprep.subr.bf16.mxu0 0
          %2359 = vmatpush1.bf16.msra.mxu0 %v2339
          %2360 = vmatprep.subr.bf16.mxu0 0
          %2361 = vmatpush1.bf16.msra.mxu0 %v2340
          %2362 = vmatprep.subr.bf16.mxu0 0
          %2363 = vmatpush1.bf16.msra.mxu0 %v2341
          %2364 = vmatprep.subr.bf16.mxu0 0
          %2365 = vmatpush1.bf16.msra.mxu0 %v2342
          %2366 = vmatprep.subr.bf16.mxu0 0
          %2367 = vmatpush1.bf16.msra.mxu0 %v2343
          %2368 = vmatprep.subr.bf16.mxu0 0
          %2369 = vmatpush1.bf16.msra.mxu0 0
          %2370 = vmatprep.subr.bf16.mxu0 0
          %2371 = vmatpush1.bf16.msra.mxu0 0
          %2372 = vmatprep.subr.bf16.mxu0 0
          %2373 = vmatpush1.bf16.msra.mxu0 0
          %2374 = vmatprep.subr.bf16.mxu0 0
          %2375 = vmatpush1.bf16.msra.mxu0 0
          %2376 = vmatprep.subr.bf16.mxu0 0
          %2377 = vmatpush1.bf16.msra.mxu0 0
          %2378 = vmatprep.subr.bf16.mxu0 0
          %2379 = vmatpush1.bf16.msra.mxu0 0
          %2380 = vmatprep.subr.bf16.mxu0 0
          %2381 = vmatpush1.bf16.msra.mxu0 0
          %2382 = vmatprep.subr.bf16.mxu0 0
          %2383 = vmatpush1.bf16.msra.mxu0 0
          %2384 = vmatprep.mubr.bf16.mxu0 0
          %2385 = vmatmul.mubr.bf16.gmra.mrb[0].mxu0 %v2282
          %v2386 = vpop.f32.mrb[0].mxu0
          %v2387 = vadd.f32 %v2303, %v2386
          %v2388 = vpop.f32.mrb[0].mxu0
          %v2389 = vpop.f32.mrb[0].mxu0
          %v2390 = vpop.f32.mrb[0].mxu0
          %2391 = vdwg.mxu0
          %v2392 = vtanh.pop %v2387
          %v2393 = vld [vmem:[%s9 + $0x1] sm:$0x1]
          %v2394 = vlaneseq
          %v2395 = vshrl.u32 %v2394, 7
          %v2396 = vsub.s32 0, %v2395
          %v2397 = vrot.slane %v2393, %v2396
          %v2398 = vmul.f32 %v2392, %v2397
          %vm2399 = vcmask 1041408
          %v2400 = vsel %vm2399, %v2398, 0.0
          %2401 = vadd.xlane.f32.xlu0 %v2400
          %v2402 = vpop.xlane.xlu0 %2401
          %v2403 = vld [vmem:[%s9 + $0x2] sm:$0x1]
          %v2404 = vlaneseq
          %v2405 = vshrl.u32 %v2404, 7
          %v2406 = vsub.s32 0, %v2405
          %v2407 = vrot.slane %v2403, %v2406
          %v2408 = vadd.f32 %v2402, %v2407
          %vm2409 = vcmask 1024
          %2410 = vst.msk [vmem:[%s10] sm:$0x3] %vm2409, %v2408
        $region80: #{bert_base_uncased_forward.1} parent=59 // pred_fallthru
          _
        // Predicated region
        $region81: #{bert_base_uncased_forward.1} parent=59 // pred_check
          %p2411 = pneg %p275
        $region82: #{bert_base_uncased_forward.1} parent=59 // pred_check_branch
          %2413 = sbr.rel (%p2411) target = $region84
        $region83: #{bert_base_uncased_forward.1} parent=59 // pred_region
          _
        $region84: #{bert_base_uncased_forward.1} parent=59 // pred_fallthru
          _
        // Predicated region
        $region85: #{bert_base_uncased_forward.1} parent=59 // pred_check
          %p2414 = pneg %p275
        $region86: #{bert_base_uncased_forward.1} parent=59 // pred_check_branch
          %2416 = sbr.rel (%p2414) target = $region88
        $region87: #{bert_base_uncased_forward.1} parent=59 // pred_region
          _
        $region88: #{bert_base_uncased_forward.1} parent=59 // pred_fallthru
          _
      $region60: #{bert_base_uncased_forward.1} parent=5 // pred_fallthru
        _
      %p2417 = scmp.le.s32.totalorder 2, %s22
      // Predicated region
      $region89: #{bert_base_uncased_forward.1} parent=5 // pred_check
        %p2418 = pneg %p2417
      $region90: #{bert_base_uncased_forward.1} parent=5 // pred_check_branch
        %2420 = sbr.rel (%p2418) target = $region92
      $region91: #{bert_base_uncased_forward.1} parent=5 // pred_region
        %s2421 = ssub.s32 %s22, 2
      $region92: #{bert_base_uncased_forward.1} parent=5 // pred_fallthru
        _
    $region6: #{bert_base_uncased_forward.1} parent=1 // loop_footer
      %s26 = sadd.s32 1, %s22
    $region7: #{bert_base_uncased_forward.1} parent=1 // loop_footer_branch
      %21 = sbr.rel target = $region3
    $region8: #{bert_base_uncased_forward.1} parent=1 // loop_exit
      _
    %2422 = vsyncpa [#allocation4], 1
    %s2423 = scalar_lea.sflag [#allocation4], 1
    %2424 = vsyncpa %s2423, 1
    %2425 = vsyncpa [#allocation6], 1
    %s2426 = scalar_lea.sflag [#allocation6], 1
    %2427 = vsyncpa %s2426, 1

</llo_original>
